<compile_context>
chip_gen: v5e
topology: v5e:2x2
jax: 0.10.0
libtpu: 0.0.40
codegen_flags: <defaults>
</compile_context>

<pallas_src>
import functools

import jax
import jax.numpy as jnp
from jax import lax
from jax.experimental import pallas as pl
from jax.experimental.pallas import tpu as pltpu

EPS = 1e-5  # torch LayerNorm default eps

# Order in which stacked per-layer parameters are fed to the kernel.
PARAM_ORDER = ("wqkv", "bqkv", "wo", "bo",
               "ln1w", "ln1b", "ln2w", "ln2b",
               "w1", "b1", "w2", "b2")
_MATMUL_NAMES = {"wqkv", "wo", "w1", "w2"}


def _layernorm(x, w, b):
    # two-pass (centered) variance: robust when the residual-stream mean grows.
    mu = jnp.mean(x, axis=-1, keepdims=True)
    xc = x - mu
    var = jnp.mean(xc * xc, axis=-1, keepdims=True)
    return xc * lax.rsqrt(var + EPS) * w + b


# ----------------------------------------------------------------------------
# Pallas kernel: full pre-norm encoder stack for a block of TB batch rows.
# Grid = (B//TB, L); the output block is constant across L so the activations
# stay resident in VMEM for the whole layer stack (init via pl.when(l == 0)).
# ----------------------------------------------------------------------------
def encoder_stack_kernel(x_ref,
                         wqkv_ref, bqkv_ref, wo_ref, bo_ref,
                         ln1w_ref, ln1b_ref, ln2w_ref, ln2b_ref,
                         w1_ref, b1_ref, w2_ref, b2_ref,
                         o_ref,
                         k_sc, v_sc,
                         *, nheads, kv_tile):
    l = pl.program_id(1)

    # Layer 0: seed the resident activation block from the input.
    @pl.when(l == 0)
    def _():
        o_ref[...] = x_ref[...]

    x = o_ref[...].astype(jnp.float32)          # (TB, S, D) resident activations
    TB, S, D = x.shape
    H = nheads
    dh = D // H
    BH = H * TB

    # ---------------- self-attention sub-block (norm_first) ----------------
    xn = _layernorm(x, ln1w_ref[0], ln1b_ref[0])              # (TB, S, D) f32
    xnb = xn.reshape(TB * S, D).astype(jnp.bfloat16)

    # Fused QKV projection: lane-dense N = 3*D, M = TB*S, f32 accumulation.
    # (1/sqrt(dh) is already folded into the Q columns of wqkv / bqkv.)
    qkv = jnp.dot(xnb, wqkv_ref[0], preferred_element_type=jnp.float32)
    qkv = (qkv + bqkv_ref[0]).astype(jnp.bfloat16)            # (TB*S, 3*D) bf16

    def split_heads(base):
        # (TB*S, D)-slab -> (H*TB, S, dh), head-major on the leading dim.
        return jnp.stack(
            [qkv[:, base + h * dh: base + (h + 1) * dh].reshape(TB, S, dh)
             for h in range(H)],
            axis=0).reshape(BH, S, dh)

    q = split_heads(0)                                        # bf16, pre-scaled
    k_sc[...] = split_heads(D)
    v_sc[...] = split_heads(2 * D)

    # Flash-style online softmax over KV tiles (scores are (BH, S, kv_tile)).
    n_kv = S // kv_tile
    q_idx = lax.broadcasted_iota(jnp.int32, (S, kv_tile), 0)
    col_idx = lax.broadcasted_iota(jnp.int32, (S, kv_tile), 1)

    def kv_step(t, carry):
        m, lsum, acc = carry
        start = pl.multiple_of(t * kv_tile, kv_tile)
        kt = k_sc[:, pl.ds(start, kv_tile), :]                # (BH, kv_tile, dh)
        vt = v_sc[:, pl.ds(start, kv_tile), :]
        s = jnp.einsum('bqd,bkd->bqk', q, kt,
                       preferred_element_type=jnp.float32)    # (BH, S, kv_tile)
        causal = (start + col_idx) <= q_idx                   # (S, kv_tile)
        s = jnp.where(causal, s, -1e30)                       # finite mask value
        m_new = jnp.maximum(m, jnp.max(s, axis=-1, keepdims=True))
        alpha = jnp.exp(m - m_new)
        p = jnp.exp(s - m_new)
        lsum = alpha * lsum + jnp.sum(p, axis=-1, keepdims=True)
        acc = alpha * acc + jnp.einsum('bqk,bkd->bqd',
                                       p.astype(jnp.bfloat16), vt,
                                       preferred_element_type=jnp.float32)
        return m_new, lsum, acc

    m0 = jnp.full((BH, S, 1), -1e30, jnp.float32)
    l0 = jnp.zeros((BH, S, 1), jnp.float32)
    a0 = jnp.zeros((BH, S, dh), jnp.float32)
    _, l_fin, acc = lax.fori_loop(0, n_kv, kv_step, (m0, l0, a0))
    ctx = acc * pl.reciprocal(l_fin, approx=True)             # (BH, S, dh)

    # Concatenate heads back to (TB, S, D) (torch head order) and run ONE
    # (TB*S, D) @ (D, D) output projection -- head sum is the contraction.
    ctx_cat = jnp.concatenate(
        [ctx[h * TB:(h + 1) * TB] for h in range(H)], axis=-1)  # (TB, S, D) f32
    ctx_flat = ctx_cat.reshape(TB * S, D).astype(jnp.bfloat16)
    attn = jnp.dot(ctx_flat, wo_ref[0],
                   preferred_element_type=jnp.float32) + bo_ref[0]
    x = x + attn.reshape(TB, S, D)

    # ---------------- feed-forward sub-block (norm_first) ------------------
    xn2 = _layernorm(x, ln2w_ref[0], ln2b_ref[0])
    h1 = jnp.dot(xn2.reshape(TB * S, D).astype(jnp.bfloat16), w1_ref[0],
                 preferred_element_type=jnp.float32) + b1_ref[0]
    h1 = jnp.maximum(h1, 0.0).astype(jnp.bfloat16)            # default act: ReLU
    ff = jnp.dot(h1, w2_ref[0],
                 preferred_element_type=jnp.float32) + b2_ref[0]
    x = x + ff.reshape(TB, S, D)

    o_ref[...] = x.astype(o_ref.dtype)


def _vmem_limit_bytes(requested=64 * 1024 * 1024):
    """Generation-aware VMEM limit: never ask for more than ~70% of physical."""
    try:
        cap = pltpu.get_tpu_info().vmem_capacity_bytes
    except Exception:  # pragma: no cover - conservative fallback
        cap = 128 * 1024 * 1024
    return int(min(requested, 0.7 * cap))


def gpt_encoder_pallas(x, stacked, nheads, *, batch_block=None, kv_tile=None):
    """Full GPTEncoder forward. x: (B, S, D). stacked: dict of (L, ...) arrays."""
    B, S, D = x.shape
    L = stacked["wqkv"].shape[0]
    H = nheads
    dh = D // H
    TB = batch_block if batch_block is not None else B
    assert B % TB == 0
    kv_tile = kv_tile if kv_tile is not None else min(S, 256)
    assert S % kv_tile == 0

    weights = [stacked[name] for name in PARAM_ORDER]

    def weight_spec(arr):
        nz = arr.ndim - 1
        return pl.BlockSpec((1,) + tuple(arr.shape[1:]),
                            lambda b, l, _nz=nz: (l,) + (0,) * _nz)

    in_specs = [pl.BlockSpec((TB, S, D), lambda b, l: (b, 0, 0))]
    in_specs += [weight_spec(w) for w in weights]

    return pl.pallas_call(
        functools.partial(encoder_stack_kernel, nheads=H, kv_tile=kv_tile),
        out_shape=jax.ShapeDtypeStruct((B, S, D), x.dtype),
        grid=(B // TB, L),
        in_specs=in_specs,
        out_specs=pl.BlockSpec((TB, S, D), lambda b, l: (b, 0, 0)),
        scratch_shapes=[pltpu.VMEM((H * TB, S, dh), jnp.bfloat16),   # K
                        pltpu.VMEM((H * TB, S, dh), jnp.bfloat16)],  # V
        compiler_params=pltpu.CompilerParams(
            dimension_semantics=("parallel", "arbitrary"),
            vmem_limit_bytes=_vmem_limit_bytes(),
        ),
    )(x, *weights)


# ----------------------------------------------------------------------------
# Parameter setup (torch-style shapes) + host-side re-layout / stacking.
# ----------------------------------------------------------------------------
def init_layer_params(key, dmodel, nhidden):
    """Shapes follow nn.TransformerEncoderLayer internals (torch (out,in) layout)."""
    ks = jax.random.split(key, 8)
    std = 0.02
    return dict(
        wqkv=std * jax.random.normal(ks[0], (3 * dmodel, dmodel), jnp.float32),
        bqkv=0.01 * jax.random.normal(ks[1], (3 * dmodel,), jnp.float32),
        wo=std * jax.random.normal(ks[2], (dmodel, dmodel), jnp.float32),
        bo=0.01 * jax.random.normal(ks[3], (dmodel,), jnp.float32),
        ln1w=jnp.ones((dmodel,), jnp.float32),
        ln1b=jnp.zeros((dmodel,), jnp.float32),
        ln2w=jnp.ones((dmodel,), jnp.float32),
        ln2b=jnp.zeros((dmodel,), jnp.float32),
        w1=std * jax.random.normal(ks[4], (nhidden, dmodel), jnp.float32),
        b1=0.01 * jax.random.normal(ks[5], (nhidden,), jnp.float32),
        w2=std * jax.random.normal(ks[6], (dmodel, nhidden), jnp.float32),
        b2=0.01 * jax.random.normal(ks[7], (dmodel,), jnp.float32),
    )


def stack_kernel_params(torch_params, nheads):
    """Re-layout torch weights to the fused kernel layout, stack over layers and
    cast matmul weights to bf16 (biases / LN params stay f32)."""
    def per_layer(p):
        D = p["wo"].shape[0]
        dh = D // nheads
        scale = 1.0 / float(dh) ** 0.5
        wqkv = p["wqkv"].T                      # (D, 3D), columns [q | k | v]
        bqkv = p["bqkv"]                        # (3D,)
        # pre-fold attention scale into the Q projection (saves S^2*H multiplies)
        col_scale = jnp.concatenate([jnp.full((D,), scale, jnp.float32),
                                     jnp.ones((2 * D,), jnp.float32)])
        wqkv = wqkv * col_scale[None, :]
        bqkv = bqkv * col_scale
        return dict(
            wqkv=wqkv, bqkv=bqkv[None, :],
            wo=p["wo"].T, bo=p["bo"][None, :],
            ln1w=p["ln1w"][None, :], ln1b=p["ln1b"][None, :],
            ln2w=p["ln2w"][None, :], ln2b=p["ln2b"][None, :],
            w1=p["w1"].T, b1=p["b1"][None, :],
            w2=p["w2"].T, b2=p["b2"][None, :],
        )

    per = [per_layer(p) for p in torch_params]
    stacked = {}
    for name in PARAM_ORDER:
        arr = jnp.stack([layer[name] for layer in per], axis=0)
        if name in _MATMUL_NAMES:
            arr = arr.astype(jnp.bfloat16)
        stacked[name] = arr
    return stacked


# ----------------------------------------------------------------------------
# Pure-JAX reference (mirrors PyTorch semantics) for validation.
# ----------------------------------------------------------------------------
def _ln_ref(x, w, b):
    mu = x.mean(-1, keepdims=True)
    var = ((x - mu) ** 2).mean(-1, keepdims=True)
    return (x - mu) / jnp.sqrt(var + EPS) * w + b


def encoder_ref(x, torch_layer_params, nheads):
    B, S, D = x.shape
    dh = D // nheads
    mask = jnp.tril(jnp.ones((S, S), bool))
    for p in torch_layer_params:
        xn = _ln_ref(x, p["ln1w"], p["ln1b"])
        qkv = xn @ p["wqkv"].T + p["bqkv"]
        q, k, v = jnp.split(qkv, 3, axis=-1)
        q = q.reshape(B, S, nheads, dh).transpose(0, 2, 1, 3)
        k = k.reshape(B, S, nheads, dh).transpose(0, 2, 1, 3)
        v = v.reshape(B, S, nheads, dh).transpose(0, 2, 1, 3)
        s = (q @ k.transpose(0, 1, 3, 2)) / jnp.sqrt(jnp.float32(dh))
        s = jnp.where(mask, s, -jnp.inf)
        a = jax.nn.softmax(s, axis=-1) @ v
        a = a.transpose(0, 2, 1, 3).reshape(B, S, D)
        a = a @ p["wo"].T + p["bo"]
        x = x + a
        xn2 = _ln_ref(x, p["ln2w"], p["ln2b"])
        h = jax.nn.relu(xn2 @ p["w1"].T + p["b1"])
        x = x + (h @ p["w2"].T + p["b2"])
    return x


if __name__ == "__main__":
    # batch, seq, dmodel, nheads, nhidden, nlayers
    # (D a 128-multiple for lane-dense matmul outputs)
    B, S, D, H, F, L = 2, 32, 128, 4, 128, 2
    assert D % H == 0
    key = jax.random.PRNGKey(0)
    kx, kp = jax.random.split(key)
    x = jax.random.normal(kx, (B, S, D), jnp.float32)
    layer_keys = jax.random.split(kp, L)
    torch_params = [init_layer_params(k, D, F) for k in layer_keys]
    stacked = stack_kernel_params(torch_params, H)

    out = gpt_encoder_pallas(x, stacked, H, batch_block=B)
    out = jax.block_until_ready(out)

    assert out.shape == (B, S, D)
    assert bool(jnp.all(jnp.isfinite(out)))
    ref = encoder_ref(x, torch_params, H)
    max_err = float(jnp.max(jnp.abs(out - ref)))
    assert max_err < 2e-2, f"mismatch vs reference: {max_err}"
    print("KERNEL_OK")
</pallas_src>

<mosaic_0001>
module attributes {stable_mosaic.version = 11 : i64} {
  func.func @encoder_stack_kernel(%arg0: i32, %arg1: i32, %arg2: memref<2x32x128xf32, #tpu.memory_space<vmem>>, %arg3: memref<1x128x384xbf16, #tpu.memory_space<vmem>>, %arg4: memref<1x1x384xf32, #tpu.memory_space<vmem>>, %arg5: memref<1x128x128xbf16, #tpu.memory_space<vmem>>, %arg6: memref<1x1x128xf32, #tpu.memory_space<vmem>>, %arg7: memref<1x1x128xf32, #tpu.memory_space<vmem>>, %arg8: memref<1x1x128xf32, #tpu.memory_space<vmem>>, %arg9: memref<1x1x128xf32, #tpu.memory_space<vmem>>, %arg10: memref<1x1x128xf32, #tpu.memory_space<vmem>>, %arg11: memref<1x128x128xbf16, #tpu.memory_space<vmem>>, %arg12: memref<1x1x128xf32, #tpu.memory_space<vmem>>, %arg13: memref<1x128x128xbf16, #tpu.memory_space<vmem>>, %arg14: memref<1x1x128xf32, #tpu.memory_space<vmem>>, %arg15: memref<2x32x128xf32, #tpu.memory_space<vmem>>, %arg16: memref<8x32x32xbf16, #tpu.memory_space<vmem>>, %arg17: memref<8x32x32xbf16, #tpu.memory_space<vmem>>) attributes {dimension_semantics = [#tpu.dimension_semantics<parallel>, #tpu.dimension_semantics<arbitrary>], iteration_bounds = array<i64: 1, 2>, scalar_prefetch = 0 : i64, scratch_operands = 2 : i64, tpu.core_type = #tpu.core_type<tc>, window_params = [{transform_indices = @transform_0, window_bounds = array<i64: 2, 32, 128>}, {transform_indices = @transform_1, window_bounds = array<i64: 1, 128, 384>}, {transform_indices = @transform_2, window_bounds = array<i64: 1, 1, 384>}, {transform_indices = @transform_3, window_bounds = array<i64: 1, 128, 128>}, {transform_indices = @transform_4, window_bounds = array<i64: 1, 1, 128>}, {transform_indices = @transform_5, window_bounds = array<i64: 1, 1, 128>}, {transform_indices = @transform_6, window_bounds = array<i64: 1, 1, 128>}, {transform_indices = @transform_7, window_bounds = array<i64: 1, 1, 128>}, {transform_indices = @transform_8, window_bounds = array<i64: 1, 1, 128>}, {transform_indices = @transform_9, window_bounds = array<i64: 1, 128, 128>}, {transform_indices = @transform_10, window_bounds = array<i64: 1, 1, 128>}, {transform_indices = @transform_11, window_bounds = array<i64: 1, 128, 128>}, {transform_indices = @transform_12, window_bounds = array<i64: 1, 1, 128>}, {transform_indices = @transform_13, window_bounds = array<i64: 2, 32, 128>}]} {
    %c0_i32 = arith.constant 0 : i32
    %0 = arith.cmpi eq, %arg1, %c0_i32 : i32
    %1 = arith.extui %0 : i1 to i32
    %c0_i32_0 = arith.constant 0 : i32
    %2 = arith.cmpi ne, %1, %c0_i32_0 : i32
    scf.if %2 {
      %c0_75 = arith.constant 0 : index
      %c0_76 = arith.constant 0 : index
      %c0_77 = arith.constant 0 : index
      %187 = vector.load %arg2[%c0_75, %c0_76, %c0_77] : memref<2x32x128xf32, #tpu.memory_space<vmem>>, vector<2x32x128xf32>
      %c0_78 = arith.constant 0 : index
      %c0_79 = arith.constant 0 : index
      %c0_80 = arith.constant 0 : index
      %188 = vector.load %arg15[%c0_78, %c0_79, %c0_80] : memref<2x32x128xf32, #tpu.memory_space<vmem>>, vector<2x32x128xf32>
      tpu.vector_store %arg15[%c0_78, %c0_79, %c0_80], %187 {strides = array<i32>} : memref<2x32x128xf32, #tpu.memory_space<vmem>>, vector<2x32x128xf32>,
    } else {
    }
    %c0 = arith.constant 0 : index
    %c0_1 = arith.constant 0 : index
    %c0_2 = arith.constant 0 : index
    %3 = vector.load %arg15[%c0, %c0_1, %c0_2] : memref<2x32x128xf32, #tpu.memory_space<vmem>>, vector<2x32x128xf32>
    %c0_3 = arith.constant 0 : index
    %c0_4 = arith.constant 0 : index
    %c0_5 = arith.constant 0 : index
    %4 = vector.load %arg7[%c0_3, %c0_4, %c0_5] : memref<1x1x128xf32, #tpu.memory_space<vmem>>, vector<1x1x128xf32>
    %5 = vector.shape_cast %4 : vector<1x1x128xf32> to vector<1x128xf32>
    %c0_6 = arith.constant 0 : index
    %c0_7 = arith.constant 0 : index
    %c0_8 = arith.constant 0 : index
    %6 = vector.load %arg8[%c0_6, %c0_7, %c0_8] : memref<1x1x128xf32, #tpu.memory_space<vmem>>, vector<1x1x128xf32>
    %7 = vector.shape_cast %6 : vector<1x1x128xf32> to vector<1x128xf32>
    %cst = arith.constant dense<0.000000e+00> : vector<2x32xf32>
    %8 = vector.multi_reduction <add>, %3, %cst [2] : vector<2x32x128xf32> to vector<2x32xf32>
    %9 = vector.shape_cast %8 : vector<2x32xf32> to vector<2x32x1xf32>
    %cst_9 = arith.constant 1.280000e+02 : f32
    %10 = vector.broadcast %cst_9 : f32 to vector<2x32x1xf32>
    %11 = arith.divf %9, %10 : vector<2x32x1xf32>
    %12 = vector.broadcast %11 : vector<2x32x1xf32> to vector<2x32x128xf32>
    %13 = arith.subf %3, %12 : vector<2x32x128xf32>
    %14 = arith.mulf %13, %13 : vector<2x32x128xf32>
    %cst_10 = arith.constant dense<0.000000e+00> : vector<2x32xf32>
    %15 = vector.multi_reduction <add>, %14, %cst_10 [2] : vector<2x32x128xf32> to vector<2x32xf32>
    %16 = vector.shape_cast %15 : vector<2x32xf32> to vector<2x32x1xf32>
    %cst_11 = arith.constant 1.280000e+02 : f32
    %17 = vector.broadcast %cst_11 : f32 to vector<2x32x1xf32>
    %18 = arith.divf %16, %17 : vector<2x32x1xf32>
    %cst_12 = arith.constant 9.99999974E-6 : f32
    %19 = vector.broadcast %cst_12 : f32 to vector<2x32x1xf32>
    %20 = arith.addf %18, %19 : vector<2x32x1xf32>
    %21 = math.rsqrt %20 : vector<2x32x1xf32>
    %22 = vector.broadcast %21 : vector<2x32x1xf32> to vector<2x32x128xf32>
    %23 = arith.mulf %13, %22 : vector<2x32x128xf32>
    %24 = vector.shape_cast %5 : vector<1x128xf32> to vector<1x1x128xf32>
    %25 = vector.broadcast %24 : vector<1x1x128xf32> to vector<2x32x128xf32>
    %26 = arith.mulf %23, %25 : vector<2x32x128xf32>
    %27 = vector.shape_cast %7 : vector<1x128xf32> to vector<1x1x128xf32>
    %28 = vector.broadcast %27 : vector<1x1x128xf32> to vector<2x32x128xf32>
    %29 = arith.addf %26, %28 : vector<2x32x128xf32>
    %30 = vector.shape_cast %29 : vector<2x32x128xf32> to vector<64x128xf32>
    %31 = arith.truncf %30 : vector<64x128xf32> to vector<64x128xbf16>
    %c0_13 = arith.constant 0 : index
    %c0_14 = arith.constant 0 : index
    %c0_15 = arith.constant 0 : index
    %32 = vector.load %arg3[%c0_13, %c0_14, %c0_15] : memref<1x128x384xbf16, #tpu.memory_space<vmem>>, vector<1x128x384xbf16>
    %33 = vector.shape_cast %32 : vector<1x128x384xbf16> to vector<128x384xbf16>
    %cst_16 = arith.constant dense<0.000000e+00> : vector<64x384xf32>
    %34 = tpu.matmul %31, %33, %cst_16 {dimension_numbers = #tpu.dot_dimension_numbers<[1], [0], [0], [1], [0, 0, 1, 1], [], []>} : vector<64x128xbf16>, vector<128x384xbf16>, vector<64x384xf32> -> vector<64x384xf32>
    %c0_17 = arith.constant 0 : index
    %c0_18 = arith.constant 0 : index
    %c0_19 = arith.constant 0 : index
    %35 = vector.load %arg4[%c0_17, %c0_18, %c0_19] : memref<1x1x384xf32, #tpu.memory_space<vmem>>, vector<1x1x384xf32>
    %36 = vector.shape_cast %35 : vector<1x1x384xf32> to vector<1x384xf32>
    %37 = vector.broadcast %36 : vector<1x384xf32> to vector<64x384xf32>
    %38 = arith.addf %34, %37 : vector<64x384xf32>
    %39 = arith.truncf %38 : vector<64x384xf32> to vector<64x384xbf16>
    %40 = vector.extract_strided_slice %39 {offsets = [0, 0], sizes = [64, 32], strides = [1, 1]} : vector<64x384xbf16> to vector<64x32xbf16>
    %41 = vector.shape_cast %40 : vector<64x32xbf16> to vector<2x32x32xbf16>
    %42 = vector.extract_strided_slice %39 {offsets = [0, 32], sizes = [64, 32], strides = [1, 1]} : vector<64x384xbf16> to vector<64x32xbf16>
    %43 = vector.shape_cast %42 : vector<64x32xbf16> to vector<2x32x32xbf16>
    %44 = vector.extract_strided_slice %39 {offsets = [0, 64], sizes = [64, 32], strides = [1, 1]} : vector<64x384xbf16> to vector<64x32xbf16>
    %45 = vector.shape_cast %44 : vector<64x32xbf16> to vector<2x32x32xbf16>
    %46 = vector.extract_strided_slice %39 {offsets = [0, 96], sizes = [64, 32], strides = [1, 1]} : vector<64x384xbf16> to vector<64x32xbf16>
    %47 = vector.shape_cast %46 : vector<64x32xbf16> to vector<2x32x32xbf16>
    %48 = vector.shape_cast %41 : vector<2x32x32xbf16> to vector<1x2x32x32xbf16>
    %49 = vector.shape_cast %43 : vector<2x32x32xbf16> to vector<1x2x32x32xbf16>
    %50 = vector.shape_cast %45 : vector<2x32x32xbf16> to vector<1x2x32x32xbf16>
    %51 = vector.shape_cast %47 : vector<2x32x32xbf16> to vector<1x2x32x32xbf16>
    %52 = tpu.concatenate %48, %49, %50, %51 in 0 : vector<1x2x32x32xbf16>, vector<1x2x32x32xbf16>, vector<1x2x32x32xbf16>, vector<1x2x32x32xbf16> -> vector<4x2x32x32xbf16>
    %53 = vector.shape_cast %52 : vector<4x2x32x32xbf16> to vector<8x32x32xbf16>
    %54 = vector.extract_strided_slice %39 {offsets = [0, 128], sizes = [64, 32], strides = [1, 1]} : vector<64x384xbf16> to vector<64x32xbf16>
    %55 = vector.shape_cast %54 : vector<64x32xbf16> to vector<2x32x32xbf16>
    %56 = vector.extract_strided_slice %39 {offsets = [0, 160], sizes = [64, 32], strides = [1, 1]} : vector<64x384xbf16> to vector<64x32xbf16>
    %57 = vector.shape_cast %56 : vector<64x32xbf16> to vector<2x32x32xbf16>
    %58 = vector.extract_strided_slice %39 {offsets = [0, 192], sizes = [64, 32], strides = [1, 1]} : vector<64x384xbf16> to vector<64x32xbf16>
    %59 = vector.shape_cast %58 : vector<64x32xbf16> to vector<2x32x32xbf16>
    %60 = vector.extract_strided_slice %39 {offsets = [0, 224], sizes = [64, 32], strides = [1, 1]} : vector<64x384xbf16> to vector<64x32xbf16>
    %61 = vector.shape_cast %60 : vector<64x32xbf16> to vector<2x32x32xbf16>
    %62 = vector.shape_cast %55 : vector<2x32x32xbf16> to vector<1x2x32x32xbf16>
    %63 = vector.shape_cast %57 : vector<2x32x32xbf16> to vector<1x2x32x32xbf16>
    %64 = vector.shape_cast %59 : vector<2x32x32xbf16> to vector<1x2x32x32xbf16>
    %65 = vector.shape_cast %61 : vector<2x32x32xbf16> to vector<1x2x32x32xbf16>
    %66 = tpu.concatenate %62, %63, %64, %65 in 0 : vector<1x2x32x32xbf16>, vector<1x2x32x32xbf16>, vector<1x2x32x32xbf16>, vector<1x2x32x32xbf16> -> vector<4x2x32x32xbf16>
    %67 = vector.shape_cast %66 : vector<4x2x32x32xbf16> to vector<8x32x32xbf16>
    %c0_20 = arith.constant 0 : index
    %c0_21 = arith.constant 0 : index
    %c0_22 = arith.constant 0 : index
    %68 = vector.load %arg16[%c0_20, %c0_21, %c0_22] : memref<8x32x32xbf16, #tpu.memory_space<vmem>>, vector<8x32x32xbf16>
    tpu.vector_store %arg16[%c0_20, %c0_21, %c0_22], %67 {strides = array<i32>} : memref<8x32x32xbf16, #tpu.memory_space<vmem>>, vector<8x32x32xbf16>,
    %69 = vector.extract_strided_slice %39 {offsets = [0, 256], sizes = [64, 32], strides = [1, 1]} : vector<64x384xbf16> to vector<64x32xbf16>
    %70 = vector.shape_cast %69 : vector<64x32xbf16> to vector<2x32x32xbf16>
    %71 = vector.extract_strided_slice %39 {offsets = [0, 288], sizes = [64, 32], strides = [1, 1]} : vector<64x384xbf16> to vector<64x32xbf16>
    %72 = vector.shape_cast %71 : vector<64x32xbf16> to vector<2x32x32xbf16>
    %73 = vector.extract_strided_slice %39 {offsets = [0, 320], sizes = [64, 32], strides = [1, 1]} : vector<64x384xbf16> to vector<64x32xbf16>
    %74 = vector.shape_cast %73 : vector<64x32xbf16> to vector<2x32x32xbf16>
    %75 = vector.extract_strided_slice %39 {offsets = [0, 352], sizes = [64, 32], strides = [1, 1]} : vector<64x384xbf16> to vector<64x32xbf16>
    %76 = vector.shape_cast %75 : vector<64x32xbf16> to vector<2x32x32xbf16>
    %77 = vector.shape_cast %70 : vector<2x32x32xbf16> to vector<1x2x32x32xbf16>
    %78 = vector.shape_cast %72 : vector<2x32x32xbf16> to vector<1x2x32x32xbf16>
    %79 = vector.shape_cast %74 : vector<2x32x32xbf16> to vector<1x2x32x32xbf16>
    %80 = vector.shape_cast %76 : vector<2x32x32xbf16> to vector<1x2x32x32xbf16>
    %81 = tpu.concatenate %77, %78, %79, %80 in 0 : vector<1x2x32x32xbf16>, vector<1x2x32x32xbf16>, vector<1x2x32x32xbf16>, vector<1x2x32x32xbf16> -> vector<4x2x32x32xbf16>
    %82 = vector.shape_cast %81 : vector<4x2x32x32xbf16> to vector<8x32x32xbf16>
    %c0_23 = arith.constant 0 : index
    %c0_24 = arith.constant 0 : index
    %c0_25 = arith.constant 0 : index
    %83 = vector.load %arg17[%c0_23, %c0_24, %c0_25] : memref<8x32x32xbf16, #tpu.memory_space<vmem>>, vector<8x32x32xbf16>
    tpu.vector_store %arg17[%c0_23, %c0_24, %c0_25], %82 {strides = array<i32>} : memref<8x32x32xbf16, #tpu.memory_space<vmem>>, vector<8x32x32xbf16>,
    %84 = tpu.iota {dimensions = array<i32: 0>} : vector<32x32xi32>
    %85 = tpu.iota {dimensions = array<i32: 1>} : vector<32x32xi32>
    %cst_26 = arith.constant -1.000000e+30 : f32
    %86 = vector.broadcast %cst_26 : f32 to vector<8x32x1xf32>
    %cst_27 = arith.constant 0.000000e+00 : f32
    %87 = vector.broadcast %cst_27 : f32 to vector<8x32x1xf32>
    %cst_28 = arith.constant 0.000000e+00 : f32
    %88 = vector.broadcast %cst_28 : f32 to vector<8x32x32xf32>
    %c0_i32_29 = arith.constant 0 : i32
    %c32_i32 = arith.constant 32 : i32
    %89 = arith.muli %c0_i32_29, %c32_i32 : i32
    %90 = tpu.assume_multiple %89, 32 : i32
    %c0_30 = arith.constant 0 : index
    %91 = arith.index_cast %90 : i32 to index
    %c0_31 = arith.constant 0 : index
    %92 = vector.load %arg16[%c0_30, %91, %c0_31] : memref<8x32x32xbf16, #tpu.memory_space<vmem>>, vector<8x32x32xbf16>
    %c0_32 = arith.constant 0 : index
    %93 = arith.index_cast %90 : i32 to index
    %c0_33 = arith.constant 0 : index
    %94 = vector.load %arg17[%c0_32, %93, %c0_33] : memref<8x32x32xbf16, #tpu.memory_space<vmem>>, vector<8x32x32xbf16>
    "tpu.trace_start"() <{level = 10 : i32, message = "bqd,bkd->bqk"}> : () -> ()
    %cst_34 = arith.constant dense<0.000000e+00> : vector<8x32x32xf32>
    %95 = tpu.matmul %53, %92, %cst_34 {dimension_numbers = #tpu.dot_dimension_numbers<[2], [2], [1], [1], [0, 0, 0, 1, 1, 1], [0], [0]>} : vector<8x32x32xbf16>, vector<8x32x32xbf16>, vector<8x32x32xf32> -> vector<8x32x32xf32>
    "tpu.trace_stop"() : () -> ()
    %96 = vector.broadcast %90 : i32 to vector<32x32xi32>
    %97 = arith.addi %96, %85 : vector<32x32xi32>
    %98 = arith.cmpi sle, %97, %84 : vector<32x32xi32>
    %cst_35 = arith.constant -1.000000e+30 : f32
    %99 = vector.shape_cast %98 : vector<32x32xi1> to vector<1x32x32xi1>
    %100 = vector.broadcast %99 : vector<1x32x32xi1> to vector<8x32x32xi1>
    %101 = vector.broadcast %cst_35 : f32 to vector<8x32x32xf32>
    %102 = arith.select %100, %95, %101 : vector<8x32x32xi1>, vector<8x32x32xf32>
    %cst_36 = arith.constant dense<0xFF800000> : vector<8x32xf32>
    %103 = vector.multi_reduction <maximumf>, %102, %cst_36 [2] : vector<8x32x32xf32> to vector<8x32xf32>
    %104 = vector.shape_cast %103 : vector<8x32xf32> to vector<8x32x1xf32>
    %105 = arith.maximumf %86, %104 : vector<8x32x1xf32>
    %106 = arith.subf %86, %105 : vector<8x32x1xf32>
    %107 = math.exp %106 : vector<8x32x1xf32>
    %108 = vector.broadcast %105 : vector<8x32x1xf32> to vector<8x32x32xf32>
    %109 = arith.subf %102, %108 : vector<8x32x32xf32>
    %110 = math.exp %109 : vector<8x32x32xf32>
    %111 = arith.mulf %107, %87 : vector<8x32x1xf32>
    %cst_37 = arith.constant dense<0.000000e+00> : vector<8x32xf32>
    %112 = vector.multi_reduction <add>, %110, %cst_37 [2] : vector<8x32x32xf32> to vector<8x32xf32>
    %113 = vector.shape_cast %112 : vector<8x32xf32> to vector<8x32x1xf32>
    %114 = arith.addf %111, %113 : vector<8x32x1xf32>
    %115 = vector.broadcast %107 : vector<8x32x1xf32> to vector<8x32x32xf32>
    %116 = arith.mulf %115, %88 : vector<8x32x32xf32>
    %117 = arith.truncf %110 : vector<8x32x32xf32> to vector<8x32x32xbf16>
    "tpu.trace_start"() <{level = 10 : i32, message = "bqk,bkd->bqd"}> : () -> ()
    %cst_38 = arith.constant dense<0.000000e+00> : vector<8x32x32xf32>
    %118 = tpu.matmul %117, %94, %cst_38 {dimension_numbers = #tpu.dot_dimension_numbers<[2], [1], [1], [2], [0, 0, 0, 1, 1, 2], [0], [0]>} : vector<8x32x32xbf16>, vector<8x32x32xbf16>, vector<8x32x32xf32> -> vector<8x32x32xf32>
    "tpu.trace_stop"() : () -> ()
    %119 = arith.addf %116, %118 : vector<8x32x32xf32>
    %c1_i32 = arith.constant 1 : i32
    %120 = tpu.reciprocal %114 {approx = true} : vector<8x32x1xf32> -> vector<8x32x1xf32>
    %121 = vector.broadcast %120 : vector<8x32x1xf32> to vector<8x32x32xf32>
    %122 = arith.mulf %119, %121 : vector<8x32x32xf32>
    %123 = vector.extract_strided_slice %122 {offsets = [0, 0, 0], sizes = [2, 32, 32], strides = [1, 1, 1]} : vector<8x32x32xf32> to vector<2x32x32xf32>
    %124 = vector.extract_strided_slice %122 {offsets = [2, 0, 0], sizes = [2, 32, 32], strides = [1, 1, 1]} : vector<8x32x32xf32> to vector<2x32x32xf32>
    %125 = vector.extract_strided_slice %122 {offsets = [4, 0, 0], sizes = [2, 32, 32], strides = [1, 1, 1]} : vector<8x32x32xf32> to vector<2x32x32xf32>
    %126 = vector.extract_strided_slice %122 {offsets = [6, 0, 0], sizes = [2, 32, 32], strides = [1, 1, 1]} : vector<8x32x32xf32> to vector<2x32x32xf32>
    %127 = tpu.concatenate %123, %124, %125, %126 in 2 : vector<2x32x32xf32>, vector<2x32x32xf32>, vector<2x32x32xf32>, vector<2x32x32xf32> -> vector<2x32x128xf32>
    %128 = vector.shape_cast %127 : vector<2x32x128xf32> to vector<64x128xf32>
    %129 = arith.truncf %128 : vector<64x128xf32> to vector<64x128xbf16>
    %c0_39 = arith.constant 0 : index
    %c0_40 = arith.constant 0 : index
    %c0_41 = arith.constant 0 : index
    %130 = vector.load %arg5[%c0_39, %c0_40, %c0_41] : memref<1x128x128xbf16, #tpu.memory_space<vmem>>, vector<1x128x128xbf16>
    %131 = vector.shape_cast %130 : vector<1x128x128xbf16> to vector<128x128xbf16>
    %cst_42 = arith.constant dense<0.000000e+00> : vector<64x128xf32>
    %132 = tpu.matmul %129, %131, %cst_42 {dimension_numbers = #tpu.dot_dimension_numbers<[1], [0], [0], [1], [0, 0, 1, 1], [], []>} : vector<64x128xbf16>, vector<128x128xbf16>, vector<64x128xf32> -> vector<64x128xf32>
    %c0_43 = arith.constant 0 : index
    %c0_44 = arith.constant 0 : index
    %c0_45 = arith.constant 0 : index
    %133 = vector.load %arg6[%c0_43, %c0_44, %c0_45] : memref<1x1x128xf32, #tpu.memory_space<vmem>>, vector<1x1x128xf32>
    %134 = vector.shape_cast %133 : vector<1x1x128xf32> to vector<1x128xf32>
    %135 = vector.broadcast %134 : vector<1x128xf32> to vector<64x128xf32>
    %136 = arith.addf %132, %135 : vector<64x128xf32>
    %137 = vector.shape_cast %136 : vector<64x128xf32> to vector<2x32x128xf32>
    %138 = arith.addf %3, %137 : vector<2x32x128xf32>
    %c0_46 = arith.constant 0 : index
    %c0_47 = arith.constant 0 : index
    %c0_48 = arith.constant 0 : index
    %139 = vector.load %arg9[%c0_46, %c0_47, %c0_48] : memref<1x1x128xf32, #tpu.memory_space<vmem>>, vector<1x1x128xf32>
    %140 = vector.shape_cast %139 : vector<1x1x128xf32> to vector<1x128xf32>
    %c0_49 = arith.constant 0 : index
    %c0_50 = arith.constant 0 : index
    %c0_51 = arith.constant 0 : index
    %141 = vector.load %arg10[%c0_49, %c0_50, %c0_51] : memref<1x1x128xf32, #tpu.memory_space<vmem>>, vector<1x1x128xf32>
    %142 = vector.shape_cast %141 : vector<1x1x128xf32> to vector<1x128xf32>
    %cst_52 = arith.constant dense<0.000000e+00> : vector<2x32xf32>
    %143 = vector.multi_reduction <add>, %138, %cst_52 [2] : vector<2x32x128xf32> to vector<2x32xf32>
    %144 = vector.shape_cast %143 : vector<2x32xf32> to vector<2x32x1xf32>
    %cst_53 = arith.constant 1.280000e+02 : f32
    %145 = vector.broadcast %cst_53 : f32 to vector<2x32x1xf32>
    %146 = arith.divf %144, %145 : vector<2x32x1xf32>
    %147 = vector.broadcast %146 : vector<2x32x1xf32> to vector<2x32x128xf32>
    %148 = arith.subf %138, %147 : vector<2x32x128xf32>
    %149 = arith.mulf %148, %148 : vector<2x32x128xf32>
    %cst_54 = arith.constant dense<0.000000e+00> : vector<2x32xf32>
    %150 = vector.multi_reduction <add>, %149, %cst_54 [2] : vector<2x32x128xf32> to vector<2x32xf32>
    %151 = vector.shape_cast %150 : vector<2x32xf32> to vector<2x32x1xf32>
    %cst_55 = arith.constant 1.280000e+02 : f32
    %152 = vector.broadcast %cst_55 : f32 to vector<2x32x1xf32>
    %153 = arith.divf %151, %152 : vector<2x32x1xf32>
    %cst_56 = arith.constant 9.99999974E-6 : f32
    %154 = vector.broadcast %cst_56 : f32 to vector<2x32x1xf32>
    %155 = arith.addf %153, %154 : vector<2x32x1xf32>
    %156 = math.rsqrt %155 : vector<2x32x1xf32>
    %157 = vector.broadcast %156 : vector<2x32x1xf32> to vector<2x32x128xf32>
    %158 = arith.mulf %148, %157 : vector<2x32x128xf32>
    %159 = vector.shape_cast %140 : vector<1x128xf32> to vector<1x1x128xf32>
    %160 = vector.broadcast %159 : vector<1x1x128xf32> to vector<2x32x128xf32>
    %161 = arith.mulf %158, %160 : vector<2x32x128xf32>
    %162 = vector.shape_cast %142 : vector<1x128xf32> to vector<1x1x128xf32>
    %163 = vector.broadcast %162 : vector<1x1x128xf32> to vector<2x32x128xf32>
    %164 = arith.addf %161, %163 : vector<2x32x128xf32>
    %165 = vector.shape_cast %164 : vector<2x32x128xf32> to vector<64x128xf32>
    %166 = arith.truncf %165 : vector<64x128xf32> to vector<64x128xbf16>
    %c0_57 = arith.constant 0 : index
    %c0_58 = arith.constant 0 : index
    %c0_59 = arith.constant 0 : index
    %167 = vector.load %arg11[%c0_57, %c0_58, %c0_59] : memref<1x128x128xbf16, #tpu.memory_space<vmem>>, vector<1x128x128xbf16>
    %168 = vector.shape_cast %167 : vector<1x128x128xbf16> to vector<128x128xbf16>
    %cst_60 = arith.constant dense<0.000000e+00> : vector<64x128xf32>
    %169 = tpu.matmul %166, %168, %cst_60 {dimension_numbers = #tpu.dot_dimension_numbers<[1], [0], [0], [1], [0, 0, 1, 1], [], []>} : vector<64x128xbf16>, vector<128x128xbf16>, vector<64x128xf32> -> vector<64x128xf32>
    %c0_61 = arith.constant 0 : index
    %c0_62 = arith.constant 0 : index
    %c0_63 = arith.constant 0 : index
    %170 = vector.load %arg12[%c0_61, %c0_62, %c0_63] : memref<1x1x128xf32, #tpu.memory_space<vmem>>, vector<1x1x128xf32>
    %171 = vector.shape_cast %170 : vector<1x1x128xf32> to vector<1x128xf32>
    %172 = vector.broadcast %171 : vector<1x128xf32> to vector<64x128xf32>
    %173 = arith.addf %169, %172 : vector<64x128xf32>
    %cst_64 = arith.constant 0.000000e+00 : f32
    %174 = vector.broadcast %cst_64 : f32 to vector<64x128xf32>
    %175 = arith.maximumf %173, %174 : vector<64x128xf32>
    %176 = arith.truncf %175 : vector<64x128xf32> to vector<64x128xbf16>
    %c0_65 = arith.constant 0 : index
    %c0_66 = arith.constant 0 : index
    %c0_67 = arith.constant 0 : index
    %177 = vector.load %arg13[%c0_65, %c0_66, %c0_67] : memref<1x128x128xbf16, #tpu.memory_space<vmem>>, vector<1x128x128xbf16>
    %178 = vector.shape_cast %177 : vector<1x128x128xbf16> to vector<128x128xbf16>
    %cst_68 = arith.constant dense<0.000000e+00> : vector<64x128xf32>
    %179 = tpu.matmul %176, %178, %cst_68 {dimension_numbers = #tpu.dot_dimension_numbers<[1], [0], [0], [1], [0, 0, 1, 1], [], []>} : vector<64x128xbf16>, vector<128x128xbf16>, vector<64x128xf32> -> vector<64x128xf32>
    %c0_69 = arith.constant 0 : index
    %c0_70 = arith.constant 0 : index
    %c0_71 = arith.constant 0 : index
    %180 = vector.load %arg14[%c0_69, %c0_70, %c0_71] : memref<1x1x128xf32, #tpu.memory_space<vmem>>, vector<1x1x128xf32>
    %181 = vector.shape_cast %180 : vector<1x1x128xf32> to vector<1x128xf32>
    %182 = vector.broadcast %181 : vector<1x128xf32> to vector<64x128xf32>
    %183 = arith.addf %179, %182 : vector<64x128xf32>
    %184 = vector.shape_cast %183 : vector<64x128xf32> to vector<2x32x128xf32>
    %185 = arith.addf %138, %184 : vector<2x32x128xf32>
    %c0_72 = arith.constant 0 : index
    %c0_73 = arith.constant 0 : index
    %c0_74 = arith.constant 0 : index
    %186 = vector.load %arg15[%c0_72, %c0_73, %c0_74] : memref<2x32x128xf32, #tpu.memory_space<vmem>>, vector<2x32x128xf32>
    tpu.vector_store %arg15[%c0_72, %c0_73, %c0_74], %185 {strides = array<i32>} : memref<2x32x128xf32, #tpu.memory_space<vmem>>, vector<2x32x128xf32>,
    return
  }
  func.func @transform_0(%arg0: i32, %arg1: i32) -> (i32, i32, i32) {
    %c0_i32 = arith.constant 0 : i32
    %c0_i32_0 = arith.constant 0 : i32
    %c0_i32_1 = arith.constant 0 : i32
    return %arg0, %c0_i32, %c0_i32_0 : i32, i32, i32
  }
  func.func @transform_1(%arg0: i32, %arg1: i32) -> (i32, i32, i32) {
    %c0_i32 = arith.constant 0 : i32
    %c0_i32_0 = arith.constant 0 : i32
    %c0_i32_1 = arith.constant 0 : i32
    return %arg1, %c0_i32, %c0_i32_0 : i32, i32, i32
  }
  func.func @transform_2(%arg0: i32, %arg1: i32) -> (i32, i32, i32) {
    %c0_i32 = arith.constant 0 : i32
    %c0_i32_0 = arith.constant 0 : i32
    %c0_i32_1 = arith.constant 0 : i32
    return %arg1, %c0_i32, %c0_i32_0 : i32, i32, i32
  }
  func.func @transform_3(%arg0: i32, %arg1: i32) -> (i32, i32, i32) {
    %c0_i32 = arith.constant 0 : i32
    %c0_i32_0 = arith.constant 0 : i32
    %c0_i32_1 = arith.constant 0 : i32
    return %arg1, %c0_i32, %c0_i32_0 : i32, i32, i32
  }
  func.func @transform_4(%arg0: i32, %arg1: i32) -> (i32, i32, i32) {
    %c0_i32 = arith.constant 0 : i32
    %c0_i32_0 = arith.constant 0 : i32
    %c0_i32_1 = arith.constant 0 : i32
    return %arg1, %c0_i32, %c0_i32_0 : i32, i32, i32
  }
  func.func @transform_5(%arg0: i32, %arg1: i32) -> (i32, i32, i32) {
    %c0_i32 = arith.constant 0 : i32
    %c0_i32_0 = arith.constant 0 : i32
    %c0_i32_1 = arith.constant 0 : i32
    return %arg1, %c0_i32, %c0_i32_0 : i32, i32, i32
  }
  func.func @transform_6(%arg0: i32, %arg1: i32) -> (i32, i32, i32) {
    %c0_i32 = arith.constant 0 : i32
    %c0_i32_0 = arith.constant 0 : i32
    %c0_i32_1 = arith.constant 0 : i32
    return %arg1, %c0_i32, %c0_i32_0 : i32, i32, i32
  }
  func.func @transform_7(%arg0: i32, %arg1: i32) -> (i32, i32, i32) {
    %c0_i32 = arith.constant 0 : i32
    %c0_i32_0 = arith.constant 0 : i32
    %c0_i32_1 = arith.constant 0 : i32
    return %arg1, %c0_i32, %c0_i32_0 : i32, i32, i32
  }
  func.func @transform_8(%arg0: i32, %arg1: i32) -> (i32, i32, i32) {
    %c0_i32 = arith.constant 0 : i32
    %c0_i32_0 = arith.constant 0 : i32
    %c0_i32_1 = arith.constant 0 : i32
    return %arg1, %c0_i32, %c0_i32_0 : i32, i32, i32
  }
  func.func @transform_9(%arg0: i32, %arg1: i32) -> (i32, i32, i32) {
    %c0_i32 = arith.constant 0 : i32
    %c0_i32_0 = arith.constant 0 : i32
    %c0_i32_1 = arith.constant 0 : i32
    return %arg1, %c0_i32, %c0_i32_0 : i32, i32, i32
  }
  func.func @transform_10(%arg0: i32, %arg1: i32) -> (i32, i32, i32) {
    %c0_i32 = arith.constant 0 : i32
    %c0_i32_0 = arith.constant 0 : i32
    %c0_i32_1 = arith.constant 0 : i32
    return %arg1, %c0_i32, %c0_i32_0 : i32, i32, i32
  }
  func.func @transform_11(%arg0: i32, %arg1: i32) -> (i32, i32, i32) {
    %c0_i32 = arith.constant 0 : i32
    %c0_i32_0 = arith.constant 0 : i32
    %c0_i32_1 = arith.constant 0 : i32
    return %arg1, %c0_i32, %c0_i32_0 : i32, i32, i32
  }
  func.func @transform_12(%arg0: i32, %arg1: i32) -> (i32, i32, i32) {
    %c0_i32 = arith.constant 0 : i32
    %c0_i32_0 = arith.constant 0 : i32
    %c0_i32_1 = arith.constant 0 : i32
    return %arg1, %c0_i32, %c0_i32_0 : i32, i32, i32
  }
  func.func @transform_13(%arg0: i32, %arg1: i32) -> (i32, i32, i32) {
    %c0_i32 = arith.constant 0 : i32
    %c0_i32_0 = arith.constant 0 : i32
    %c0_i32_1 = arith.constant 0 : i32
    return %arg0, %c0_i32, %c0_i32_0 : i32, i32, i32
  }
}

</mosaic_0001>

<llo_original>
// kernel: tpu_custom_call.1
$region0: #{tpu_custom_call.1}
  #allocation0 [shape = 'u32[]', space=smem, size = 0x4, offset = 0x4, fixed_abs, tag = 'smem constant byte address 0x4 - core index']
  #allocation1 [shape = 'u32[72,128]{1,0:T(1,128)}', space=vmem, size = 0x9000, scoped, tag = 'internal scratch']
  #allocation2 [shape = 'bf16[8,32,32]{2,1,0:T(8,128)(2,1)}', space=vmem, size = 0x10000, scoped, tag = 'scratch operand']
  #allocation3 [shape = 'bf16[8,32,32]{2,1,0:T(8,128)(2,1)}', space=vmem, size = 0x10000, scoped, tag = 'scratch operand']
  %s0 = inlined_call_operand.hbm [shape: f32[2,32,128], index: 0, kind: input, shape index: {}]
  %s1 = inlined_call_operand.hbm [shape: bf16[2,128,384], index: 1, kind: input, shape index: {}]
  %s2 = inlined_call_operand.hbm [shape: f32[2,1,384], index: 2, kind: input, shape index: {}]
  %s3 = inlined_call_operand.hbm [shape: bf16[2,128,128], index: 3, kind: input, shape index: {}]
  %s4 = inlined_call_operand.vmem [shape: f32[2,1,128], index: 4, kind: input, shape index: {}]
  %s5 = inlined_call_operand.vmem [shape: f32[2,1,128], index: 5, kind: input, shape index: {}]
  %s6 = inlined_call_operand.hbm [shape: f32[2,1,128], index: 6, kind: input, shape index: {}]
  %s7 = inlined_call_operand.vmem [shape: f32[2,1,128], index: 7, kind: input, shape index: {}]
  %s8 = inlined_call_operand.hbm [shape: f32[2,1,128], index: 8, kind: input, shape index: {}]
  %s9 = inlined_call_operand.hbm [shape: bf16[2,128,128], index: 9, kind: input, shape index: {}]
  %s10 = inlined_call_operand.vmem [shape: f32[2,1,128], index: 10, kind: input, shape index: {}]
  %s11 = inlined_call_operand.hbm [shape: bf16[2,128,128], index: 11, kind: input, shape index: {}]
  %s12 = inlined_call_operand.vmem [shape: f32[2,1,128], index: 12, kind: input, shape index: {}]
  %s13 = inlined_call_operand.hbm [shape: f32[2,32,128], index: 13, kind: output, shape index: {}]
  %s14 = sld [smem:[#allocation0]]
  $region121: #{tpu_custom_call.1} parent=0
    _
  %s16 = ssub.s32 1, %s14
  %s17 = scalar_select 0, %s16, %s14
  $region1: #{tpu_custom_call.1} parent=0
    #allocation4 [shape = 'u8[32768]{0}', space=vmem, size = 0x8000, scoped, tag = 'input window, operand 0, single buffered']
    #allocation5 [shape = 's32[2]{0}', space=sflag, size = 0x8, scoped, tag = 'scoped memory for tpu_custom_call.1']
    #allocation6 [shape = 's32[2]{0}', space=sflag, size = 0x8, scoped, tag = 'scoped memory for tpu_custom_call.1']
    #allocation7 [shape = 'u8[196608]{0}', space=vmem, size = 0x30000, scoped, tag = 'input window, operand 1']
    #allocation8 [shape = 's32[2]{0}', space=sflag, size = 0x8, scoped, tag = 'scoped memory for tpu_custom_call.1']
    #allocation9 [shape = 'u8[3072]{0}', space=vmem, size = 0xc00, scoped, tag = 'input window, operand 2']
    #allocation10 [shape = 'u8[65536]{0}', space=vmem, size = 0x10000, scoped, tag = 'input window, operand 3']
    #allocation11 [shape = 's32[2]{0}', space=sflag, size = 0x8, scoped, tag = 'scoped memory for tpu_custom_call.1']
    #allocation12 [shape = 'u8[1024]{0}', space=vmem, size = 0x400, scoped, tag = 'input window, operand 6']
    #allocation13 [shape = 'u8[1024]{0}', space=vmem, size = 0x400, scoped, tag = 'input window, operand 8']
    #allocation14 [shape = 's32[2]{0}', space=sflag, size = 0x8, scoped, tag = 'scoped memory for tpu_custom_call.1']
    #allocation15 [shape = 'u8[65536]{0}', space=vmem, size = 0x10000, scoped, tag = 'input window, operand 9']
    #allocation16 [shape = 'u8[65536]{0}', space=vmem, size = 0x10000, scoped, tag = 'input window, operand 11']
    #allocation17 [shape = 's32[2]{0}', space=sflag, size = 0x8, scoped, tag = 'scoped memory for tpu_custom_call.1']
    #allocation18 [shape = 'u8[32768]{0}', space=vmem, size = 0x8000, scoped, tag = 'output window, operand 0, single buffered']
    %18 = vsyncpa [#allocation5], 0
    %19 = vsyncpa [#allocation8], 0
    %s20 = scalar_lea.sflag [#allocation8], 1
    %21 = vsyncpa %s20, 0
    %22 = vsyncpa [#allocation11], 0
    %s23 = scalar_lea.sflag [#allocation11], 1
    %24 = vsyncpa %s23, 0
    %25 = vsyncpa [#allocation14], 0
    %s26 = scalar_lea.sflag [#allocation14], 1
    %27 = vsyncpa %s26, 0
    %28 = vsyncpa [#allocation17], 0
    %s29 = scalar_lea.sflag [#allocation17], 1
    %30 = vsyncpa %s29, 0
    %31 = vsyncpa [#allocation6], 0
    loop: start=0, step=1, limit=4
    $region2: #{tpu_custom_call.1} parent=1 // loop_pre_header
      _
    $region3: #{tpu_custom_call.1} parent=1 // loop_header
      %s33 = sphi 0, %s37
      %p34 = scmp.ge.s32.totalorder %s33, 4
      %s40 = sphi 0, %s52
      %s41 = sphi 0, %s48
      %s42 = sphi 0, %s40
      %s43 = sphi 0, %s41
      %s44 = sphi 0, %s42
      %s45 = sphi 0, %s43
      %s55 = sphi 0, %s57
      %s58 = sphi 0, %s55
      %s59 = sphi 0, %s58
      %s75 = sphi 0, %s59
      %s81 = sphi 0, %s83
      %s84 = sphi 0, %s81
      %s85 = sphi 0, %s84
      %s101 = sphi 0, %s85
      %s107 = sphi 0, %s109
      %s110 = sphi 0, %s107
      %s111 = sphi 0, %s110
      %s127 = sphi 0, %s111
      %s133 = sphi 0, %s135
      %s136 = sphi 0, %s133
      %s137 = sphi 0, %s136
      %s153 = sphi 0, %s137
      %s159 = sphi 0, %s161
      %s162 = sphi 0, %s159
      %s163 = sphi 0, %s162
      %s179 = sphi 0, %s163
      %s185 = sphi 0, %s187
      %s188 = sphi 0, %s185
      %s189 = sphi 0, %s188
      %s205 = sphi 0, %s189
      %s211 = sphi 0, %s213
      %s214 = sphi 0, %s211
      %s215 = sphi 0, %s214
      %s231 = sphi 0, %s215
      %s237 = sphi 0, %s239
      %s240 = sphi 0, %s237
      %s241 = sphi 0, %s240
      %s257 = sphi 0, %s241
      %s263 = sphi 0, %s265
      %s266 = sphi 0, %s263
      %s267 = sphi 0, %s266
      %s283 = sphi 0, %s267
      %s289 = sphi 0, %s291
      %s292 = sphi 0, %s289
      %s293 = sphi 0, %s292
      %s309 = sphi 0, %s293
      %s315 = sphi 0, %s317
      %s318 = sphi 0, %s315
      %s319 = sphi 0, %s318
      %s335 = sphi 0, %s319
      %s341 = sphi 0, %s343
      %s344 = sphi 0, %s341
      %s345 = sphi 0, %s344
      %s361 = sphi 0, %s345
      %s367 = sphi 0, %s369
      %s370 = sphi 0, %s367
      %s371 = sphi 0, %s370
      %s387 = sphi 0, %s371
      %s393 = sphi 0, %s395
      %s396 = sphi 0, %s393
      %s397 = sphi 0, %s396
      %s413 = sphi 0, %s397
    $region4: #{tpu_custom_call.1} parent=1 // loop_header_branch
      %36 = sbr.rel (%p34) target = $region8
    $region5: #{tpu_custom_call.1} parent=1 // loop_body
      %s38 = ssub.s32 %s33, 1
      %s39 = ssub.s32 %s33, 2
      %s46 = sadd.s32 1, %s41
      %p47 = scmp.ge.s32.totalorder %s46, 2
      %s48 = scalar_select %p47, 0, %s46
      %s49 = sadd.s32 1, %s40
      %s50 = scalar_select %p47, %s49, %s40
      %p51 = scmp.ge.s32.totalorder %s50, 1
      %s52 = scalar_select %p51, 0, %s50
      %s53 = ssub.s32 %s40, %s52
      %p54 = scmp.eq.s32.totalorder %s53, 0
      %s56 = sadd.s32 %s55, 1
      %s57 = scalar_select %p54, %s55, %s56
      %p60 = pneg %p54
      %p61 = scmp.eq.s32.totalorder %s33, 1
      %p62 = por %p60, %p61
      %p63 = scmp.ne.s32.totalorder %s55, %s58
      %p64 = scmp.eq.s32.totalorder %s33, 0
      %p65 = por %p63, %p64
      %p66 = scmp.ne.s32.totalorder %s55, %s58
      %p67 = scmp.eq.s32.totalorder %s38, 1
      %p68 = por %p66, %p67
      %p69 = scmp.ne.s32.totalorder %s58, %s59
      %p70 = scmp.eq.s32.totalorder %s38, 0
      %p71 = por %p69, %p70
      %p72 = scmp.ne.s32.totalorder %s58, %s59
      %p73 = scmp.eq.s32.totalorder %s39, 1
      %p74 = por %p72, %p73
      %p76 = scmp.ne.s32.totalorder %s59, %s75
      %p77 = scmp.eq.s32.totalorder %s39, 0
      %p78 = por %p76, %p77
      %s79 = ssub.s32 %s41, %s48
      %p80 = scmp.eq.s32.totalorder %s79, 0
      %s82 = sadd.s32 %s81, 1
      %s83 = scalar_select %p80, %s81, %s82
      %p86 = pneg %p80
      %p87 = scmp.eq.s32.totalorder %s33, 1
      %p88 = por %p86, %p87
      %p89 = scmp.ne.s32.totalorder %s81, %s84
      %p90 = scmp.eq.s32.totalorder %s33, 0
      %p91 = por %p89, %p90
      %p92 = scmp.ne.s32.totalorder %s81, %s84
      %p93 = scmp.eq.s32.totalorder %s38, 1
      %p94 = por %p92, %p93
      %p95 = scmp.ne.s32.totalorder %s84, %s85
      %p96 = scmp.eq.s32.totalorder %s38, 0
      %p97 = por %p95, %p96
      %p98 = scmp.ne.s32.totalorder %s84, %s85
      %p99 = scmp.eq.s32.totalorder %s39, 1
      %p100 = por %p98, %p99
      %p102 = scmp.ne.s32.totalorder %s85, %s101
      %p103 = scmp.eq.s32.totalorder %s39, 0
      %p104 = por %p102, %p103
      %s105 = ssub.s32 %s41, %s48
      %p106 = scmp.eq.s32.totalorder %s105, 0
      %s108 = sadd.s32 %s107, 1
      %s109 = scalar_select %p106, %s107, %s108
      %p112 = pneg %p106
      %p113 = scmp.eq.s32.totalorder %s33, 1
      %p114 = por %p112, %p113
      %p115 = scmp.ne.s32.totalorder %s107, %s110
      %p116 = scmp.eq.s32.totalorder %s33, 0
      %p117 = por %p115, %p116
      %p118 = scmp.ne.s32.totalorder %s107, %s110
      %p119 = scmp.eq.s32.totalorder %s38, 1
      %p120 = por %p118, %p119
      %p121 = scmp.ne.s32.totalorder %s110, %s111
      %p122 = scmp.eq.s32.totalorder %s38, 0
      %p123 = por %p121, %p122
      %p124 = scmp.ne.s32.totalorder %s110, %s111
      %p125 = scmp.eq.s32.totalorder %s39, 1
      %p126 = por %p124, %p125
      %p128 = scmp.ne.s32.totalorder %s111, %s127
      %p129 = scmp.eq.s32.totalorder %s39, 0
      %p130 = por %p128, %p129
      %s131 = ssub.s32 %s41, %s48
      %p132 = scmp.eq.s32.totalorder %s131, 0
      %s134 = sadd.s32 %s133, 1
      %s135 = scalar_select %p132, %s133, %s134
      %p138 = pneg %p132
      %p139 = scmp.eq.s32.totalorder %s33, 1
      %p140 = por %p138, %p139
      %p141 = scmp.ne.s32.totalorder %s133, %s136
      %p142 = scmp.eq.s32.totalorder %s33, 0
      %p143 = por %p141, %p142
      %p144 = scmp.ne.s32.totalorder %s133, %s136
      %p145 = scmp.eq.s32.totalorder %s38, 1
      %p146 = por %p144, %p145
      %p147 = scmp.ne.s32.totalorder %s136, %s137
      %p148 = scmp.eq.s32.totalorder %s38, 0
      %p149 = por %p147, %p148
      %p150 = scmp.ne.s32.totalorder %s136, %s137
      %p151 = scmp.eq.s32.totalorder %s39, 1
      %p152 = por %p150, %p151
      %p154 = scmp.ne.s32.totalorder %s137, %s153
      %p155 = scmp.eq.s32.totalorder %s39, 0
      %p156 = por %p154, %p155
      %s157 = ssub.s32 %s41, %s48
      %p158 = scmp.eq.s32.totalorder %s157, 0
      %s160 = sadd.s32 %s159, 1
      %s161 = scalar_select %p158, %s159, %s160
      %p164 = pneg %p158
      %p165 = scmp.eq.s32.totalorder %s33, 1
      %p166 = por %p164, %p165
      %p167 = scmp.ne.s32.totalorder %s159, %s162
      %p168 = scmp.eq.s32.totalorder %s33, 0
      %p169 = por %p167, %p168
      %p170 = scmp.ne.s32.totalorder %s159, %s162
      %p171 = scmp.eq.s32.totalorder %s38, 1
      %p172 = por %p170, %p171
      %p173 = scmp.ne.s32.totalorder %s162, %s163
      %p174 = scmp.eq.s32.totalorder %s38, 0
      %p175 = por %p173, %p174
      %p176 = scmp.ne.s32.totalorder %s162, %s163
      %p177 = scmp.eq.s32.totalorder %s39, 1
      %p178 = por %p176, %p177
      %p180 = scmp.ne.s32.totalorder %s163, %s179
      %p181 = scmp.eq.s32.totalorder %s39, 0
      %p182 = por %p180, %p181
      %s183 = ssub.s32 %s41, %s48
      %p184 = scmp.eq.s32.totalorder %s183, 0
      %s186 = sadd.s32 %s185, 1
      %s187 = scalar_select %p184, %s185, %s186
      %p190 = pneg %p184
      %p191 = scmp.eq.s32.totalorder %s33, 1
      %p192 = por %p190, %p191
      %p193 = scmp.ne.s32.totalorder %s185, %s188
      %p194 = scmp.eq.s32.totalorder %s33, 0
      %p195 = por %p193, %p194
      %p196 = scmp.ne.s32.totalorder %s185, %s188
      %p197 = scmp.eq.s32.totalorder %s38, 1
      %p198 = por %p196, %p197
      %p199 = scmp.ne.s32.totalorder %s188, %s189
      %p200 = scmp.eq.s32.totalorder %s38, 0
      %p201 = por %p199, %p200
      %p202 = scmp.ne.s32.totalorder %s188, %s189
      %p203 = scmp.eq.s32.totalorder %s39, 1
      %p204 = por %p202, %p203
      %p206 = scmp.ne.s32.totalorder %s189, %s205
      %p207 = scmp.eq.s32.totalorder %s39, 0
      %p208 = por %p206, %p207
      %s209 = ssub.s32 %s41, %s48
      %p210 = scmp.eq.s32.totalorder %s209, 0
      %s212 = sadd.s32 %s211, 1
      %s213 = scalar_select %p210, %s211, %s212
      %p216 = pneg %p210
      %p217 = scmp.eq.s32.totalorder %s33, 1
      %p218 = por %p216, %p217
      %p219 = scmp.ne.s32.totalorder %s211, %s214
      %p220 = scmp.eq.s32.totalorder %s33, 0
      %p221 = por %p219, %p220
      %p222 = scmp.ne.s32.totalorder %s211, %s214
      %p223 = scmp.eq.s32.totalorder %s38, 1
      %p224 = por %p222, %p223
      %p225 = scmp.ne.s32.totalorder %s214, %s215
      %p226 = scmp.eq.s32.totalorder %s38, 0
      %p227 = por %p225, %p226
      %p228 = scmp.ne.s32.totalorder %s214, %s215
      %p229 = scmp.eq.s32.totalorder %s39, 1
      %p230 = por %p228, %p229
      %p232 = scmp.ne.s32.totalorder %s215, %s231
      %p233 = scmp.eq.s32.totalorder %s39, 0
      %p234 = por %p232, %p233
      %s235 = ssub.s32 %s41, %s48
      %p236 = scmp.eq.s32.totalorder %s235, 0
      %s238 = sadd.s32 %s237, 1
      %s239 = scalar_select %p236, %s237, %s238
      %p242 = pneg %p236
      %p243 = scmp.eq.s32.totalorder %s33, 1
      %p244 = por %p242, %p243
      %p245 = scmp.ne.s32.totalorder %s237, %s240
      %p246 = scmp.eq.s32.totalorder %s33, 0
      %p247 = por %p245, %p246
      %p248 = scmp.ne.s32.totalorder %s237, %s240
      %p249 = scmp.eq.s32.totalorder %s38, 1
      %p250 = por %p248, %p249
      %p251 = scmp.ne.s32.totalorder %s240, %s241
      %p252 = scmp.eq.s32.totalorder %s38, 0
      %p253 = por %p251, %p252
      %p254 = scmp.ne.s32.totalorder %s240, %s241
      %p255 = scmp.eq.s32.totalorder %s39, 1
      %p256 = por %p254, %p255
      %p258 = scmp.ne.s32.totalorder %s241, %s257
      %p259 = scmp.eq.s32.totalorder %s39, 0
      %p260 = por %p258, %p259
      %s261 = ssub.s32 %s41, %s48
      %p262 = scmp.eq.s32.totalorder %s261, 0
      %s264 = sadd.s32 %s263, 1
      %s265 = scalar_select %p262, %s263, %s264
      %p268 = pneg %p262
      %p269 = scmp.eq.s32.totalorder %s33, 1
      %p270 = por %p268, %p269
      %p271 = scmp.ne.s32.totalorder %s263, %s266
      %p272 = scmp.eq.s32.totalorder %s33, 0
      %p273 = por %p271, %p272
      %p274 = scmp.ne.s32.totalorder %s263, %s266
      %p275 = scmp.eq.s32.totalorder %s38, 1
      %p276 = por %p274, %p275
      %p277 = scmp.ne.s32.totalorder %s266, %s267
      %p278 = scmp.eq.s32.totalorder %s38, 0
      %p279 = por %p277, %p278
      %p280 = scmp.ne.s32.totalorder %s266, %s267
      %p281 = scmp.eq.s32.totalorder %s39, 1
      %p282 = por %p280, %p281
      %p284 = scmp.ne.s32.totalorder %s267, %s283
      %p285 = scmp.eq.s32.totalorder %s39, 0
      %p286 = por %p284, %p285
      %s287 = ssub.s32 %s41, %s48
      %p288 = scmp.eq.s32.totalorder %s287, 0
      %s290 = sadd.s32 %s289, 1
      %s291 = scalar_select %p288, %s289, %s290
      %p294 = pneg %p288
      %p295 = scmp.eq.s32.totalorder %s33, 1
      %p296 = por %p294, %p295
      %p297 = scmp.ne.s32.totalorder %s289, %s292
      %p298 = scmp.eq.s32.totalorder %s33, 0
      %p299 = por %p297, %p298
      %p300 = scmp.ne.s32.totalorder %s289, %s292
      %p301 = scmp.eq.s32.totalorder %s38, 1
      %p302 = por %p300, %p301
      %p303 = scmp.ne.s32.totalorder %s292, %s293
      %p304 = scmp.eq.s32.totalorder %s38, 0
      %p305 = por %p303, %p304
      %p306 = scmp.ne.s32.totalorder %s292, %s293
      %p307 = scmp.eq.s32.totalorder %s39, 1
      %p308 = por %p306, %p307
      %p310 = scmp.ne.s32.totalorder %s293, %s309
      %p311 = scmp.eq.s32.totalorder %s39, 0
      %p312 = por %p310, %p311
      %s313 = ssub.s32 %s41, %s48
      %p314 = scmp.eq.s32.totalorder %s313, 0
      %s316 = sadd.s32 %s315, 1
      %s317 = scalar_select %p314, %s315, %s316
      %p320 = pneg %p314
      %p321 = scmp.eq.s32.totalorder %s33, 1
      %p322 = por %p320, %p321
      %p323 = scmp.ne.s32.totalorder %s315, %s318
      %p324 = scmp.eq.s32.totalorder %s33, 0
      %p325 = por %p323, %p324
      %p326 = scmp.ne.s32.totalorder %s315, %s318
      %p327 = scmp.eq.s32.totalorder %s38, 1
      %p328 = por %p326, %p327
      %p329 = scmp.ne.s32.totalorder %s318, %s319
      %p330 = scmp.eq.s32.totalorder %s38, 0
      %p331 = por %p329, %p330
      %p332 = scmp.ne.s32.totalorder %s318, %s319
      %p333 = scmp.eq.s32.totalorder %s39, 1
      %p334 = por %p332, %p333
      %p336 = scmp.ne.s32.totalorder %s319, %s335
      %p337 = scmp.eq.s32.totalorder %s39, 0
      %p338 = por %p336, %p337
      %s339 = ssub.s32 %s41, %s48
      %p340 = scmp.eq.s32.totalorder %s339, 0
      %s342 = sadd.s32 %s341, 1
      %s343 = scalar_select %p340, %s341, %s342
      %p346 = pneg %p340
      %p347 = scmp.eq.s32.totalorder %s33, 1
      %p348 = por %p346, %p347
      %p349 = scmp.ne.s32.totalorder %s341, %s344
      %p350 = scmp.eq.s32.totalorder %s33, 0
      %p351 = por %p349, %p350
      %p352 = scmp.ne.s32.totalorder %s341, %s344
      %p353 = scmp.eq.s32.totalorder %s38, 1
      %p354 = por %p352, %p353
      %p355 = scmp.ne.s32.totalorder %s344, %s345
      %p356 = scmp.eq.s32.totalorder %s38, 0
      %p357 = por %p355, %p356
      %p358 = scmp.ne.s32.totalorder %s344, %s345
      %p359 = scmp.eq.s32.totalorder %s39, 1
      %p360 = por %p358, %p359
      %p362 = scmp.ne.s32.totalorder %s345, %s361
      %p363 = scmp.eq.s32.totalorder %s39, 0
      %p364 = por %p362, %p363
      %s365 = ssub.s32 %s41, %s48
      %p366 = scmp.eq.s32.totalorder %s365, 0
      %s368 = sadd.s32 %s367, 1
      %s369 = scalar_select %p366, %s367, %s368
      %p372 = pneg %p366
      %p373 = scmp.eq.s32.totalorder %s33, 1
      %p374 = por %p372, %p373
      %p375 = scmp.ne.s32.totalorder %s367, %s370
      %p376 = scmp.eq.s32.totalorder %s33, 0
      %p377 = por %p375, %p376
      %p378 = scmp.ne.s32.totalorder %s367, %s370
      %p379 = scmp.eq.s32.totalorder %s38, 1
      %p380 = por %p378, %p379
      %p381 = scmp.ne.s32.totalorder %s370, %s371
      %p382 = scmp.eq.s32.totalorder %s38, 0
      %p383 = por %p381, %p382
      %p384 = scmp.ne.s32.totalorder %s370, %s371
      %p385 = scmp.eq.s32.totalorder %s39, 1
      %p386 = por %p384, %p385
      %p388 = scmp.ne.s32.totalorder %s371, %s387
      %p389 = scmp.eq.s32.totalorder %s39, 0
      %p390 = por %p388, %p389
      %s391 = ssub.s32 %s40, %s52
      %p392 = scmp.eq.s32.totalorder %s391, 0
      %s394 = sadd.s32 %s393, 1
      %s395 = scalar_select %p392, %s393, %s394
      %p398 = pneg %p392
      %p399 = scmp.eq.s32.totalorder %s33, 1
      %p400 = por %p398, %p399
      %p401 = scmp.ne.s32.totalorder %s393, %s396
      %p402 = scmp.eq.s32.totalorder %s33, 0
      %p403 = por %p401, %p402
      %p404 = scmp.ne.s32.totalorder %s393, %s396
      %p405 = scmp.eq.s32.totalorder %s38, 1
      %p406 = por %p404, %p405
      %p407 = scmp.ne.s32.totalorder %s396, %s397
      %p408 = scmp.eq.s32.totalorder %s38, 0
      %p409 = por %p407, %p408
      %p410 = scmp.ne.s32.totalorder %s396, %s397
      %p411 = scmp.eq.s32.totalorder %s39, 1
      %p412 = por %p410, %p411
      %p414 = scmp.ne.s32.totalorder %s397, %s413
      %p415 = scmp.eq.s32.totalorder %s39, 0
      %p416 = por %p414, %p415
      %p417 = scmp.le.s32.totalorder 1, %s33
      %p418 = scmp.lt.s32.totalorder %s33, 3
      %p419 = pnand %p417, %p418
      %p420 = pneg %p419
      // Predicated region
      $region9: #{tpu_custom_call.1} parent=5 // pred_check
        _
      $region10: #{tpu_custom_call.1} parent=5 // pred_check_branch
        %422 = sbr.rel (%p419) target = $region12
      $region11: #{tpu_custom_call.1} parent=5 // pred_region
        %s423 = ssub.s32 %s33, 1
        // Predicated region
        $region13: #{tpu_custom_call.1} parent=11 // pred_check
          %p424 = pneg %p71
        $region14: #{tpu_custom_call.1} parent=11 // pred_check_branch
          %426 = sbr.rel (%p424) target = $region16
        $region15: #{tpu_custom_call.1} parent=11 // pred_region
          %s427 = smul.u32 2, %s42
          %429 = vsyncadd [#allocation5], 0
          %s430 = smul.addr %s427, 4
          %s431 = smul.addr %s430, 8
          %s432 = scalar_lea.hbm %s0, %s431
          %s433 = sshll.u32 %s432, 4
          %s434 = int_to_ptr.hbm [resolvable:$true] %s433
          %s435 = sshll.u32 [#allocation4], 4
          %s436 = int_to_ptr.vmem [resolvable:$true] %s435
          %441 = dma.hbm_to_vmem [thread:$0]  %s434, 1024, %s436, [#allocation5], 128, 128, 8
        $region16: #{tpu_custom_call.1} parent=11 // pred_fallthru
          _
      $region12: #{tpu_custom_call.1} parent=5 // pred_fallthru
        _
      %p442 = scmp.lt.s32.totalorder %s33, 2
      // Predicated region
      $region17: #{tpu_custom_call.1} parent=5 // pred_check
        %p443 = pneg %p442
      $region18: #{tpu_custom_call.1} parent=5 // pred_check_branch
        %445 = sbr.rel (%p443) target = $region20
      $region19: #{tpu_custom_call.1} parent=5 // pred_region
        // Predicated region
        $region21: #{tpu_custom_call.1} parent=19 // pred_check
          %p446 = pneg %p91
        $region22: #{tpu_custom_call.1} parent=19 // pred_check_branch
          %448 = sbr.rel (%p446) target = $region24
        $region23: #{tpu_custom_call.1} parent=19 // pred_region
          %s449 = sand.u32 %s33, 1
          %s450 = scalar_lea.sflag [#allocation8], %s449
          %s451 = sand.u32 %s81, 1
          %s452 = smul.addr %s451, 192
          %s453 = scalar_lea.vmem [#allocation7], %s452
          %455 = vsyncadd %s450, 0
          %s456 = smul.addr %s41, 48
          %s457 = smul.addr %s456, 4
          %s458 = scalar_lea.hbm %s1, %s457
          %s459 = sshll.u32 %s458, 4
          %s460 = int_to_ptr.hbm [resolvable:$true] %s459
          %s461 = sshll.u32 %s453, 4
          %s462 = int_to_ptr.vmem [resolvable:$true] %s461
          %467 = dma.hbm_to_vmem [thread:$0]  %s460, 3072, %s462, %s450, 192, 192, 12
        $region24: #{tpu_custom_call.1} parent=19 // pred_fallthru
          _
        // Predicated region
        $region25: #{tpu_custom_call.1} parent=19 // pred_check
          %p468 = pneg %p117
        $region26: #{tpu_custom_call.1} parent=19 // pred_check_branch
          %470 = sbr.rel (%p468) target = $region28
        $region27: #{tpu_custom_call.1} parent=19 // pred_region
          %s471 = sand.u32 %s33, 1
          %s472 = scalar_lea.sflag [#allocation8], %s471
          %s473 = sand.u32 %s107, 1
          %s474 = smul.addr %s473, 3
          %s475 = scalar_lea.vmem [#allocation9], %s474
          %477 = vsyncadd %s472, 0
          %s478 = smul.addr %s41, 3
          %s479 = scalar_lea.hbm %s2, %s478
          %s481 = sshll.u32 %s479, 4
          %s482 = int_to_ptr.hbm [resolvable:$true] %s481
          %s483 = sshll.u32 %s475, 4
          %s484 = int_to_ptr.vmem [resolvable:$true] %s483
          %486 = dma.hbm_to_vmem [thread:$0]  %s482, 48, %s484, %s472
        $region28: #{tpu_custom_call.1} parent=19 // pred_fallthru
          _
        // Predicated region
        $region29: #{tpu_custom_call.1} parent=19 // pred_check
          %p487 = pneg %p143
        $region30: #{tpu_custom_call.1} parent=19 // pred_check_branch
          %489 = sbr.rel (%p487) target = $region32
        $region31: #{tpu_custom_call.1} parent=19 // pred_region
          %s490 = sand.u32 %s33, 1
          %s491 = scalar_lea.sflag [#allocation11], %s490
          %s492 = sand.u32 %s133, 1
          %s493 = smul.addr %s492, 64
          %s494 = scalar_lea.vmem [#allocation10], %s493
          %496 = vsyncadd %s491, 0
          %s497 = smul.addr %s41, 16
          %s498 = smul.addr %s497, 4
          %s499 = scalar_lea.hbm %s3, %s498
          %s500 = sshll.u32 %s499, 4
          %s501 = int_to_ptr.hbm [resolvable:$true] %s500
          %s502 = sshll.u32 %s494, 4
          %s503 = int_to_ptr.vmem [resolvable:$true] %s502
          %508 = dma.hbm_to_vmem [thread:$0]  %s501, 1024, %s503, %s491, 64, 64, 4
        $region32: #{tpu_custom_call.1} parent=19 // pred_fallthru
          _
        // Predicated region
        $region33: #{tpu_custom_call.1} parent=19 // pred_check
          %p509 = pneg %p169
        $region34: #{tpu_custom_call.1} parent=19 // pred_check_branch
          %511 = sbr.rel (%p509) target = $region36
        $region35: #{tpu_custom_call.1} parent=19 // pred_region
          %p512 = scmp.lt.s32.totalorder %s41, 1
          %s513 = scalar_select %p512, %s41, 1
          %s514 = scalar_lea.vmem %s4, %s513
        $region36: #{tpu_custom_call.1} parent=19 // pred_fallthru
          _
        // Predicated region
        $region37: #{tpu_custom_call.1} parent=19 // pred_check
          %p515 = pneg %p195
        $region38: #{tpu_custom_call.1} parent=19 // pred_check_branch
          %517 = sbr.rel (%p515) target = $region40
        $region39: #{tpu_custom_call.1} parent=19 // pred_region
          %p518 = scmp.lt.s32.totalorder %s41, 1
          %s519 = scalar_select %p518, %s41, 1
          %s520 = scalar_lea.vmem %s5, %s519
        $region40: #{tpu_custom_call.1} parent=19 // pred_fallthru
          _
        // Predicated region
        $region41: #{tpu_custom_call.1} parent=19 // pred_check
          %p521 = pneg %p221
        $region42: #{tpu_custom_call.1} parent=19 // pred_check_branch
          %523 = sbr.rel (%p521) target = $region44
        $region43: #{tpu_custom_call.1} parent=19 // pred_region
          %s524 = sand.u32 %s33, 1
          %s525 = scalar_lea.sflag [#allocation11], %s524
          %s526 = sand.u32 %s211, 1
          %s527 = scalar_lea.vmem [#allocation12], %s526
          %529 = vsyncadd %s525, 0
          %s530 = scalar_lea.hbm %s6, %s41
          %s532 = sshll.u32 %s530, 4
          %s533 = int_to_ptr.hbm [resolvable:$true] %s532
          %s534 = sshll.u32 %s527, 4
          %s535 = int_to_ptr.vmem [resolvable:$true] %s534
          %537 = dma.hbm_to_vmem [thread:$0]  %s533, 16, %s535, %s525
        $region44: #{tpu_custom_call.1} parent=19 // pred_fallthru
          _
        // Predicated region
        $region45: #{tpu_custom_call.1} parent=19 // pred_check
          %p538 = pneg %p247
        $region46: #{tpu_custom_call.1} parent=19 // pred_check_branch
          %540 = sbr.rel (%p538) target = $region48
        $region47: #{tpu_custom_call.1} parent=19 // pred_region
          %p541 = scmp.lt.s32.totalorder %s41, 1
          %s542 = scalar_select %p541, %s41, 1
          %s543 = scalar_lea.vmem %s7, %s542
        $region48: #{tpu_custom_call.1} parent=19 // pred_fallthru
          _
        // Predicated region
        $region49: #{tpu_custom_call.1} parent=19 // pred_check
          %p544 = pneg %p273
        $region50: #{tpu_custom_call.1} parent=19 // pred_check_branch
          %546 = sbr.rel (%p544) target = $region52
        $region51: #{tpu_custom_call.1} parent=19 // pred_region
          %s547 = sand.u32 %s33, 1
          %s548 = scalar_lea.sflag [#allocation14], %s547
          %s549 = sand.u32 %s263, 1
          %s550 = scalar_lea.vmem [#allocation13], %s549
          %552 = vsyncadd %s548, 0
          %s553 = scalar_lea.hbm %s8, %s41
          %s555 = sshll.u32 %s553, 4
          %s556 = int_to_ptr.hbm [resolvable:$true] %s555
          %s557 = sshll.u32 %s550, 4
          %s558 = int_to_ptr.vmem [resolvable:$true] %s557
          %560 = dma.hbm_to_vmem [thread:$0]  %s556, 16, %s558, %s548
        $region52: #{tpu_custom_call.1} parent=19 // pred_fallthru
          _
        // Predicated region
        $region53: #{tpu_custom_call.1} parent=19 // pred_check
          %p561 = pneg %p299
        $region54: #{tpu_custom_call.1} parent=19 // pred_check_branch
          %563 = sbr.rel (%p561) target = $region56
        $region55: #{tpu_custom_call.1} parent=19 // pred_region
          %s564 = sand.u32 %s33, 1
          %s565 = scalar_lea.sflag [#allocation14], %s564
          %s566 = sand.u32 %s289, 1
          %s567 = smul.addr %s566, 64
          %s568 = scalar_lea.vmem [#allocation15], %s567
          %570 = vsyncadd %s565, 0
          %s571 = smul.addr %s41, 16
          %s572 = smul.addr %s571, 4
          %s573 = scalar_lea.hbm %s9, %s572
          %s574 = sshll.u32 %s573, 4
          %s575 = int_to_ptr.hbm [resolvable:$true] %s574
          %s576 = sshll.u32 %s568, 4
          %s577 = int_to_ptr.vmem [resolvable:$true] %s576
          %582 = dma.hbm_to_vmem [thread:$0]  %s575, 1024, %s577, %s565, 64, 64, 4
        $region56: #{tpu_custom_call.1} parent=19 // pred_fallthru
          _
        // Predicated region
        $region57: #{tpu_custom_call.1} parent=19 // pred_check
          %p583 = pneg %p325
        $region58: #{tpu_custom_call.1} parent=19 // pred_check_branch
          %585 = sbr.rel (%p583) target = $region60
        $region59: #{tpu_custom_call.1} parent=19 // pred_region
          %p586 = scmp.lt.s32.totalorder %s41, 1
          %s587 = scalar_select %p586, %s41, 1
          %s588 = scalar_lea.vmem %s10, %s587
        $region60: #{tpu_custom_call.1} parent=19 // pred_fallthru
          _
        // Predicated region
        $region61: #{tpu_custom_call.1} parent=19 // pred_check
          %p589 = pneg %p351
        $region62: #{tpu_custom_call.1} parent=19 // pred_check_branch
          %591 = sbr.rel (%p589) target = $region64
        $region63: #{tpu_custom_call.1} parent=19 // pred_region
          %s592 = sand.u32 %s341, 1
          %s593 = scalar_lea.sflag [#allocation17], %s592
          %s594 = sand.u32 %s341, 1
          %s595 = smul.addr %s594, 64
          %s596 = scalar_lea.vmem [#allocation16], %s595
          %598 = vsyncadd %s593, 0
          %s599 = smul.addr %s41, 16
          %s600 = smul.addr %s599, 4
          %s601 = scalar_lea.hbm %s11, %s600
          %s602 = sshll.u32 %s601, 4
          %s603 = int_to_ptr.hbm [resolvable:$true] %s602
          %s604 = sshll.u32 %s596, 4
          %s605 = int_to_ptr.vmem [resolvable:$true] %s604
          %610 = dma.hbm_to_vmem [thread:$0]  %s603, 1024, %s605, %s593, 64, 64, 4
        $region64: #{tpu_custom_call.1} parent=19 // pred_fallthru
          _
        // Predicated region
        $region65: #{tpu_custom_call.1} parent=19 // pred_check
          %p611 = pneg %p377
        $region66: #{tpu_custom_call.1} parent=19 // pred_check_branch
          %613 = sbr.rel (%p611) target = $region68
        $region67: #{tpu_custom_call.1} parent=19 // pred_region
          %p614 = scmp.lt.s32.totalorder %s41, 1
          %s615 = scalar_select %p614, %s41, 1
          %s616 = scalar_lea.vmem %s12, %s615
        $region68: #{tpu_custom_call.1} parent=19 // pred_fallthru
          _
      $region20: #{tpu_custom_call.1} parent=5 // pred_fallthru
        _
      %p617 = scmp.le.s32.totalorder 1, %s33
      %p618 = scmp.lt.s32.totalorder %s33, 3
      %p619 = pnand %p617, %p618
      %p620 = pneg %p619
      // Predicated region
      $region69: #{tpu_custom_call.1} parent=5 // pred_check
        _
      $region70: #{tpu_custom_call.1} parent=5 // pred_check_branch
        %622 = sbr.rel (%p619) target = $region72
      $region71: #{tpu_custom_call.1} parent=5 // pred_region
        %s623 = ssub.s32 %s33, 1
        // Predicated region
        $region73: #{tpu_custom_call.1} parent=71 // pred_check
          %p624 = pneg %p71
        $region74: #{tpu_custom_call.1} parent=71 // pred_check_branch
          %626 = sbr.rel (%p624) target = $region76
        $region75: #{tpu_custom_call.1} parent=71 // pred_region
          %628 = dma.done [#allocation5], 1024
        $region76: #{tpu_custom_call.1} parent=71 // pred_fallthru
          _
        %s629 = sand.u32 %s38, 1
        %s630 = scalar_lea.sflag [#allocation8], %s629
        %s631 = sand.u32 %s84, 1
        %s632 = smul.addr %s631, 192
        %s633 = scalar_lea.vmem [#allocation7], %s632
        // Predicated region
        $region77: #{tpu_custom_call.1} parent=71 // pred_check
          %p634 = pneg %p97
        $region78: #{tpu_custom_call.1} parent=71 // pred_check_branch
          %636 = sbr.rel (%p634) target = $region80
        $region79: #{tpu_custom_call.1} parent=71 // pred_region
          %638 = dma.done %s630, 3072
        $region80: #{tpu_custom_call.1} parent=71 // pred_fallthru
          _
        %s639 = sand.u32 %s38, 1
        %s640 = scalar_lea.sflag [#allocation8], %s639
        %s641 = sand.u32 %s110, 1
        %s642 = smul.addr %s641, 3
        %s643 = scalar_lea.vmem [#allocation9], %s642
        // Predicated region
        $region81: #{tpu_custom_call.1} parent=71 // pred_check
          %p644 = pneg %p123
        $region82: #{tpu_custom_call.1} parent=71 // pred_check_branch
          %646 = sbr.rel (%p644) target = $region84
        $region83: #{tpu_custom_call.1} parent=71 // pred_region
          %648 = dma.done %s640, 48
        $region84: #{tpu_custom_call.1} parent=71 // pred_fallthru
          _
        %s649 = sand.u32 %s38, 1
        %s650 = scalar_lea.sflag [#allocation11], %s649
        %s651 = sand.u32 %s136, 1
        %s652 = smul.addr %s651, 64
        %s653 = scalar_lea.vmem [#allocation10], %s652
        // Predicated region
        $region85: #{tpu_custom_call.1} parent=71 // pred_check
          %p654 = pneg %p149
        $region86: #{tpu_custom_call.1} parent=71 // pred_check_branch
          %656 = sbr.rel (%p654) target = $region88
        $region87: #{tpu_custom_call.1} parent=71 // pred_region
          %658 = dma.done %s650, 1024
        $region88: #{tpu_custom_call.1} parent=71 // pred_fallthru
          _
        %s659 = sand.u32 %s38, 1
        %s660 = scalar_lea.sflag [#allocation11], %s659
        %s661 = sand.u32 %s214, 1
        %s662 = scalar_lea.vmem [#allocation12], %s661
        // Predicated region
        $region89: #{tpu_custom_call.1} parent=71 // pred_check
          %p663 = pneg %p227
        $region90: #{tpu_custom_call.1} parent=71 // pred_check_branch
          %665 = sbr.rel (%p663) target = $region92
        $region91: #{tpu_custom_call.1} parent=71 // pred_region
          %667 = dma.done %s660, 16
        $region92: #{tpu_custom_call.1} parent=71 // pred_fallthru
          _
        %s668 = sand.u32 %s38, 1
        %s669 = scalar_lea.sflag [#allocation14], %s668
        %s670 = sand.u32 %s266, 1
        %s671 = scalar_lea.vmem [#allocation13], %s670
        // Predicated region
        $region93: #{tpu_custom_call.1} parent=71 // pred_check
          %p672 = pneg %p279
        $region94: #{tpu_custom_call.1} parent=71 // pred_check_branch
          %674 = sbr.rel (%p672) target = $region96
        $region95: #{tpu_custom_call.1} parent=71 // pred_region
          %676 = dma.done %s669, 16
        $region96: #{tpu_custom_call.1} parent=71 // pred_fallthru
          _
        %s677 = sand.u32 %s38, 1
        %s678 = scalar_lea.sflag [#allocation14], %s677
        %s679 = sand.u32 %s292, 1
        %s680 = smul.addr %s679, 64
        %s681 = scalar_lea.vmem [#allocation15], %s680
        // Predicated region
        $region97: #{tpu_custom_call.1} parent=71 // pred_check
          %p682 = pneg %p305
        $region98: #{tpu_custom_call.1} parent=71 // pred_check_branch
          %684 = sbr.rel (%p682) target = $region100
        $region99: #{tpu_custom_call.1} parent=71 // pred_region
          %686 = dma.done %s678, 1024
        $region100: #{tpu_custom_call.1} parent=71 // pred_fallthru
          _
        %s687 = sand.u32 %s344, 1
        %s688 = scalar_lea.sflag [#allocation17], %s687
        %s689 = sand.u32 %s344, 1
        %s690 = smul.addr %s689, 64
        %s691 = scalar_lea.vmem [#allocation16], %s690
        // Predicated region
        $region101: #{tpu_custom_call.1} parent=71 // pred_check
          %p692 = pneg %p357
        $region102: #{tpu_custom_call.1} parent=71 // pred_check_branch
          %694 = sbr.rel (%p692) target = $region104
        $region103: #{tpu_custom_call.1} parent=71 // pred_region
          %696 = dma.done %s688, 1024
        $region104: #{tpu_custom_call.1} parent=71 // pred_fallthru
          _
        %p697 = pneg %p71
        %p698 = pneg %p68
        %s699 = sand.u32 %s38, 1
        %s700 = scalar_lea.sflag [#allocation8], %s699
        %s701 = sand.u32 %s84, 1
        %s702 = smul.addr %s701, 192
        %s703 = scalar_lea.vmem [#allocation7], %s702
        %p704 = pneg %p97
        %p705 = pneg %p94
        %s706 = sand.u32 %s38, 1
        %s707 = scalar_lea.sflag [#allocation8], %s706
        %s708 = sand.u32 %s110, 1
        %s709 = smul.addr %s708, 3
        %s710 = scalar_lea.vmem [#allocation9], %s709
        %p711 = pneg %p123
        %p712 = pneg %p120
        %s713 = sand.u32 %s38, 1
        %s714 = scalar_lea.sflag [#allocation11], %s713
        %s715 = sand.u32 %s136, 1
        %s716 = smul.addr %s715, 64
        %s717 = scalar_lea.vmem [#allocation10], %s716
        %p718 = pneg %p149
        %p719 = pneg %p146
        %p720 = scmp.lt.s32.totalorder %s43, 1
        %s721 = scalar_select %p720, %s43, 1
        %s722 = scalar_lea.vmem %s4, %s721
        %p723 = pneg %p175
        %p724 = pneg %p172
        %p725 = scmp.lt.s32.totalorder %s43, 1
        %s726 = scalar_select %p725, %s43, 1
        %s727 = scalar_lea.vmem %s5, %s726
        %p728 = pneg %p201
        %p729 = pneg %p198
        %s730 = sand.u32 %s38, 1
        %s731 = scalar_lea.sflag [#allocation11], %s730
        %s732 = sand.u32 %s214, 1
        %s733 = scalar_lea.vmem [#allocation12], %s732
        %p734 = pneg %p227
        %p735 = pneg %p224
        %p736 = scmp.lt.s32.totalorder %s43, 1
        %s737 = scalar_select %p736, %s43, 1
        %s738 = scalar_lea.vmem %s7, %s737
        %p739 = pneg %p253
        %p740 = pneg %p250
        %s741 = sand.u32 %s38, 1
        %s742 = scalar_lea.sflag [#allocation14], %s741
        %s743 = sand.u32 %s266, 1
        %s744 = scalar_lea.vmem [#allocation13], %s743
        %p745 = pneg %p279
        %p746 = pneg %p276
        %s747 = sand.u32 %s38, 1
        %s748 = scalar_lea.sflag [#allocation14], %s747
        %s749 = sand.u32 %s292, 1
        %s750 = smul.addr %s749, 64
        %s751 = scalar_lea.vmem [#allocation15], %s750
        %p752 = pneg %p305
        %p753 = pneg %p302
        %p754 = scmp.lt.s32.totalorder %s43, 1
        %s755 = scalar_select %p754, %s43, 1
        %s756 = scalar_lea.vmem %s10, %s755
        %p757 = pneg %p331
        %p758 = pneg %p328
        %s759 = sand.u32 %s344, 1
        %s760 = scalar_lea.sflag [#allocation17], %s759
        %s761 = sand.u32 %s344, 1
        %s762 = smul.addr %s761, 64
        %s763 = scalar_lea.vmem [#allocation16], %s762
        %p764 = pneg %p357
        %p765 = pneg %p354
        %p766 = scmp.lt.s32.totalorder %s43, 1
        %s767 = scalar_select %p766, %s43, 1
        %s768 = scalar_lea.vmem %s12, %s767
        %p769 = pneg %p383
        %p770 = pneg %p380
        %p771 = pneg %p409
        %p772 = pneg %p406
        %s773 = smul.u32 2, %s42
        %p774 = scmp.lt.s32.totalorder %s43, 1
        %s775 = scalar_select %p774, %s43, 1
        %s776 = scalar_lea.vmem %s4, %s775
        %p777 = scmp.lt.s32.totalorder %s43, 1
        %s778 = scalar_select %p777, %s43, 1
        %s779 = scalar_lea.vmem %s5, %s778
        %p780 = scmp.lt.s32.totalorder %s43, 1
        %s781 = scalar_select %p780, %s43, 1
        %s782 = scalar_lea.vmem %s7, %s781
        %p783 = scmp.lt.s32.totalorder %s43, 1
        %s784 = scalar_select %p783, %s43, 1
        %s785 = scalar_lea.vmem %s10, %s784
        %p786 = scmp.lt.s32.totalorder %s43, 1
        %s787 = scalar_select %p786, %s43, 1
        %s788 = scalar_lea.vmem %s12, %s787
        %s789 = smul.u32 2, %s42
        %p791 = scmp.eq.s32.totalorder %s43, 0
        // Predicated region
        $region105: #{tpu_custom_call.1} parent=71 // pred_check
          %p792 = pneg %p791
        $region106: #{tpu_custom_call.1} parent=71 // pred_check_branch
          %794 = sbr.rel (%p792) target = $region108
        $region107: #{tpu_custom_call.1} parent=71 // pred_region
          %v795 = vld [vmem:[#allocation4] sm:$0xff]
          %v796 = vld [vmem:[#allocation4 + $0x8] sm:$0xff]
          %v797 = vld [vmem:[#allocation4 + $0x10] sm:$0xff]
          %v798 = vld [vmem:[#allocation4 + $0x18] sm:$0xff]
          %v799 = vld [vmem:[#allocation4 + $0x20] sm:$0xff]
          %v800 = vld [vmem:[#allocation4 + $0x28] sm:$0xff]
          %v801 = vld [vmem:[#allocation4 + $0x30] sm:$0xff]
          %v802 = vld [vmem:[#allocation4 + $0x38] sm:$0xff]
          %803 = vst [vmem:[#allocation18] sm:$0xff] %v795
          %804 = vst [vmem:[#allocation18 + $0x8] sm:$0xff] %v796
          %805 = vst [vmem:[#allocation18 + $0x10] sm:$0xff] %v797
          %806 = vst [vmem:[#allocation18 + $0x18] sm:$0xff] %v798
          %807 = vst [vmem:[#allocation18 + $0x20] sm:$0xff] %v799
          %808 = vst [vmem:[#allocation18 + $0x28] sm:$0xff] %v800
          %809 = vst [vmem:[#allocation18 + $0x30] sm:$0xff] %v801
          %810 = vst [vmem:[#allocation18 + $0x38] sm:$0xff] %v802
        $region108: #{tpu_custom_call.1} parent=71 // pred_fallthru
          _
        %v811 = vld [vmem:[#allocation18] sm:$0xff]
        %v812 = vld [vmem:[#allocation18 + $0x8] sm:$0xff]
        %v813 = vld [vmem:[#allocation18 + $0x10] sm:$0xff]
        %v814 = vld [vmem:[#allocation18 + $0x18] sm:$0xff]
        %v815 = vld [vmem:[#allocation18 + $0x20] sm:$0xff]
        %v816 = vld [vmem:[#allocation18 + $0x28] sm:$0xff]
        %v817 = vld [vmem:[#allocation18 + $0x30] sm:$0xff]
        %v818 = vld [vmem:[#allocation18 + $0x38] sm:$0xff]
        %v819 = vld [vmem:[%s779] sm:$0x1]
        %v820 = vld [vmem:[%s662] sm:$0x1]
        %821 = vadd.xlane.f32.xlu0 %v811
        %v822 = vpop.xlane.xlu0 %821
        %823 = vadd.xlane.f32.xlu0 %v812
        %v824 = vpop.xlane.xlu0 %823
        %825 = vadd.xlane.f32.xlu0 %v813
        %v826 = vpop.xlane.xlu0 %825
        %827 = vadd.xlane.f32.xlu0 %v814
        %v828 = vpop.xlane.xlu0 %827
        %829 = vadd.xlane.f32.xlu0 %v815
        %v830 = vpop.xlane.xlu0 %829
        %831 = vadd.xlane.f32.xlu0 %v816
        %v832 = vpop.xlane.xlu0 %831
        %833 = vadd.xlane.f32.xlu0 %v817
        %v834 = vpop.xlane.xlu0 %833
        %835 = vadd.xlane.f32.xlu0 %v818
        %v836 = vpop.xlane.xlu0 %835
        %v837 = vrcp.pop 128.0
        %v838 = vmul.f32 128.0, %v837
        %v839 = vsub.f32 1.0, %v838
        %v840 = vmul.f32 %v837, %v839
        %v841 = vadd.f32 %v837, %v840
        %vm842 = vweird.f32 %v837
        %v843 = vsel %vm842, %v837, %v841
        %v844 = vmul.f32 %v822, %v843
        %v845 = vmul.f32 %v824, %v843
        %v846 = vmul.f32 %v826, %v843
        %v847 = vmul.f32 %v828, %v843
        %v848 = vmul.f32 %v830, %v843
        %v849 = vmul.f32 %v832, %v843
        %v850 = vmul.f32 %v834, %v843
        %v851 = vmul.f32 %v836, %v843
        %v852 = vsub.f32 %v811, %v844
        %v853 = vsub.f32 %v812, %v845
        %v854 = vsub.f32 %v813, %v846
        %v855 = vsub.f32 %v814, %v847
        %v856 = vsub.f32 %v815, %v848
        %v857 = vsub.f32 %v816, %v849
        %v858 = vsub.f32 %v817, %v850
        %v859 = vsub.f32 %v818, %v851
        %v860 = vmul.f32 %v852, %v852
        %v861 = vmul.f32 %v853, %v853
        %v862 = vmul.f32 %v854, %v854
        %v863 = vmul.f32 %v855, %v855
        %v864 = vmul.f32 %v856, %v856
        %v865 = vmul.f32 %v857, %v857
        %v866 = vmul.f32 %v858, %v858
        %v867 = vmul.f32 %v859, %v859
        %868 = vadd.xlane.f32.xlu0 %v860
        %v869 = vpop.xlane.xlu0 %868
        %870 = vadd.xlane.f32.xlu0 %v861
        %v871 = vpop.xlane.xlu0 %870
        %872 = vadd.xlane.f32.xlu0 %v862
        %v873 = vpop.xlane.xlu0 %872
        %874 = vadd.xlane.f32.xlu0 %v863
        %v875 = vpop.xlane.xlu0 %874
        %876 = vadd.xlane.f32.xlu0 %v864
        %v877 = vpop.xlane.xlu0 %876
        %878 = vadd.xlane.f32.xlu0 %v865
        %v879 = vpop.xlane.xlu0 %878
        %880 = vadd.xlane.f32.xlu0 %v866
        %v881 = vpop.xlane.xlu0 %880
        %882 = vadd.xlane.f32.xlu0 %v867
        %v883 = vpop.xlane.xlu0 %882
        %v884 = vmul.f32 %v869, %v843
        %v885 = vmul.f32 %v871, %v843
        %v886 = vmul.f32 %v873, %v843
        %v887 = vmul.f32 %v875, %v843
        %v888 = vmul.f32 %v877, %v843
        %v889 = vmul.f32 %v879, %v843
        %v890 = vmul.f32 %v881, %v843
        %v891 = vmul.f32 %v883, %v843
        %v892 = vadd.f32 %v884, 1e-05
        %v893 = vadd.f32 %v885, 1e-05
        %v894 = vadd.f32 %v886, 1e-05
        %v895 = vadd.f32 %v887, 1e-05
        %v896 = vadd.f32 %v888, 1e-05
        %v897 = vadd.f32 %v889, 1e-05
        %v898 = vadd.f32 %v890, 1e-05
        %v899 = vadd.f32 %v891, 1e-05
        %v900 = vrsqrt.pop %v892
        %v901 = vmul.f32 %v900, %v892
        %v902 = vmul.f32 %v901, %v900
        %v903 = vmul.f32 0.5, %v902
        %v904 = vsub.f32 1.5, %v903
        %v905 = vmul.f32 %v900, %v904
        %vm906 = vweird.f32 %v892
        %vm907 = vweird.f32 %v900
        %vm908 = vmor %vm906, %vm907
        %v909 = vsel %vm908, %v900, %v905
        %v910 = vrsqrt.pop %v893
        %v911 = vmul.f32 %v910, %v893
        %v912 = vmul.f32 %v911, %v910
        %v913 = vmul.f32 0.5, %v912
        %v914 = vsub.f32 1.5, %v913
        %v915 = vmul.f32 %v910, %v914
        %vm916 = vweird.f32 %v893
        %vm917 = vweird.f32 %v910
        %vm918 = vmor %vm916, %vm917
        %v919 = vsel %vm918, %v910, %v915
        %v920 = vrsqrt.pop %v894
        %v921 = vmul.f32 %v920, %v894
        %v922 = vmul.f32 %v921, %v920
        %v923 = vmul.f32 0.5, %v922
        %v924 = vsub.f32 1.5, %v923
        %v925 = vmul.f32 %v920, %v924
        %vm926 = vweird.f32 %v894
        %vm927 = vweird.f32 %v920
        %vm928 = vmor %vm926, %vm927
        %v929 = vsel %vm928, %v920, %v925
        %v930 = vrsqrt.pop %v895
        %v931 = vmul.f32 %v930, %v895
        %v932 = vmul.f32 %v931, %v930
        %v933 = vmul.f32 0.5, %v932
        %v934 = vsub.f32 1.5, %v933
        %v935 = vmul.f32 %v930, %v934
        %vm936 = vweird.f32 %v895
        %vm937 = vweird.f32 %v930
        %vm938 = vmor %vm936, %vm937
        %v939 = vsel %vm938, %v930, %v935
        %v940 = vrsqrt.pop %v896
        %v941 = vmul.f32 %v940, %v896
        %v942 = vmul.f32 %v941, %v940
        %v943 = vmul.f32 0.5, %v942
        %v944 = vsub.f32 1.5, %v943
        %v945 = vmul.f32 %v940, %v944
        %vm946 = vweird.f32 %v896
        %vm947 = vweird.f32 %v940
        %vm948 = vmor %vm946, %vm947
        %v949 = vsel %vm948, %v940, %v945
        %v950 = vrsqrt.pop %v897
        %v951 = vmul.f32 %v950, %v897
        %v952 = vmul.f32 %v951, %v950
        %v953 = vmul.f32 0.5, %v952
        %v954 = vsub.f32 1.5, %v953
        %v955 = vmul.f32 %v950, %v954
        %vm956 = vweird.f32 %v897
        %vm957 = vweird.f32 %v950
        %vm958 = vmor %vm956, %vm957
        %v959 = vsel %vm958, %v950, %v955
        %v960 = vrsqrt.pop %v898
        %v961 = vmul.f32 %v960, %v898
        %v962 = vmul.f32 %v961, %v960
        %v963 = vmul.f32 0.5, %v962
        %v964 = vsub.f32 1.5, %v963
        %v965 = vmul.f32 %v960, %v964
        %vm966 = vweird.f32 %v898
        %vm967 = vweird.f32 %v960
        %vm968 = vmor %vm966, %vm967
        %v969 = vsel %vm968, %v960, %v965
        %v970 = vrsqrt.pop %v899
        %v971 = vmul.f32 %v970, %v899
        %v972 = vmul.f32 %v971, %v970
        %v973 = vmul.f32 0.5, %v972
        %v974 = vsub.f32 1.5, %v973
        %v975 = vmul.f32 %v970, %v974
        %vm976 = vweird.f32 %v899
        %vm977 = vweird.f32 %v970
        %vm978 = vmor %vm976, %vm977
        %v979 = vsel %vm978, %v970, %v975
        %v980 = vmul.f32 %v852, %v909
        %v981 = vmul.f32 %v853, %v919
        %v982 = vmul.f32 %v854, %v929
        %v983 = vmul.f32 %v855, %v939
        %v984 = vmul.f32 %v856, %v949
        %v985 = vmul.f32 %v857, %v959
        %v986 = vmul.f32 %v858, %v969
        %v987 = vmul.f32 %v859, %v979
        %v989 = vperm.slane %v819, 0
        %v991 = vmul.f32 %v980, %v989
        %v992 = vmul.f32 %v981, %v989
        %v993 = vmul.f32 %v982, %v989
        %v994 = vmul.f32 %v983, %v989
        %v995 = vmul.f32 %v984, %v989
        %v996 = vmul.f32 %v985, %v989
        %v997 = vmul.f32 %v986, %v989
        %v998 = vmul.f32 %v987, %v989
        %v1000 = vperm.slane %v820, 0
        %v1002 = vadd.f32 %v991, %v1000
        %v1003 = vadd.f32 %v992, %v1000
        %v1004 = vadd.f32 %v993, %v1000
        %v1005 = vadd.f32 %v994, %v1000
        %v1006 = vadd.f32 %v995, %v1000
        %v1007 = vadd.f32 %v996, %v1000
        %v1008 = vadd.f32 %v997, %v1000
        %v1009 = vadd.f32 %v998, %v1000
        %v1010 = vpack.c.bf16 %v1003, %v1002
        %v1011 = vpack.c.bf16 %v1005, %v1004
        %v1012 = vpack.c.bf16 %v1007, %v1006
        %v1013 = vpack.c.bf16 %v1009, %v1008
        %v1014 = vld [vmem:[%s633] sm:$0xff]
        %v1015 = vld [vmem:[%s633 + $0x8] sm:$0xf]
        %v1016 = vld [vmem:[%s633 + $0xc] sm:$0xff]
        %v1017 = vld [vmem:[%s633 + $0x14] sm:$0xf]
        %v1018 = vld [vmem:[%s633 + $0x18] sm:$0xff]
        %v1019 = vld [vmem:[%s633 + $0x20] sm:$0xf]
        %v1020 = vld [vmem:[%s633 + $0x24] sm:$0xff]
        %v1021 = vld [vmem:[%s633 + $0x2c] sm:$0xf]
        %v1022 = vld [vmem:[%s633 + $0x30] sm:$0xff]
        %v1023 = vld [vmem:[%s633 + $0x38] sm:$0xf]
        %v1024 = vld [vmem:[%s633 + $0x3c] sm:$0xff]
        %v1025 = vld [vmem:[%s633 + $0x44] sm:$0xf]
        %v1026 = vld [vmem:[%s633 + $0x48] sm:$0xff]
        %v1027 = vld [vmem:[%s633 + $0x50] sm:$0xf]
        %v1028 = vld [vmem:[%s633 + $0x54] sm:$0xff]
        %v1029 = vld [vmem:[%s633 + $0x5c] sm:$0xf]
        %v1030 = vld [vmem:[%s633 + $0x60] sm:$0xff]
        %v1031 = vld [vmem:[%s633 + $0x68] sm:$0xf]
        %v1032 = vld [vmem:[%s633 + $0x6c] sm:$0xff]
        %v1033 = vld [vmem:[%s633 + $0x74] sm:$0xf]
        %v1034 = vld [vmem:[%s633 + $0x78] sm:$0xff]
        %v1035 = vld [vmem:[%s633 + $0x80] sm:$0xf]
        %v1036 = vld [vmem:[%s633 + $0x84] sm:$0xff]
        %v1037 = vld [vmem:[%s633 + $0x8c] sm:$0xf]
        %v1038 = vld [vmem:[%s633 + $0x90] sm:$0xff]
        %v1039 = vld [vmem:[%s633 + $0x98] sm:$0xf]
        %v1040 = vld [vmem:[%s633 + $0x9c] sm:$0xff]
        %v1041 = vld [vmem:[%s633 + $0xa4] sm:$0xf]
        %v1042 = vld [vmem:[%s633 + $0xa8] sm:$0xff]
        %v1043 = vld [vmem:[%s633 + $0xb0] sm:$0xf]
        %v1044 = vld [vmem:[%s633 + $0xb4] sm:$0xff]
        %v1045 = vld [vmem:[%s633 + $0xbc] sm:$0xf]
        %v1046 = vld [vmem:[%s643] sm:$0x7]
        %v1048 = vperm.slane %v1046, 0
        %v1049 = vperm.slane %v1046, 1
        %v1050 = vperm.slane %v1046, 2
        %v1086 = vunpack.c.l.b16 %v1014
        %v1087 = vunpack.c.h.b16 %v1014
        %v1088 = vunpack.c.l.b16 %v1015
        %v1089 = vunpack.c.l.b16 %v1016
        %v1090 = vunpack.c.h.b16 %v1016
        %v1091 = vunpack.c.l.b16 %v1017
        %v1092 = vunpack.c.l.b16 %v1018
        %v1093 = vunpack.c.h.b16 %v1018
        %v1094 = vunpack.c.l.b16 %v1019
        %v1095 = vunpack.c.l.b16 %v1020
        %v1096 = vunpack.c.h.b16 %v1020
        %v1097 = vunpack.c.l.b16 %v1021
        %v1098 = vunpack.c.l.b16 %v1022
        %v1099 = vunpack.c.h.b16 %v1022
        %v1100 = vunpack.c.l.b16 %v1023
        %v1101 = vunpack.c.l.b16 %v1024
        %v1102 = vunpack.c.h.b16 %v1024
        %v1103 = vunpack.c.l.b16 %v1025
        %v1104 = vunpack.c.l.b16 %v1026
        %v1105 = vunpack.c.h.b16 %v1026
        %v1106 = vunpack.c.l.b16 %v1027
        %v1107 = vunpack.c.l.b16 %v1028
        %v1108 = vunpack.c.h.b16 %v1028
        %v1109 = vunpack.c.l.b16 %v1029
        %v1110 = vunpack.c.l.b16 %v1030
        %v1111 = vunpack.c.h.b16 %v1030
        %v1112 = vunpack.c.l.b16 %v1031
        %v1113 = vunpack.c.l.b16 %v1032
        %v1114 = vunpack.c.h.b16 %v1032
        %v1115 = vunpack.c.l.b16 %v1033
        %v1116 = vunpack.c.l.b16 %v1034
        %v1117 = vunpack.c.h.b16 %v1034
        %v1118 = vunpack.c.l.b16 %v1035
        %v1119 = vunpack.c.l.b16 %v1036
        %v1120 = vunpack.c.h.b16 %v1036
        %v1121 = vunpack.c.l.b16 %v1037
        %v1122 = vunpack.c.l.b16 %v1038
        %v1123 = vunpack.c.h.b16 %v1038
        %v1124 = vunpack.c.l.b16 %v1039
        %v1125 = vunpack.c.l.b16 %v1040
        %v1126 = vunpack.c.h.b16 %v1040
        %v1127 = vunpack.c.l.b16 %v1041
        %v1128 = vunpack.c.l.b16 %v1042
        %v1129 = vunpack.c.h.b16 %v1042
        %v1130 = vunpack.c.l.b16 %v1043
        %v1131 = vunpack.c.l.b16 %v1044
        %v1132 = vunpack.c.h.b16 %v1044
        %v1133 = vunpack.c.l.b16 %v1045
        %v1134 = vpack.c.b16 %v1089, %v1086
        %v1135 = vpack.c.b16 %v1090, %v1087
        %v1136 = vpack.c.b16 %v1091, %v1088
        %v1137 = vpack.c.b16 %v1095, %v1092
        %v1138 = vpack.c.b16 %v1096, %v1093
        %v1139 = vpack.c.b16 %v1097, %v1094
        %v1140 = vpack.c.b16 %v1101, %v1098
        %v1141 = vpack.c.b16 %v1102, %v1099
        %v1142 = vpack.c.b16 %v1103, %v1100
        %v1143 = vpack.c.b16 %v1107, %v1104
        %v1144 = vpack.c.b16 %v1108, %v1105
        %v1145 = vpack.c.b16 %v1109, %v1106
        %v1146 = vpack.c.b16 %v1113, %v1110
        %v1147 = vpack.c.b16 %v1114, %v1111
        %v1148 = vpack.c.b16 %v1115, %v1112
        %v1149 = vpack.c.b16 %v1119, %v1116
        %v1150 = vpack.c.b16 %v1120, %v1117
        %v1151 = vpack.c.b16 %v1121, %v1118
        %v1152 = vpack.c.b16 %v1125, %v1122
        %v1153 = vpack.c.b16 %v1126, %v1123
        %v1154 = vpack.c.b16 %v1127, %v1124
        %v1155 = vpack.c.b16 %v1131, %v1128
        %v1156 = vpack.c.b16 %v1132, %v1129
        %v1157 = vpack.c.b16 %v1133, %v1130
        %1182 = vmatpush.bf16.msra.mxu0 %v1155
        %1183 = vmatpush.bf16.msra.mxu0 %v1152
        %1184 = vmatpush.bf16.msra.mxu0 %v1149
        %1185 = vmatpush.bf16.msra.mxu0 %v1146
        %1186 = vmatpush.bf16.msra.mxu0 %v1143
        %1187 = vmatpush.bf16.msra.mxu0 %v1140
        %1188 = vmatpush.bf16.msra.mxu0 %v1137
        %1189 = vmatpush.bf16.msra.mxu0 %v1134
        %1190 = vmatmul.bf16.gmra.mxu0 %v1010
        %v1191 = vpop.f32.mrf.mxu0
        %v1192 = vadd.f32 %v1048, %v1191
        %v1193 = vpop.f32.mrf.mxu0
        %v1194 = vadd.f32 %v1048, %v1193
        %1195 = vmatmul.bf16.gmra.mxu0 %v1011
        %v1196 = vpop.f32.mrf.mxu0
        %v1197 = vadd.f32 %v1048, %v1196
        %v1198 = vpop.f32.mrf.mxu0
        %v1199 = vadd.f32 %v1048, %v1198
        %1200 = vmatmul.bf16.gmra.mxu0 %v1012
        %v1201 = vpop.f32.mrf.mxu0
        %v1202 = vadd.f32 %v1048, %v1201
        %v1203 = vpop.f32.mrf.mxu0
        %v1204 = vadd.f32 %v1048, %v1203
        %1205 = vmatmul.bf16.gmra.mxu0 %v1013
        %v1206 = vpop.f32.mrf.mxu0
        %v1207 = vadd.f32 %v1048, %v1206
        %v1208 = vpop.f32.mrf.mxu0
        %v1209 = vadd.f32 %v1048, %v1208
        %1210 = vdwg.mxu0
        %1211 = vmatpush.bf16.msra.mxu0 %v1156
        %1212 = vmatpush.bf16.msra.mxu0 %v1153
        %1213 = vmatpush.bf16.msra.mxu0 %v1150
        %1214 = vmatpush.bf16.msra.mxu0 %v1147
        %1215 = vmatpush.bf16.msra.mxu0 %v1144
        %1216 = vmatpush.bf16.msra.mxu0 %v1141
        %1217 = vmatpush.bf16.msra.mxu0 %v1138
        %1218 = vmatpush.bf16.msra.mxu0 %v1135
        %1219 = vmatmul.bf16.gmra.mxu0 %v1010
        %v1220 = vpop.f32.mrf.mxu0
        %v1221 = vadd.f32 %v1049, %v1220
        %v1222 = vpop.f32.mrf.mxu0
        %v1223 = vadd.f32 %v1049, %v1222
        %1224 = vmatmul.bf16.gmra.mxu0 %v1011
        %v1225 = vpop.f32.mrf.mxu0
        %v1226 = vadd.f32 %v1049, %v1225
        %v1227 = vpop.f32.mrf.mxu0
        %v1228 = vadd.f32 %v1049, %v1227
        %1229 = vmatmul.bf16.gmra.mxu0 %v1012
        %v1230 = vpop.f32.mrf.mxu0
        %v1231 = vadd.f32 %v1049, %v1230
        %v1232 = vpop.f32.mrf.mxu0
        %v1233 = vadd.f32 %v1049, %v1232
        %1234 = vmatmul.bf16.gmra.mxu0 %v1013
        %v1235 = vpop.f32.mrf.mxu0
        %v1236 = vadd.f32 %v1049, %v1235
        %v1237 = vpop.f32.mrf.mxu0
        %v1238 = vadd.f32 %v1049, %v1237
        %1239 = vdwg.mxu0
        %1240 = vmatpush.bf16.msra.mxu0 %v1157
        %1241 = vmatpush.bf16.msra.mxu0 %v1154
        %1242 = vmatpush.bf16.msra.mxu0 %v1151
        %1243 = vmatpush.bf16.msra.mxu0 %v1148
        %1244 = vmatpush.bf16.msra.mxu0 %v1145
        %1245 = vmatpush.bf16.msra.mxu0 %v1142
        %1246 = vmatpush.bf16.msra.mxu0 %v1139
        %1247 = vmatpush.bf16.msra.mxu0 %v1136
        %1248 = vmatmul.bf16.gmra.mxu0 %v1010
        %v1249 = vpop.f32.mrf.mxu0
        %v1250 = vadd.f32 %v1050, %v1249
        %v1251 = vpop.f32.mrf.mxu0
        %v1252 = vadd.f32 %v1050, %v1251
        %1253 = vmatmul.bf16.gmra.mxu0 %v1011
        %v1254 = vpop.f32.mrf.mxu0
        %v1255 = vadd.f32 %v1050, %v1254
        %v1256 = vpop.f32.mrf.mxu0
        %v1257 = vadd.f32 %v1050, %v1256
        %1258 = vmatmul.bf16.gmra.mxu0 %v1012
        %v1259 = vpop.f32.mrf.mxu0
        %v1260 = vadd.f32 %v1050, %v1259
        %v1261 = vpop.f32.mrf.mxu0
        %v1262 = vadd.f32 %v1050, %v1261
        %1263 = vmatmul.bf16.gmra.mxu0 %v1013
        %v1264 = vpop.f32.mrf.mxu0
        %v1265 = vadd.f32 %v1050, %v1264
        %v1266 = vpop.f32.mrf.mxu0
        %v1267 = vadd.f32 %v1050, %v1266
        %1268 = vdwg.mxu0
        %v1269 = vpack.c.bf16 %v1221, %v1192
        %v1270 = vpack.c.bf16 %v1250, %v1250
        %v1271 = vpack.c.bf16 %v1223, %v1194
        %v1272 = vpack.c.bf16 %v1252, %v1252
        %v1273 = vpack.c.bf16 %v1226, %v1197
        %v1274 = vpack.c.bf16 %v1255, %v1255
        %v1275 = vpack.c.bf16 %v1228, %v1199
        %v1276 = vpack.c.bf16 %v1257, %v1257
        %v1277 = vpack.c.bf16 %v1231, %v1202
        %v1278 = vpack.c.bf16 %v1260, %v1260
        %v1279 = vpack.c.bf16 %v1233, %v1204
        %v1280 = vpack.c.bf16 %v1262, %v1262
        %v1281 = vpack.c.bf16 %v1236, %v1207
        %v1282 = vpack.c.bf16 %v1265, %v1265
        %v1283 = vpack.c.bf16 %v1238, %v1209
        %v1284 = vpack.c.bf16 %v1267, %v1267
        %1293 = vrot.lane.b32.xlu0 %v1269, 96
        %v1294 = vpop.permute.xlu0 %1293
        %1295 = vrot.lane.b32.xlu0 %v1271, 96
        %v1296 = vpop.permute.xlu0 %1295
        %1297 = vrot.lane.b32.xlu0 %v1273, 96
        %v1298 = vpop.permute.xlu0 %1297
        %1299 = vrot.lane.b32.xlu0 %v1275, 96
        %v1300 = vpop.permute.xlu0 %1299
        %1301 = vrot.lane.b32.xlu0 %v1277, 96
        %v1302 = vpop.permute.xlu0 %1301
        %1303 = vrot.lane.b32.xlu0 %v1279, 96
        %v1304 = vpop.permute.xlu0 %1303
        %1305 = vrot.lane.b32.xlu0 %v1281, 96
        %v1306 = vpop.permute.xlu0 %1305
        %1307 = vrot.lane.b32.xlu0 %v1283, 96
        %v1308 = vpop.permute.xlu0 %1307
        %1309 = vrot.lane.b32.xlu0 %v1269, 64
        %v1310 = vpop.permute.xlu0 %1309
        %1311 = vrot.lane.b32.xlu0 %v1271, 64
        %v1312 = vpop.permute.xlu0 %1311
        %1313 = vrot.lane.b32.xlu0 %v1273, 64
        %v1314 = vpop.permute.xlu0 %1313
        %1315 = vrot.lane.b32.xlu0 %v1275, 64
        %v1316 = vpop.permute.xlu0 %1315
        %1317 = vrot.lane.b32.xlu0 %v1277, 64
        %v1318 = vpop.permute.xlu0 %1317
        %1319 = vrot.lane.b32.xlu0 %v1279, 64
        %v1320 = vpop.permute.xlu0 %1319
        %1321 = vrot.lane.b32.xlu0 %v1281, 64
        %v1322 = vpop.permute.xlu0 %1321
        %1323 = vrot.lane.b32.xlu0 %v1283, 64
        %v1324 = vpop.permute.xlu0 %1323
        %1325 = vrot.lane.b32.xlu0 %v1269, 32
        %v1326 = vpop.permute.xlu0 %1325
        %1327 = vrot.lane.b32.xlu0 %v1271, 32
        %v1328 = vpop.permute.xlu0 %1327
        %1329 = vrot.lane.b32.xlu0 %v1273, 32
        %v1330 = vpop.permute.xlu0 %1329
        %1331 = vrot.lane.b32.xlu0 %v1275, 32
        %v1332 = vpop.permute.xlu0 %1331
        %1333 = vrot.lane.b32.xlu0 %v1277, 32
        %v1334 = vpop.permute.xlu0 %1333
        %1335 = vrot.lane.b32.xlu0 %v1279, 32
        %v1336 = vpop.permute.xlu0 %1335
        %1337 = vrot.lane.b32.xlu0 %v1281, 32
        %v1338 = vpop.permute.xlu0 %1337
        %1339 = vrot.lane.b32.xlu0 %v1283, 32
        %v1340 = vpop.permute.xlu0 %1339
        %v1341 = vrot.slane %v1269, 4
        %v1342 = vrot.slane %v1271, 4
        %v1343 = vrot.slane %v1273, 4
        %v1344 = vrot.slane %v1275, 4
        %v1345 = vrot.slane %v1277, 4
        %v1346 = vrot.slane %v1279, 4
        %v1347 = vrot.slane %v1281, 4
        %v1348 = vrot.slane %v1283, 4
        %v1357 = vrot.slane %v1294, 4
        %v1358 = vrot.slane %v1296, 4
        %v1359 = vrot.slane %v1298, 4
        %v1360 = vrot.slane %v1300, 4
        %v1361 = vrot.slane %v1302, 4
        %v1362 = vrot.slane %v1304, 4
        %v1363 = vrot.slane %v1306, 4
        %v1364 = vrot.slane %v1308, 4
        %v1373 = vrot.slane %v1310, 4
        %v1374 = vrot.slane %v1312, 4
        %v1375 = vrot.slane %v1314, 4
        %v1376 = vrot.slane %v1316, 4
        %v1377 = vrot.slane %v1318, 4
        %v1378 = vrot.slane %v1320, 4
        %v1379 = vrot.slane %v1322, 4
        %v1380 = vrot.slane %v1324, 4
        %v1389 = vrot.slane %v1326, 4
        %v1390 = vrot.slane %v1328, 4
        %v1391 = vrot.slane %v1330, 4
        %v1392 = vrot.slane %v1332, 4
        %v1393 = vrot.slane %v1334, 4
        %v1394 = vrot.slane %v1336, 4
        %v1395 = vrot.slane %v1338, 4
        %v1396 = vrot.slane %v1340, 4
        %vm1405 = vcmask 257024
        %1406 = vst.msk [vmem:[#allocation2] sm:$0xf] %vm1405, %v1341
        %1407 = vst.msk [vmem:[#allocation2 + $0x4] sm:$0xf] %vm1405, %v1342
        %1408 = vst.msk [vmem:[#allocation2 + $0x8] sm:$0xf] %vm1405, %v1343
        %1409 = vst.msk [vmem:[#allocation2 + $0xc] sm:$0xf] %vm1405, %v1344
        %1410 = vst.msk [vmem:[#allocation2 + $0x10] sm:$0xf] %vm1405, %v1345
        %1411 = vst.msk [vmem:[#allocation2 + $0x14] sm:$0xf] %vm1405, %v1346
        %1412 = vst.msk [vmem:[#allocation2 + $0x18] sm:$0xf] %vm1405, %v1347
        %1413 = vst.msk [vmem:[#allocation2 + $0x1c] sm:$0xf] %vm1405, %v1348
        %1414 = vst.msk [vmem:[#allocation2 + $0x20] sm:$0xf] %vm1405, %v1357
        %1415 = vst.msk [vmem:[#allocation2 + $0x24] sm:$0xf] %vm1405, %v1358
        %1416 = vst.msk [vmem:[#allocation2 + $0x28] sm:$0xf] %vm1405, %v1359
        %1417 = vst.msk [vmem:[#allocation2 + $0x2c] sm:$0xf] %vm1405, %v1360
        %1418 = vst.msk [vmem:[#allocation2 + $0x30] sm:$0xf] %vm1405, %v1361
        %1419 = vst.msk [vmem:[#allocation2 + $0x34] sm:$0xf] %vm1405, %v1362
        %1420 = vst.msk [vmem:[#allocation2 + $0x38] sm:$0xf] %vm1405, %v1363
        %1421 = vst.msk [vmem:[#allocation2 + $0x3c] sm:$0xf] %vm1405, %v1364
        %1422 = vst.msk [vmem:[#allocation2 + $0x40] sm:$0xf] %vm1405, %v1373
        %1423 = vst.msk [vmem:[#allocation2 + $0x44] sm:$0xf] %vm1405, %v1374
        %1424 = vst.msk [vmem:[#allocation2 + $0x48] sm:$0xf] %vm1405, %v1375
        %1425 = vst.msk [vmem:[#allocation2 + $0x4c] sm:$0xf] %vm1405, %v1376
        %1426 = vst.msk [vmem:[#allocation2 + $0x50] sm:$0xf] %vm1405, %v1377
        %1427 = vst.msk [vmem:[#allocation2 + $0x54] sm:$0xf] %vm1405, %v1378
        %1428 = vst.msk [vmem:[#allocation2 + $0x58] sm:$0xf] %vm1405, %v1379
        %1429 = vst.msk [vmem:[#allocation2 + $0x5c] sm:$0xf] %vm1405, %v1380
        %1430 = vst.msk [vmem:[#allocation2 + $0x60] sm:$0xf] %vm1405, %v1389
        %1431 = vst.msk [vmem:[#allocation2 + $0x64] sm:$0xf] %vm1405, %v1390
        %1432 = vst.msk [vmem:[#allocation2 + $0x68] sm:$0xf] %vm1405, %v1391
        %1433 = vst.msk [vmem:[#allocation2 + $0x6c] sm:$0xf] %vm1405, %v1392
        %1434 = vst.msk [vmem:[#allocation2 + $0x70] sm:$0xf] %vm1405, %v1393
        %1435 = vst.msk [vmem:[#allocation2 + $0x74] sm:$0xf] %vm1405, %v1394
        %1436 = vst.msk [vmem:[#allocation2 + $0x78] sm:$0xf] %vm1405, %v1395
        %1437 = vst.msk [vmem:[#allocation2 + $0x7c] sm:$0xf] %vm1405, %v1396
        %1446 = vrot.lane.b32.xlu0 %v1270, 96
        %v1447 = vpop.permute.xlu0 %1446
        %1448 = vrot.lane.b32.xlu0 %v1272, 96
        %v1449 = vpop.permute.xlu0 %1448
        %1450 = vrot.lane.b32.xlu0 %v1274, 96
        %v1451 = vpop.permute.xlu0 %1450
        %1452 = vrot.lane.b32.xlu0 %v1276, 96
        %v1453 = vpop.permute.xlu0 %1452
        %1454 = vrot.lane.b32.xlu0 %v1278, 96
        %v1455 = vpop.permute.xlu0 %1454
        %1456 = vrot.lane.b32.xlu0 %v1280, 96
        %v1457 = vpop.permute.xlu0 %1456
        %1458 = vrot.lane.b32.xlu0 %v1282, 96
        %v1459 = vpop.permute.xlu0 %1458
        %1460 = vrot.lane.b32.xlu0 %v1284, 96
        %v1461 = vpop.permute.xlu0 %1460
        %1470 = vrot.lane.b32.xlu0 %v1270, 64
        %v1471 = vpop.permute.xlu0 %1470
        %1472 = vrot.lane.b32.xlu0 %v1272, 64
        %v1473 = vpop.permute.xlu0 %1472
        %1474 = vrot.lane.b32.xlu0 %v1274, 64
        %v1475 = vpop.permute.xlu0 %1474
        %1476 = vrot.lane.b32.xlu0 %v1276, 64
        %v1477 = vpop.permute.xlu0 %1476
        %1478 = vrot.lane.b32.xlu0 %v1278, 64
        %v1479 = vpop.permute.xlu0 %1478
        %1480 = vrot.lane.b32.xlu0 %v1280, 64
        %v1481 = vpop.permute.xlu0 %1480
        %1482 = vrot.lane.b32.xlu0 %v1282, 64
        %v1483 = vpop.permute.xlu0 %1482
        %1484 = vrot.lane.b32.xlu0 %v1284, 64
        %v1485 = vpop.permute.xlu0 %1484
        %1494 = vrot.lane.b32.xlu0 %v1270, 32
        %v1495 = vpop.permute.xlu0 %1494
        %1496 = vrot.lane.b32.xlu0 %v1272, 32
        %v1497 = vpop.permute.xlu0 %1496
        %1498 = vrot.lane.b32.xlu0 %v1274, 32
        %v1499 = vpop.permute.xlu0 %1498
        %1500 = vrot.lane.b32.xlu0 %v1276, 32
        %v1501 = vpop.permute.xlu0 %1500
        %1502 = vrot.lane.b32.xlu0 %v1278, 32
        %v1503 = vpop.permute.xlu0 %1502
        %1504 = vrot.lane.b32.xlu0 %v1280, 32
        %v1505 = vpop.permute.xlu0 %1504
        %1506 = vrot.lane.b32.xlu0 %v1282, 32
        %v1507 = vpop.permute.xlu0 %1506
        %1508 = vrot.lane.b32.xlu0 %v1284, 32
        %v1509 = vpop.permute.xlu0 %1508
        %1518 = vst.msk [vmem:[#allocation3] sm:$0xf] %vm1405, %v1270
        %1519 = vst.msk [vmem:[#allocation3 + $0x4] sm:$0xf] %vm1405, %v1272
        %1520 = vst.msk [vmem:[#allocation3 + $0x8] sm:$0xf] %vm1405, %v1274
        %1521 = vst.msk [vmem:[#allocation3 + $0xc] sm:$0xf] %vm1405, %v1276
        %1522 = vst.msk [vmem:[#allocation3 + $0x10] sm:$0xf] %vm1405, %v1278
        %1523 = vst.msk [vmem:[#allocation3 + $0x14] sm:$0xf] %vm1405, %v1280
        %1524 = vst.msk [vmem:[#allocation3 + $0x18] sm:$0xf] %vm1405, %v1282
        %1525 = vst.msk [vmem:[#allocation3 + $0x1c] sm:$0xf] %vm1405, %v1284
        %1526 = vst.msk [vmem:[#allocation3 + $0x20] sm:$0xf] %vm1405, %v1447
        %1527 = vst.msk [vmem:[#allocation3 + $0x24] sm:$0xf] %vm1405, %v1449
        %1528 = vst.msk [vmem:[#allocation3 + $0x28] sm:$0xf] %vm1405, %v1451
        %1529 = vst.msk [vmem:[#allocation3 + $0x2c] sm:$0xf] %vm1405, %v1453
        %1530 = vst.msk [vmem:[#allocation3 + $0x30] sm:$0xf] %vm1405, %v1455
        %1531 = vst.msk [vmem:[#allocation3 + $0x34] sm:$0xf] %vm1405, %v1457
        %1532 = vst.msk [vmem:[#allocation3 + $0x38] sm:$0xf] %vm1405, %v1459
        %1533 = vst.msk [vmem:[#allocation3 + $0x3c] sm:$0xf] %vm1405, %v1461
        %1534 = vst.msk [vmem:[#allocation3 + $0x40] sm:$0xf] %vm1405, %v1471
        %1535 = vst.msk [vmem:[#allocation3 + $0x44] sm:$0xf] %vm1405, %v1473
        %1536 = vst.msk [vmem:[#allocation3 + $0x48] sm:$0xf] %vm1405, %v1475
        %1537 = vst.msk [vmem:[#allocation3 + $0x4c] sm:$0xf] %vm1405, %v1477
        %1538 = vst.msk [vmem:[#allocation3 + $0x50] sm:$0xf] %vm1405, %v1479
        %1539 = vst.msk [vmem:[#allocation3 + $0x54] sm:$0xf] %vm1405, %v1481
        %1540 = vst.msk [vmem:[#allocation3 + $0x58] sm:$0xf] %vm1405, %v1483
        %1541 = vst.msk [vmem:[#allocation3 + $0x5c] sm:$0xf] %vm1405, %v1485
        %1542 = vst.msk [vmem:[#allocation3 + $0x60] sm:$0xf] %vm1405, %v1495
        %1543 = vst.msk [vmem:[#allocation3 + $0x64] sm:$0xf] %vm1405, %v1497
        %1544 = vst.msk [vmem:[#allocation3 + $0x68] sm:$0xf] %vm1405, %v1499
        %1545 = vst.msk [vmem:[#allocation3 + $0x6c] sm:$0xf] %vm1405, %v1501
        %1546 = vst.msk [vmem:[#allocation3 + $0x70] sm:$0xf] %vm1405, %v1503
        %1547 = vst.msk [vmem:[#allocation3 + $0x74] sm:$0xf] %vm1405, %v1505
        %1548 = vst.msk [vmem:[#allocation3 + $0x78] sm:$0xf] %vm1405, %v1507
        %1549 = vst.msk [vmem:[#allocation3 + $0x7c] sm:$0xf] %vm1405, %v1509
        %v1550 = vlaneseq
        %v1551 = vshrl.u32 %v1550, 7
        %v1552 = vadd.s32 %v1551, 8
        %v1553 = vadd.s32 %v1551, 16
        %v1554 = vadd.s32 %v1551, 24
        %v1555 = vlaneseq
        %v1556 = vand.u32 %v1555, 127
        %v1557 = vld [vmem:[#allocation2] sm:$0xf]
        %v1558 = vld [vmem:[#allocation2 + $0x4] sm:$0xf]
        %v1559 = vld [vmem:[#allocation2 + $0x8] sm:$0xf]
        %v1560 = vld [vmem:[#allocation2 + $0xc] sm:$0xf]
        %v1561 = vld [vmem:[#allocation2 + $0x10] sm:$0xf]
        %v1562 = vld [vmem:[#allocation2 + $0x14] sm:$0xf]
        %v1563 = vld [vmem:[#allocation2 + $0x18] sm:$0xf]
        %v1564 = vld [vmem:[#allocation2 + $0x1c] sm:$0xf]
        %v1565 = vld [vmem:[#allocation2 + $0x20] sm:$0xf]
        %v1566 = vld [vmem:[#allocation2 + $0x24] sm:$0xf]
        %v1567 = vld [vmem:[#allocation2 + $0x28] sm:$0xf]
        %v1568 = vld [vmem:[#allocation2 + $0x2c] sm:$0xf]
        %v1569 = vld [vmem:[#allocation2 + $0x30] sm:$0xf]
        %v1570 = vld [vmem:[#allocation2 + $0x34] sm:$0xf]
        %v1571 = vld [vmem:[#allocation2 + $0x38] sm:$0xf]
        %v1572 = vld [vmem:[#allocation2 + $0x3c] sm:$0xf]
        %v1573 = vld [vmem:[#allocation2 + $0x40] sm:$0xf]
        %v1574 = vld [vmem:[#allocation2 + $0x44] sm:$0xf]
        %v1575 = vld [vmem:[#allocation2 + $0x48] sm:$0xf]
        %v1576 = vld [vmem:[#allocation2 + $0x4c] sm:$0xf]
        %v1577 = vld [vmem:[#allocation2 + $0x50] sm:$0xf]
        %v1578 = vld [vmem:[#allocation2 + $0x54] sm:$0xf]
        %v1579 = vld [vmem:[#allocation2 + $0x58] sm:$0xf]
        %v1580 = vld [vmem:[#allocation2 + $0x5c] sm:$0xf]
        %v1581 = vld [vmem:[#allocation2 + $0x60] sm:$0xf]
        %v1582 = vld [vmem:[#allocation2 + $0x64] sm:$0xf]
        %v1583 = vld [vmem:[#allocation2 + $0x68] sm:$0xf]
        %v1584 = vld [vmem:[#allocation2 + $0x6c] sm:$0xf]
        %v1585 = vld [vmem:[#allocation2 + $0x70] sm:$0xf]
        %v1586 = vld [vmem:[#allocation2 + $0x74] sm:$0xf]
        %v1587 = vld [vmem:[#allocation2 + $0x78] sm:$0xf]
        %v1588 = vld [vmem:[#allocation2 + $0x7c] sm:$0xf]
        %v1589 = vld [vmem:[#allocation3] sm:$0xf]
        %v1590 = vld [vmem:[#allocation3 + $0x4] sm:$0xf]
        %v1591 = vld [vmem:[#allocation3 + $0x8] sm:$0xf]
        %v1592 = vld [vmem:[#allocation3 + $0xc] sm:$0xf]
        %v1593 = vld [vmem:[#allocation3 + $0x10] sm:$0xf]
        %v1594 = vld [vmem:[#allocation3 + $0x14] sm:$0xf]
        %v1595 = vld [vmem:[#allocation3 + $0x18] sm:$0xf]
        %v1596 = vld [vmem:[#allocation3 + $0x1c] sm:$0xf]
        %v1597 = vld [vmem:[#allocation3 + $0x20] sm:$0xf]
        %v1598 = vld [vmem:[#allocation3 + $0x24] sm:$0xf]
        %v1599 = vld [vmem:[#allocation3 + $0x28] sm:$0xf]
        %v1600 = vld [vmem:[#allocation3 + $0x2c] sm:$0xf]
        %v1601 = vld [vmem:[#allocation3 + $0x30] sm:$0xf]
        %v1602 = vld [vmem:[#allocation3 + $0x34] sm:$0xf]
        %v1603 = vld [vmem:[#allocation3 + $0x38] sm:$0xf]
        %v1604 = vld [vmem:[#allocation3 + $0x3c] sm:$0xf]
        %v1605 = vld [vmem:[#allocation3 + $0x40] sm:$0xf]
        %v1606 = vld [vmem:[#allocation3 + $0x44] sm:$0xf]
        %v1607 = vld [vmem:[#allocation3 + $0x48] sm:$0xf]
        %v1608 = vld [vmem:[#allocation3 + $0x4c] sm:$0xf]
        %v1609 = vld [vmem:[#allocation3 + $0x50] sm:$0xf]
        %v1610 = vld [vmem:[#allocation3 + $0x54] sm:$0xf]
        %v1611 = vld [vmem:[#allocation3 + $0x58] sm:$0xf]
        %v1612 = vld [vmem:[#allocation3 + $0x5c] sm:$0xf]
        %v1613 = vld [vmem:[#allocation3 + $0x60] sm:$0xf]
        %v1614 = vld [vmem:[#allocation3 + $0x64] sm:$0xf]
        %v1615 = vld [vmem:[#allocation3 + $0x68] sm:$0xf]
        %v1616 = vld [vmem:[#allocation3 + $0x6c] sm:$0xf]
        %v1617 = vld [vmem:[#allocation3 + $0x70] sm:$0xf]
        %v1618 = vld [vmem:[#allocation3 + $0x74] sm:$0xf]
        %v1619 = vld [vmem:[#allocation3 + $0x78] sm:$0xf]
        %v1620 = vld [vmem:[#allocation3 + $0x7c] sm:$0xf]
        %v1621 = vunpack.c.l.b16 %v1269
        %v1622 = vunpack.c.l.b16 %v1271
        %v1623 = vunpack.c.l.b16 %v1273
        %v1624 = vunpack.c.l.b16 %v1275
        %v1625 = vpack.c.b16 %v1622, %v1621
        %v1626 = vpack.c.b16 %v1624, %v1623
        %v1631 = vunpack.c.l.b16 %v1557
        %v1632 = vunpack.c.l.b16 %v1558
        %v1633 = vunpack.c.l.b16 %v1559
        %v1634 = vunpack.c.l.b16 %v1560
        %v1635 = vpack.c.b16 %v1632, %v1631
        %v1636 = vpack.c.b16 %v1634, %v1633
        %vm1637 = vcmask 261120
        %v1639 = vsel %vm1637, %v1625, 0
        %v1642 = vsel %vm1637, %v1626, 0
        %v1645 = vsel %vm1637, %v1635, 0
        %v1648 = vsel %vm1637, %v1636, 0
        %1650 = vmatpush.bf16.xpose.msra.mxu0 0
        %1651 = vmatpush.bf16.xpose.msra.mxu0 0
        %1652 = vmatpush.bf16.xpose.msra.mxu0 0
        %1653 = vmatpush.bf16.xpose.msra.mxu0 0
        %1654 = vmatpush.bf16.xpose.msra.mxu0 0
        %1655 = vmatpush.bf16.xpose.msra.mxu0 0
        %1656 = vmatpush.bf16.xpose.msra.mxu0 %v1648
        %1657 = vmatpush.bf16.xpose.msra.mxu0 %v1645
        %1658 = vmatmul.bf16.gmra.mxu0 %v1639
        %v1659 = vpop.f32.mrf.mxu0
        %v1660 = vadd.f32 0.0, %v1659
        %v1661 = vpop.f32.mrf.mxu0
        %v1662 = vadd.f32 0.0, %v1661
        %1663 = vmatmul.bf16.gmra.mxu0 %v1642
        %v1664 = vpop.f32.mrf.mxu0
        %v1665 = vadd.f32 0.0, %v1664
        %v1666 = vpop.f32.mrf.mxu0
        %v1667 = vadd.f32 0.0, %v1666
        %1668 = vdwg.mxu0
        %v1669 = vunpack.c.l.b16 %v1277
        %v1670 = vunpack.c.l.b16 %v1279
        %v1671 = vunpack.c.l.b16 %v1281
        %v1672 = vunpack.c.l.b16 %v1283
        %v1673 = vpack.c.b16 %v1670, %v1669
        %v1674 = vpack.c.b16 %v1672, %v1671
        %v1679 = vunpack.c.l.b16 %v1561
        %v1680 = vunpack.c.l.b16 %v1562
        %v1681 = vunpack.c.l.b16 %v1563
        %v1682 = vunpack.c.l.b16 %v1564
        %v1683 = vpack.c.b16 %v1680, %v1679
        %v1684 = vpack.c.b16 %v1682, %v1681
        %v1686 = vsel %vm1637, %v1673, 0
        %v1689 = vsel %vm1637, %v1674, 0
        %v1692 = vsel %vm1637, %v1683, 0
        %v1695 = vsel %vm1637, %v1684, 0
        %1697 = vmatpush.bf16.xpose.msra.mxu0 0
        %1698 = vmatpush.bf16.xpose.msra.mxu0 0
        %1699 = vmatpush.bf16.xpose.msra.mxu0 0
        %1700 = vmatpush.bf16.xpose.msra.mxu0 0
        %1701 = vmatpush.bf16.xpose.msra.mxu0 0
        %1702 = vmatpush.bf16.xpose.msra.mxu0 0
        %1703 = vmatpush.bf16.xpose.msra.mxu0 %v1695
        %1704 = vmatpush.bf16.xpose.msra.mxu0 %v1692
        %1705 = vmatmul.bf16.gmra.mxu0 %v1686
        %v1706 = vpop.f32.mrf.mxu0
        %v1707 = vadd.f32 0.0, %v1706
        %v1708 = vpop.f32.mrf.mxu0
        %v1709 = vadd.f32 0.0, %v1708
        %1710 = vmatmul.bf16.gmra.mxu0 %v1689
        %v1711 = vpop.f32.mrf.mxu0
        %v1712 = vadd.f32 0.0, %v1711
        %v1713 = vpop.f32.mrf.mxu0
        %v1714 = vadd.f32 0.0, %v1713
        %1715 = vdwg.mxu0
        %v1716 = vunpack.c.l.b16 %v1294
        %v1717 = vunpack.c.l.b16 %v1296
        %v1718 = vunpack.c.l.b16 %v1298
        %v1719 = vunpack.c.l.b16 %v1300
        %v1720 = vpack.c.b16 %v1717, %v1716
        %v1721 = vpack.c.b16 %v1719, %v1718
        %v1726 = vunpack.c.l.b16 %v1565
        %v1727 = vunpack.c.l.b16 %v1566
        %v1728 = vunpack.c.l.b16 %v1567
        %v1729 = vunpack.c.l.b16 %v1568
        %v1730 = vpack.c.b16 %v1727, %v1726
        %v1731 = vpack.c.b16 %v1729, %v1728
        %v1733 = vsel %vm1637, %v1720, 0
        %v1736 = vsel %vm1637, %v1721, 0
        %v1739 = vsel %vm1637, %v1730, 0
        %v1742 = vsel %vm1637, %v1731, 0
        %1744 = vmatpush.bf16.xpose.msra.mxu0 0
        %1745 = vmatpush.bf16.xpose.msra.mxu0 0
        %1746 = vmatpush.bf16.xpose.msra.mxu0 0
        %1747 = vmatpush.bf16.xpose.msra.mxu0 0
        %1748 = vmatpush.bf16.xpose.msra.mxu0 0
        %1749 = vmatpush.bf16.xpose.msra.mxu0 0
        %1750 = vmatpush.bf16.xpose.msra.mxu0 %v1742
        %1751 = vmatpush.bf16.xpose.msra.mxu0 %v1739
        %1752 = vmatmul.bf16.gmra.mxu0 %v1733
        %v1753 = vpop.f32.mrf.mxu0
        %v1754 = vadd.f32 0.0, %v1753
        %v1755 = vpop.f32.mrf.mxu0
        %v1756 = vadd.f32 0.0, %v1755
        %1757 = vmatmul.bf16.gmra.mxu0 %v1736
        %v1758 = vpop.f32.mrf.mxu0
        %v1759 = vadd.f32 0.0, %v1758
        %v1760 = vpop.f32.mrf.mxu0
        %v1761 = vadd.f32 0.0, %v1760
        %1762 = vdwg.mxu0
        %v1763 = vunpack.c.l.b16 %v1302
        %v1764 = vunpack.c.l.b16 %v1304
        %v1765 = vunpack.c.l.b16 %v1306
        %v1766 = vunpack.c.l.b16 %v1308
        %v1767 = vpack.c.b16 %v1764, %v1763
        %v1768 = vpack.c.b16 %v1766, %v1765
        %v1773 = vunpack.c.l.b16 %v1569
        %v1774 = vunpack.c.l.b16 %v1570
        %v1775 = vunpack.c.l.b16 %v1571
        %v1776 = vunpack.c.l.b16 %v1572
        %v1777 = vpack.c.b16 %v1774, %v1773
        %v1778 = vpack.c.b16 %v1776, %v1775
        %v1780 = vsel %vm1637, %v1767, 0
        %v1783 = vsel %vm1637, %v1768, 0
        %v1786 = vsel %vm1637, %v1777, 0
        %v1789 = vsel %vm1637, %v1778, 0
        %1791 = vmatpush.bf16.xpose.msra.mxu0 0
        %1792 = vmatpush.bf16.xpose.msra.mxu0 0
        %1793 = vmatpush.bf16.xpose.msra.mxu0 0
        %1794 = vmatpush.bf16.xpose.msra.mxu0 0
        %1795 = vmatpush.bf16.xpose.msra.mxu0 0
        %1796 = vmatpush.bf16.xpose.msra.mxu0 0
        %1797 = vmatpush.bf16.xpose.msra.mxu0 %v1789
        %1798 = vmatpush.bf16.xpose.msra.mxu0 %v1786
        %1799 = vmatmul.bf16.gmra.mxu0 %v1780
        %v1800 = vpop.f32.mrf.mxu0
        %v1801 = vadd.f32 0.0, %v1800
        %v1802 = vpop.f32.mrf.mxu0
        %v1803 = vadd.f32 0.0, %v1802
        %1804 = vmatmul.bf16.gmra.mxu0 %v1783
        %v1805 = vpop.f32.mrf.mxu0
        %v1806 = vadd.f32 0.0, %v1805
        %v1807 = vpop.f32.mrf.mxu0
        %v1808 = vadd.f32 0.0, %v1807
        %1809 = vdwg.mxu0
        %v1810 = vunpack.c.l.b16 %v1310
        %v1811 = vunpack.c.l.b16 %v1312
        %v1812 = vunpack.c.l.b16 %v1314
        %v1813 = vunpack.c.l.b16 %v1316
        %v1814 = vpack.c.b16 %v1811, %v1810
        %v1815 = vpack.c.b16 %v1813, %v1812
        %v1820 = vunpack.c.l.b16 %v1573
        %v1821 = vunpack.c.l.b16 %v1574
        %v1822 = vunpack.c.l.b16 %v1575
        %v1823 = vunpack.c.l.b16 %v1576
        %v1824 = vpack.c.b16 %v1821, %v1820
        %v1825 = vpack.c.b16 %v1823, %v1822
        %v1827 = vsel %vm1637, %v1814, 0
        %v1830 = vsel %vm1637, %v1815, 0
        %v1833 = vsel %vm1637, %v1824, 0
        %v1836 = vsel %vm1637, %v1825, 0
        %1838 = vmatpush.bf16.xpose.msra.mxu0 0
        %1839 = vmatpush.bf16.xpose.msra.mxu0 0
        %1840 = vmatpush.bf16.xpose.msra.mxu0 0
        %1841 = vmatpush.bf16.xpose.msra.mxu0 0
        %1842 = vmatpush.bf16.xpose.msra.mxu0 0
        %1843 = vmatpush.bf16.xpose.msra.mxu0 0
        %1844 = vmatpush.bf16.xpose.msra.mxu0 %v1836
        %1845 = vmatpush.bf16.xpose.msra.mxu0 %v1833
        %1846 = vmatmul.bf16.gmra.mxu0 %v1827
        %v1847 = vpop.f32.mrf.mxu0
        %v1848 = vadd.f32 0.0, %v1847
        %v1849 = vpop.f32.mrf.mxu0
        %v1850 = vadd.f32 0.0, %v1849
        %1851 = vmatmul.bf16.gmra.mxu0 %v1830
        %v1852 = vpop.f32.mrf.mxu0
        %v1853 = vadd.f32 0.0, %v1852
        %v1854 = vpop.f32.mrf.mxu0
        %v1855 = vadd.f32 0.0, %v1854
        %1856 = vdwg.mxu0
        %v1857 = vunpack.c.l.b16 %v1318
        %v1858 = vunpack.c.l.b16 %v1320
        %v1859 = vunpack.c.l.b16 %v1322
        %v1860 = vunpack.c.l.b16 %v1324
        %v1861 = vpack.c.b16 %v1858, %v1857
        %v1862 = vpack.c.b16 %v1860, %v1859
        %v1867 = vunpack.c.l.b16 %v1577
        %v1868 = vunpack.c.l.b16 %v1578
        %v1869 = vunpack.c.l.b16 %v1579
        %v1870 = vunpack.c.l.b16 %v1580
        %v1871 = vpack.c.b16 %v1868, %v1867
        %v1872 = vpack.c.b16 %v1870, %v1869
        %v1874 = vsel %vm1637, %v1861, 0
        %v1877 = vsel %vm1637, %v1862, 0
        %v1880 = vsel %vm1637, %v1871, 0
        %v1883 = vsel %vm1637, %v1872, 0
        %1885 = vmatpush.bf16.xpose.msra.mxu0 0
        %1886 = vmatpush.bf16.xpose.msra.mxu0 0
        %1887 = vmatpush.bf16.xpose.msra.mxu0 0
        %1888 = vmatpush.bf16.xpose.msra.mxu0 0
        %1889 = vmatpush.bf16.xpose.msra.mxu0 0
        %1890 = vmatpush.bf16.xpose.msra.mxu0 0
        %1891 = vmatpush.bf16.xpose.msra.mxu0 %v1883
        %1892 = vmatpush.bf16.xpose.msra.mxu0 %v1880
        %1893 = vmatmul.bf16.gmra.mxu0 %v1874
        %v1894 = vpop.f32.mrf.mxu0
        %v1895 = vadd.f32 0.0, %v1894
        %v1896 = vpop.f32.mrf.mxu0
        %v1897 = vadd.f32 0.0, %v1896
        %1898 = vmatmul.bf16.gmra.mxu0 %v1877
        %v1899 = vpop.f32.mrf.mxu0
        %v1900 = vadd.f32 0.0, %v1899
        %v1901 = vpop.f32.mrf.mxu0
        %v1902 = vadd.f32 0.0, %v1901
        %1903 = vdwg.mxu0
        %v1904 = vunpack.c.l.b16 %v1326
        %v1905 = vunpack.c.l.b16 %v1328
        %v1906 = vunpack.c.l.b16 %v1330
        %v1907 = vunpack.c.l.b16 %v1332
        %v1908 = vpack.c.b16 %v1905, %v1904
        %v1909 = vpack.c.b16 %v1907, %v1906
        %v1914 = vunpack.c.l.b16 %v1581
        %v1915 = vunpack.c.l.b16 %v1582
        %v1916 = vunpack.c.l.b16 %v1583
        %v1917 = vunpack.c.l.b16 %v1584
        %v1918 = vpack.c.b16 %v1915, %v1914
        %v1919 = vpack.c.b16 %v1917, %v1916
        %v1921 = vsel %vm1637, %v1908, 0
        %v1924 = vsel %vm1637, %v1909, 0
        %v1927 = vsel %vm1637, %v1918, 0
        %v1930 = vsel %vm1637, %v1919, 0
        %1932 = vmatpush.bf16.xpose.msra.mxu0 0
        %1933 = vmatpush.bf16.xpose.msra.mxu0 0
        %1934 = vmatpush.bf16.xpose.msra.mxu0 0
        %1935 = vmatpush.bf16.xpose.msra.mxu0 0
        %1936 = vmatpush.bf16.xpose.msra.mxu0 0
        %1937 = vmatpush.bf16.xpose.msra.mxu0 0
        %1938 = vmatpush.bf16.xpose.msra.mxu0 %v1930
        %1939 = vmatpush.bf16.xpose.msra.mxu0 %v1927
        %1940 = vmatmul.bf16.gmra.mxu0 %v1921
        %v1941 = vpop.f32.mrf.mxu0
        %v1942 = vadd.f32 0.0, %v1941
        %v1943 = vpop.f32.mrf.mxu0
        %v1944 = vadd.f32 0.0, %v1943
        %1945 = vmatmul.bf16.gmra.mxu0 %v1924
        %v1946 = vpop.f32.mrf.mxu0
        %v1947 = vadd.f32 0.0, %v1946
        %v1948 = vpop.f32.mrf.mxu0
        %v1949 = vadd.f32 0.0, %v1948
        %1950 = vdwg.mxu0
        %v1951 = vunpack.c.l.b16 %v1334
        %v1952 = vunpack.c.l.b16 %v1336
        %v1953 = vunpack.c.l.b16 %v1338
        %v1954 = vunpack.c.l.b16 %v1340
        %v1955 = vpack.c.b16 %v1952, %v1951
        %v1956 = vpack.c.b16 %v1954, %v1953
        %v1961 = vunpack.c.l.b16 %v1585
        %v1962 = vunpack.c.l.b16 %v1586
        %v1963 = vunpack.c.l.b16 %v1587
        %v1964 = vunpack.c.l.b16 %v1588
        %v1965 = vpack.c.b16 %v1962, %v1961
        %v1966 = vpack.c.b16 %v1964, %v1963
        %v1968 = vsel %vm1637, %v1955, 0
        %v1971 = vsel %vm1637, %v1956, 0
        %v1974 = vsel %vm1637, %v1965, 0
        %v1977 = vsel %vm1637, %v1966, 0
        %1979 = vmatpush.bf16.xpose.msra.mxu0 0
        %1980 = vmatpush.bf16.xpose.msra.mxu0 0
        %1981 = vmatpush.bf16.xpose.msra.mxu0 0
        %1982 = vmatpush.bf16.xpose.msra.mxu0 0
        %1983 = vmatpush.bf16.xpose.msra.mxu0 0
        %1984 = vmatpush.bf16.xpose.msra.mxu0 0
        %1985 = vmatpush.bf16.xpose.msra.mxu0 %v1977
        %1986 = vmatpush.bf16.xpose.msra.mxu0 %v1974
        %1987 = vmatmul.bf16.gmra.mxu0 %v1968
        %v1988 = vpop.f32.mrf.mxu0
        %v1989 = vadd.f32 0.0, %v1988
        %v1990 = vpop.f32.mrf.mxu0
        %v1991 = vadd.f32 0.0, %v1990
        %1992 = vmatmul.bf16.gmra.mxu0 %v1971
        %v1993 = vpop.f32.mrf.mxu0
        %v1994 = vadd.f32 0.0, %v1993
        %v1995 = vpop.f32.mrf.mxu0
        %v1996 = vadd.f32 0.0, %v1995
        %1997 = vdwg.mxu0
        %v1998 = vstv 0
        %v1999 = vadd.s32 %v1998, %v1556
        %vm2000 = vcmp.le.s32.totalorder %v1999, %v1551
        %vm2001 = vcmp.le.s32.totalorder %v1999, %v1552
        %vm2002 = vcmp.le.s32.totalorder %v1999, %v1553
        %vm2003 = vcmp.le.s32.totalorder %v1999, %v1554
        %v2004 = vsel %vm2000, 1, 0
        %v2005 = vsel %vm2001, 1, 0
        %v2006 = vsel %vm2002, 1, 0
        %v2007 = vsel %vm2003, 1, 0
        %vm2008 = vcmp.eq.s32.totalorder %v2004, 1
        %vm2009 = vcmp.eq.s32.totalorder %v2005, 1
        %vm2010 = vcmp.eq.s32.totalorder %v2006, 1
        %vm2011 = vcmp.eq.s32.totalorder %v2007, 1
        %v2012 = vsel %vm2008, %v1660, -1e+30
        %v2013 = vsel %vm2009, %v1662, -1e+30
        %v2014 = vsel %vm2010, %v1665, -1e+30
        %v2015 = vsel %vm2011, %v1667, -1e+30
        %v2016 = vsel %vm2008, %v1707, -1e+30
        %v2017 = vsel %vm2009, %v1709, -1e+30
        %v2018 = vsel %vm2010, %v1712, -1e+30
        %v2019 = vsel %vm2011, %v1714, -1e+30
        %v2020 = vsel %vm2008, %v1754, -1e+30
        %v2021 = vsel %vm2009, %v1756, -1e+30
        %v2022 = vsel %vm2010, %v1759, -1e+30
        %v2023 = vsel %vm2011, %v1761, -1e+30
        %v2024 = vsel %vm2008, %v1801, -1e+30
        %v2025 = vsel %vm2009, %v1803, -1e+30
        %v2026 = vsel %vm2010, %v1806, -1e+30
        %v2027 = vsel %vm2011, %v1808, -1e+30
        %v2028 = vsel %vm2008, %v1848, -1e+30
        %v2029 = vsel %vm2009, %v1850, -1e+30
        %v2030 = vsel %vm2010, %v1853, -1e+30
        %v2031 = vsel %vm2011, %v1855, -1e+30
        %v2032 = vsel %vm2008, %v1895, -1e+30
        %v2033 = vsel %vm2009, %v1897, -1e+30
        %v2034 = vsel %vm2010, %v1900, -1e+30
        %v2035 = vsel %vm2011, %v1902, -1e+30
        %v2036 = vsel %vm2008, %v1942, -1e+30
        %v2037 = vsel %vm2009, %v1944, -1e+30
        %v2038 = vsel %vm2010, %v1947, -1e+30
        %v2039 = vsel %vm2011, %v1949, -1e+30
        %v2040 = vsel %vm2008, %v1989, -1e+30
        %v2041 = vsel %vm2009, %v1991, -1e+30
        %v2042 = vsel %vm2010, %v1994, -1e+30
        %v2043 = vsel %vm2011, %v1996, -1e+30
        %v2044 = vsel %vm1637, %v2012, -inf
        %2045 = vmax.xlane.f32.xlu0 %v2044
        %v2046 = vpop.xlane.xlu0 %2045
        %v2047 = vsel %vm1637, %v2013, -inf
        %2048 = vmax.xlane.f32.xlu0 %v2047
        %v2049 = vpop.xlane.xlu0 %2048
        %v2050 = vsel %vm1637, %v2014, -inf
        %2051 = vmax.xlane.f32.xlu0 %v2050
        %v2052 = vpop.xlane.xlu0 %2051
        %v2053 = vsel %vm1637, %v2015, -inf
        %2054 = vmax.xlane.f32.xlu0 %v2053
        %v2055 = vpop.xlane.xlu0 %2054
        %v2056 = vsel %vm1637, %v2016, -inf
        %2057 = vmax.xlane.f32.xlu0 %v2056
        %v2058 = vpop.xlane.xlu0 %2057
        %v2059 = vsel %vm1637, %v2017, -inf
        %2060 = vmax.xlane.f32.xlu0 %v2059
        %v2061 = vpop.xlane.xlu0 %2060
        %v2062 = vsel %vm1637, %v2018, -inf
        %2063 = vmax.xlane.f32.xlu0 %v2062
        %v2064 = vpop.xlane.xlu0 %2063
        %v2065 = vsel %vm1637, %v2019, -inf
        %2066 = vmax.xlane.f32.xlu0 %v2065
        %v2067 = vpop.xlane.xlu0 %2066
        %v2068 = vsel %vm1637, %v2020, -inf
        %2069 = vmax.xlane.f32.xlu0 %v2068
        %v2070 = vpop.xlane.xlu0 %2069
        %v2071 = vsel %vm1637, %v2021, -inf
        %2072 = vmax.xlane.f32.xlu0 %v2071
        %v2073 = vpop.xlane.xlu0 %2072
        %v2074 = vsel %vm1637, %v2022, -inf
        %2075 = vmax.xlane.f32.xlu0 %v2074
        %v2076 = vpop.xlane.xlu0 %2075
        %v2077 = vsel %vm1637, %v2023, -inf
        %2078 = vmax.xlane.f32.xlu0 %v2077
        %v2079 = vpop.xlane.xlu0 %2078
        %v2080 = vsel %vm1637, %v2024, -inf
        %2081 = vmax.xlane.f32.xlu0 %v2080
        %v2082 = vpop.xlane.xlu0 %2081
        %v2083 = vsel %vm1637, %v2025, -inf
        %2084 = vmax.xlane.f32.xlu0 %v2083
        %v2085 = vpop.xlane.xlu0 %2084
        %v2086 = vsel %vm1637, %v2026, -inf
        %2087 = vmax.xlane.f32.xlu0 %v2086
        %v2088 = vpop.xlane.xlu0 %2087
        %v2089 = vsel %vm1637, %v2027, -inf
        %2090 = vmax.xlane.f32.xlu0 %v2089
        %v2091 = vpop.xlane.xlu0 %2090
        %v2092 = vsel %vm1637, %v2028, -inf
        %2093 = vmax.xlane.f32.xlu0 %v2092
        %v2094 = vpop.xlane.xlu0 %2093
        %v2095 = vsel %vm1637, %v2029, -inf
        %2096 = vmax.xlane.f32.xlu0 %v2095
        %v2097 = vpop.xlane.xlu0 %2096
        %v2098 = vsel %vm1637, %v2030, -inf
        %2099 = vmax.xlane.f32.xlu0 %v2098
        %v2100 = vpop.xlane.xlu0 %2099
        %v2101 = vsel %vm1637, %v2031, -inf
        %2102 = vmax.xlane.f32.xlu0 %v2101
        %v2103 = vpop.xlane.xlu0 %2102
        %v2104 = vsel %vm1637, %v2032, -inf
        %2105 = vmax.xlane.f32.xlu0 %v2104
        %v2106 = vpop.xlane.xlu0 %2105
        %v2107 = vsel %vm1637, %v2033, -inf
        %2108 = vmax.xlane.f32.xlu0 %v2107
        %v2109 = vpop.xlane.xlu0 %2108
        %v2110 = vsel %vm1637, %v2034, -inf
        %2111 = vmax.xlane.f32.xlu0 %v2110
        %v2112 = vpop.xlane.xlu0 %2111
        %v2113 = vsel %vm1637, %v2035, -inf
        %2114 = vmax.xlane.f32.xlu0 %v2113
        %v2115 = vpop.xlane.xlu0 %2114
        %v2116 = vsel %vm1637, %v2036, -inf
        %2117 = vmax.xlane.f32.xlu0 %v2116
        %v2118 = vpop.xlane.xlu0 %2117
        %v2119 = vsel %vm1637, %v2037, -inf
        %2120 = vmax.xlane.f32.xlu0 %v2119
        %v2121 = vpop.xlane.xlu0 %2120
        %v2122 = vsel %vm1637, %v2038, -inf
        %2123 = vmax.xlane.f32.xlu0 %v2122
        %v2124 = vpop.xlane.xlu0 %2123
        %v2125 = vsel %vm1637, %v2039, -inf
        %2126 = vmax.xlane.f32.xlu0 %v2125
        %v2127 = vpop.xlane.xlu0 %2126
        %v2128 = vsel %vm1637, %v2040, -inf
        %2129 = vmax.xlane.f32.xlu0 %v2128
        %v2130 = vpop.xlane.xlu0 %2129
        %v2131 = vsel %vm1637, %v2041, -inf
        %2132 = vmax.xlane.f32.xlu0 %v2131
        %v2133 = vpop.xlane.xlu0 %2132
        %v2134 = vsel %vm1637, %v2042, -inf
        %2135 = vmax.xlane.f32.xlu0 %v2134
        %v2136 = vpop.xlane.xlu0 %2135
        %v2137 = vsel %vm1637, %v2043, -inf
        %2138 = vmax.xlane.f32.xlu0 %v2137
        %v2139 = vpop.xlane.xlu0 %2138
        %v2140 = vmax.f32 %v2046, -1e+30
        %v2141 = vmax.f32 %v2049, -1e+30
        %v2142 = vmax.f32 %v2052, -1e+30
        %v2143 = vmax.f32 %v2055, -1e+30
        %v2144 = vmax.f32 %v2058, -1e+30
        %v2145 = vmax.f32 %v2061, -1e+30
        %v2146 = vmax.f32 %v2064, -1e+30
        %v2147 = vmax.f32 %v2067, -1e+30
        %v2148 = vmax.f32 %v2070, -1e+30
        %v2149 = vmax.f32 %v2073, -1e+30
        %v2150 = vmax.f32 %v2076, -1e+30
        %v2151 = vmax.f32 %v2079, -1e+30
        %v2152 = vmax.f32 %v2082, -1e+30
        %v2153 = vmax.f32 %v2085, -1e+30
        %v2154 = vmax.f32 %v2088, -1e+30
        %v2155 = vmax.f32 %v2091, -1e+30
        %v2156 = vmax.f32 %v2094, -1e+30
        %v2157 = vmax.f32 %v2097, -1e+30
        %v2158 = vmax.f32 %v2100, -1e+30
        %v2159 = vmax.f32 %v2103, -1e+30
        %v2160 = vmax.f32 %v2106, -1e+30
        %v2161 = vmax.f32 %v2109, -1e+30
        %v2162 = vmax.f32 %v2112, -1e+30
        %v2163 = vmax.f32 %v2115, -1e+30
        %v2164 = vmax.f32 %v2118, -1e+30
        %v2165 = vmax.f32 %v2121, -1e+30
        %v2166 = vmax.f32 %v2124, -1e+30
        %v2167 = vmax.f32 %v2127, -1e+30
        %v2168 = vmax.f32 %v2130, -1e+30
        %v2169 = vmax.f32 %v2133, -1e+30
        %v2170 = vmax.f32 %v2136, -1e+30
        %v2171 = vmax.f32 %v2139, -1e+30
        %v2172 = vsub.f32 -1e+30, %v2140
        %v2173 = vsub.f32 -1e+30, %v2141
        %v2174 = vsub.f32 -1e+30, %v2142
        %v2175 = vsub.f32 -1e+30, %v2143
        %v2176 = vsub.f32 -1e+30, %v2144
        %v2177 = vsub.f32 -1e+30, %v2145
        %v2178 = vsub.f32 -1e+30, %v2146
        %v2179 = vsub.f32 -1e+30, %v2147
        %v2180 = vsub.f32 -1e+30, %v2148
        %v2181 = vsub.f32 -1e+30, %v2149
        %v2182 = vsub.f32 -1e+30, %v2150
        %v2183 = vsub.f32 -1e+30, %v2151
        %v2184 = vsub.f32 -1e+30, %v2152
        %v2185 = vsub.f32 -1e+30, %v2153
        %v2186 = vsub.f32 -1e+30, %v2154
        %v2187 = vsub.f32 -1e+30, %v2155
        %v2188 = vsub.f32 -1e+30, %v2156
        %v2189 = vsub.f32 -1e+30, %v2157
        %v2190 = vsub.f32 -1e+30, %v2158
        %v2191 = vsub.f32 -1e+30, %v2159
        %v2192 = vsub.f32 -1e+30, %v2160
        %v2193 = vsub.f32 -1e+30, %v2161
        %v2194 = vsub.f32 -1e+30, %v2162
        %v2195 = vsub.f32 -1e+30, %v2163
        %v2196 = vsub.f32 -1e+30, %v2164
        %v2197 = vsub.f32 -1e+30, %v2165
        %v2198 = vsub.f32 -1e+30, %v2166
        %v2199 = vsub.f32 -1e+30, %v2167
        %v2200 = vsub.f32 -1e+30, %v2168
        %v2201 = vsub.f32 -1e+30, %v2169
        %v2202 = vsub.f32 -1e+30, %v2170
        %v2203 = vsub.f32 -1e+30, %v2171
        %v2204 = vmul.f32 %v2172, 1.442695
        %v2205 = vpow.pop %v2204
        %v2206 = vmul.f32 %v2173, 1.442695
        %v2207 = vpow.pop %v2206
        %v2208 = vmul.f32 %v2174, 1.442695
        %v2209 = vpow.pop %v2208
        %v2210 = vmul.f32 %v2175, 1.442695
        %v2211 = vpow.pop %v2210
        %v2212 = vmul.f32 %v2176, 1.442695
        %v2213 = vpow.pop %v2212
        %v2214 = vmul.f32 %v2177, 1.442695
        %v2215 = vpow.pop %v2214
        %v2216 = vmul.f32 %v2178, 1.442695
        %v2217 = vpow.pop %v2216
        %v2218 = vmul.f32 %v2179, 1.442695
        %v2219 = vpow.pop %v2218
        %v2220 = vmul.f32 %v2180, 1.442695
        %v2221 = vpow.pop %v2220
        %v2222 = vmul.f32 %v2181, 1.442695
        %v2223 = vpow.pop %v2222
        %v2224 = vmul.f32 %v2182, 1.442695
        %v2225 = vpow.pop %v2224
        %v2226 = vmul.f32 %v2183, 1.442695
        %v2227 = vpow.pop %v2226
        %v2228 = vmul.f32 %v2184, 1.442695
        %v2229 = vpow.pop %v2228
        %v2230 = vmul.f32 %v2185, 1.442695
        %v2231 = vpow.pop %v2230
        %v2232 = vmul.f32 %v2186, 1.442695
        %v2233 = vpow.pop %v2232
        %v2234 = vmul.f32 %v2187, 1.442695
        %v2235 = vpow.pop %v2234
        %v2236 = vmul.f32 %v2188, 1.442695
        %v2237 = vpow.pop %v2236
        %v2238 = vmul.f32 %v2189, 1.442695
        %v2239 = vpow.pop %v2238
        %v2240 = vmul.f32 %v2190, 1.442695
        %v2241 = vpow.pop %v2240
        %v2242 = vmul.f32 %v2191, 1.442695
        %v2243 = vpow.pop %v2242
        %v2244 = vmul.f32 %v2192, 1.442695
        %v2245 = vpow.pop %v2244
        %v2246 = vmul.f32 %v2193, 1.442695
        %v2247 = vpow.pop %v2246
        %v2248 = vmul.f32 %v2194, 1.442695
        %v2249 = vpow.pop %v2248
        %v2250 = vmul.f32 %v2195, 1.442695
        %v2251 = vpow.pop %v2250
        %v2252 = vmul.f32 %v2196, 1.442695
        %v2253 = vpow.pop %v2252
        %v2254 = vmul.f32 %v2197, 1.442695
        %v2255 = vpow.pop %v2254
        %v2256 = vmul.f32 %v2198, 1.442695
        %v2257 = vpow.pop %v2256
        %v2258 = vmul.f32 %v2199, 1.442695
        %v2259 = vpow.pop %v2258
        %v2260 = vmul.f32 %v2200, 1.442695
        %v2261 = vpow.pop %v2260
        %v2262 = vmul.f32 %v2201, 1.442695
        %v2263 = vpow.pop %v2262
        %v2264 = vmul.f32 %v2202, 1.442695
        %v2265 = vpow.pop %v2264
        %v2266 = vmul.f32 %v2203, 1.442695
        %v2267 = vpow.pop %v2266
        %v2268 = vsub.f32 %v2012, %v2140
        %v2269 = vsub.f32 %v2013, %v2141
        %v2270 = vsub.f32 %v2014, %v2142
        %v2271 = vsub.f32 %v2015, %v2143
        %v2272 = vsub.f32 %v2016, %v2144
        %v2273 = vsub.f32 %v2017, %v2145
        %v2274 = vsub.f32 %v2018, %v2146
        %v2275 = vsub.f32 %v2019, %v2147
        %v2276 = vsub.f32 %v2020, %v2148
        %v2277 = vsub.f32 %v2021, %v2149
        %v2278 = vsub.f32 %v2022, %v2150
        %v2279 = vsub.f32 %v2023, %v2151
        %v2280 = vsub.f32 %v2024, %v2152
        %v2281 = vsub.f32 %v2025, %v2153
        %v2282 = vsub.f32 %v2026, %v2154
        %v2283 = vsub.f32 %v2027, %v2155
        %v2284 = vsub.f32 %v2028, %v2156
        %v2285 = vsub.f32 %v2029, %v2157
        %v2286 = vsub.f32 %v2030, %v2158
        %v2287 = vsub.f32 %v2031, %v2159
        %v2288 = vsub.f32 %v2032, %v2160
        %v2289 = vsub.f32 %v2033, %v2161
        %v2290 = vsub.f32 %v2034, %v2162
        %v2291 = vsub.f32 %v2035, %v2163
        %v2292 = vsub.f32 %v2036, %v2164
        %v2293 = vsub.f32 %v2037, %v2165
        %v2294 = vsub.f32 %v2038, %v2166
        %v2295 = vsub.f32 %v2039, %v2167
        %v2296 = vsub.f32 %v2040, %v2168
        %v2297 = vsub.f32 %v2041, %v2169
        %v2298 = vsub.f32 %v2042, %v2170
        %v2299 = vsub.f32 %v2043, %v2171
        %v2300 = vmul.f32 %v2268, 1.442695
        %v2301 = vpow.pop %v2300
        %v2302 = vmul.f32 %v2269, 1.442695
        %v2303 = vpow.pop %v2302
        %v2304 = vmul.f32 %v2270, 1.442695
        %v2305 = vpow.pop %v2304
        %v2306 = vmul.f32 %v2271, 1.442695
        %v2307 = vpow.pop %v2306
        %v2308 = vmul.f32 %v2272, 1.442695
        %v2309 = vpow.pop %v2308
        %v2310 = vmul.f32 %v2273, 1.442695
        %v2311 = vpow.pop %v2310
        %v2312 = vmul.f32 %v2274, 1.442695
        %v2313 = vpow.pop %v2312
        %v2314 = vmul.f32 %v2275, 1.442695
        %v2315 = vpow.pop %v2314
        %v2316 = vmul.f32 %v2276, 1.442695
        %v2317 = vpow.pop %v2316
        %v2318 = vmul.f32 %v2277, 1.442695
        %v2319 = vpow.pop %v2318
        %v2320 = vmul.f32 %v2278, 1.442695
        %v2321 = vpow.pop %v2320
        %v2322 = vmul.f32 %v2279, 1.442695
        %v2323 = vpow.pop %v2322
        %v2324 = vmul.f32 %v2280, 1.442695
        %v2325 = vpow.pop %v2324
        %v2326 = vmul.f32 %v2281, 1.442695
        %v2327 = vpow.pop %v2326
        %v2328 = vmul.f32 %v2282, 1.442695
        %v2329 = vpow.pop %v2328
        %v2330 = vmul.f32 %v2283, 1.442695
        %v2331 = vpow.pop %v2330
        %v2332 = vmul.f32 %v2284, 1.442695
        %v2333 = vpow.pop %v2332
        %v2334 = vmul.f32 %v2285, 1.442695
        %v2335 = vpow.pop %v2334
        %v2336 = vmul.f32 %v2286, 1.442695
        %v2337 = vpow.pop %v2336
        %v2338 = vmul.f32 %v2287, 1.442695
        %v2339 = vpow.pop %v2338
        %v2340 = vmul.f32 %v2288, 1.442695
        %v2341 = vpow.pop %v2340
        %v2342 = vmul.f32 %v2289, 1.442695
        %v2343 = vpow.pop %v2342
        %v2344 = vmul.f32 %v2290, 1.442695
        %v2345 = vpow.pop %v2344
        %v2346 = vmul.f32 %v2291, 1.442695
        %v2347 = vpow.pop %v2346
        %v2348 = vmul.f32 %v2292, 1.442695
        %v2349 = vpow.pop %v2348
        %v2350 = vmul.f32 %v2293, 1.442695
        %v2351 = vpow.pop %v2350
        %v2352 = vmul.f32 %v2294, 1.442695
        %v2353 = vpow.pop %v2352
        %v2354 = vmul.f32 %v2295, 1.442695
        %v2355 = vpow.pop %v2354
        %v2356 = vmul.f32 %v2296, 1.442695
        %v2357 = vpow.pop %v2356
        %v2358 = vmul.f32 %v2297, 1.442695
        %v2359 = vpow.pop %v2358
        %v2360 = vmul.f32 %v2298, 1.442695
        %v2361 = vpow.pop %v2360
        %v2362 = vmul.f32 %v2299, 1.442695
        %v2363 = vpow.pop %v2362
        %v2364 = vmul.f32 %v2205, 0.0
        %v2365 = vmul.f32 %v2207, 0.0
        %v2366 = vmul.f32 %v2209, 0.0
        %v2367 = vmul.f32 %v2211, 0.0
        %v2368 = vmul.f32 %v2213, 0.0
        %v2369 = vmul.f32 %v2215, 0.0
        %v2370 = vmul.f32 %v2217, 0.0
        %v2371 = vmul.f32 %v2219, 0.0
        %v2372 = vmul.f32 %v2221, 0.0
        %v2373 = vmul.f32 %v2223, 0.0
        %v2374 = vmul.f32 %v2225, 0.0
        %v2375 = vmul.f32 %v2227, 0.0
        %v2376 = vmul.f32 %v2229, 0.0
        %v2377 = vmul.f32 %v2231, 0.0
        %v2378 = vmul.f32 %v2233, 0.0
        %v2379 = vmul.f32 %v2235, 0.0
        %v2380 = vmul.f32 %v2237, 0.0
        %v2381 = vmul.f32 %v2239, 0.0
        %v2382 = vmul.f32 %v2241, 0.0
        %v2383 = vmul.f32 %v2243, 0.0
        %v2384 = vmul.f32 %v2245, 0.0
        %v2385 = vmul.f32 %v2247, 0.0
        %v2386 = vmul.f32 %v2249, 0.0
        %v2387 = vmul.f32 %v2251, 0.0
        %v2388 = vmul.f32 %v2253, 0.0
        %v2389 = vmul.f32 %v2255, 0.0
        %v2390 = vmul.f32 %v2257, 0.0
        %v2391 = vmul.f32 %v2259, 0.0
        %v2392 = vmul.f32 %v2261, 0.0
        %v2393 = vmul.f32 %v2263, 0.0
        %v2394 = vmul.f32 %v2265, 0.0
        %v2395 = vmul.f32 %v2267, 0.0
        %v2396 = vsel %vm1637, %v2301, 0.0
        %2397 = vadd.xlane.f32.xlu0 %v2396
        %v2398 = vpop.xlane.xlu0 %2397
        %v2399 = vsel %vm1637, %v2303, 0.0
        %2400 = vadd.xlane.f32.xlu0 %v2399
        %v2401 = vpop.xlane.xlu0 %2400
        %v2402 = vsel %vm1637, %v2305, 0.0
        %2403 = vadd.xlane.f32.xlu0 %v2402
        %v2404 = vpop.xlane.xlu0 %2403
        %v2405 = vsel %vm1637, %v2307, 0.0
        %2406 = vadd.xlane.f32.xlu0 %v2405
        %v2407 = vpop.xlane.xlu0 %2406
        %v2408 = vsel %vm1637, %v2309, 0.0
        %2409 = vadd.xlane.f32.xlu0 %v2408
        %v2410 = vpop.xlane.xlu0 %2409
        %v2411 = vsel %vm1637, %v2311, 0.0
        %2412 = vadd.xlane.f32.xlu0 %v2411
        %v2413 = vpop.xlane.xlu0 %2412
        %v2414 = vsel %vm1637, %v2313, 0.0
        %2415 = vadd.xlane.f32.xlu0 %v2414
        %v2416 = vpop.xlane.xlu0 %2415
        %v2417 = vsel %vm1637, %v2315, 0.0
        %2418 = vadd.xlane.f32.xlu0 %v2417
        %v2419 = vpop.xlane.xlu0 %2418
        %v2420 = vsel %vm1637, %v2317, 0.0
        %2421 = vadd.xlane.f32.xlu0 %v2420
        %v2422 = vpop.xlane.xlu0 %2421
        %v2423 = vsel %vm1637, %v2319, 0.0
        %2424 = vadd.xlane.f32.xlu0 %v2423
        %v2425 = vpop.xlane.xlu0 %2424
        %v2426 = vsel %vm1637, %v2321, 0.0
        %2427 = vadd.xlane.f32.xlu0 %v2426
        %v2428 = vpop.xlane.xlu0 %2427
        %v2429 = vsel %vm1637, %v2323, 0.0
        %2430 = vadd.xlane.f32.xlu0 %v2429
        %v2431 = vpop.xlane.xlu0 %2430
        %v2432 = vsel %vm1637, %v2325, 0.0
        %2433 = vadd.xlane.f32.xlu0 %v2432
        %v2434 = vpop.xlane.xlu0 %2433
        %v2435 = vsel %vm1637, %v2327, 0.0
        %2436 = vadd.xlane.f32.xlu0 %v2435
        %v2437 = vpop.xlane.xlu0 %2436
        %v2438 = vsel %vm1637, %v2329, 0.0
        %2439 = vadd.xlane.f32.xlu0 %v2438
        %v2440 = vpop.xlane.xlu0 %2439
        %v2441 = vsel %vm1637, %v2331, 0.0
        %2442 = vadd.xlane.f32.xlu0 %v2441
        %v2443 = vpop.xlane.xlu0 %2442
        %v2444 = vsel %vm1637, %v2333, 0.0
        %2445 = vadd.xlane.f32.xlu0 %v2444
        %v2446 = vpop.xlane.xlu0 %2445
        %v2447 = vsel %vm1637, %v2335, 0.0
        %2448 = vadd.xlane.f32.xlu0 %v2447
        %v2449 = vpop.xlane.xlu0 %2448
        %v2450 = vsel %vm1637, %v2337, 0.0
        %2451 = vadd.xlane.f32.xlu0 %v2450
        %v2452 = vpop.xlane.xlu0 %2451
        %v2453 = vsel %vm1637, %v2339, 0.0
        %2454 = vadd.xlane.f32.xlu0 %v2453
        %v2455 = vpop.xlane.xlu0 %2454
        %v2456 = vsel %vm1637, %v2341, 0.0
        %2457 = vadd.xlane.f32.xlu0 %v2456
        %v2458 = vpop.xlane.xlu0 %2457
        %v2459 = vsel %vm1637, %v2343, 0.0
        %2460 = vadd.xlane.f32.xlu0 %v2459
        %v2461 = vpop.xlane.xlu0 %2460
        %v2462 = vsel %vm1637, %v2345, 0.0
        %2463 = vadd.xlane.f32.xlu0 %v2462
        %v2464 = vpop.xlane.xlu0 %2463
        %v2465 = vsel %vm1637, %v2347, 0.0
        %2466 = vadd.xlane.f32.xlu0 %v2465
        %v2467 = vpop.xlane.xlu0 %2466
        %v2468 = vsel %vm1637, %v2349, 0.0
        %2469 = vadd.xlane.f32.xlu0 %v2468
        %v2470 = vpop.xlane.xlu0 %2469
        %v2471 = vsel %vm1637, %v2351, 0.0
        %2472 = vadd.xlane.f32.xlu0 %v2471
        %v2473 = vpop.xlane.xlu0 %2472
        %v2474 = vsel %vm1637, %v2353, 0.0
        %2475 = vadd.xlane.f32.xlu0 %v2474
        %v2476 = vpop.xlane.xlu0 %2475
        %v2477 = vsel %vm1637, %v2355, 0.0
        %2478 = vadd.xlane.f32.xlu0 %v2477
        %v2479 = vpop.xlane.xlu0 %2478
        %v2480 = vsel %vm1637, %v2357, 0.0
        %2481 = vadd.xlane.f32.xlu0 %v2480
        %v2482 = vpop.xlane.xlu0 %2481
        %v2483 = vsel %vm1637, %v2359, 0.0
        %2484 = vadd.xlane.f32.xlu0 %v2483
        %v2485 = vpop.xlane.xlu0 %2484
        %v2486 = vsel %vm1637, %v2361, 0.0
        %2487 = vadd.xlane.f32.xlu0 %v2486
        %v2488 = vpop.xlane.xlu0 %2487
        %v2489 = vsel %vm1637, %v2363, 0.0
        %2490 = vadd.xlane.f32.xlu0 %v2489
        %v2491 = vpop.xlane.xlu0 %2490
        %v2492 = vadd.f32 %v2364, %v2398
        %v2493 = vadd.f32 %v2365, %v2401
        %v2494 = vadd.f32 %v2366, %v2404
        %v2495 = vadd.f32 %v2367, %v2407
        %v2496 = vadd.f32 %v2368, %v2410
        %v2497 = vadd.f32 %v2369, %v2413
        %v2498 = vadd.f32 %v2370, %v2416
        %v2499 = vadd.f32 %v2371, %v2419
        %v2500 = vadd.f32 %v2372, %v2422
        %v2501 = vadd.f32 %v2373, %v2425
        %v2502 = vadd.f32 %v2374, %v2428
        %v2503 = vadd.f32 %v2375, %v2431
        %v2504 = vadd.f32 %v2376, %v2434
        %v2505 = vadd.f32 %v2377, %v2437
        %v2506 = vadd.f32 %v2378, %v2440
        %v2507 = vadd.f32 %v2379, %v2443
        %v2508 = vadd.f32 %v2380, %v2446
        %v2509 = vadd.f32 %v2381, %v2449
        %v2510 = vadd.f32 %v2382, %v2452
        %v2511 = vadd.f32 %v2383, %v2455
        %v2512 = vadd.f32 %v2384, %v2458
        %v2513 = vadd.f32 %v2385, %v2461
        %v2514 = vadd.f32 %v2386, %v2464
        %v2515 = vadd.f32 %v2387, %v2467
        %v2516 = vadd.f32 %v2388, %v2470
        %v2517 = vadd.f32 %v2389, %v2473
        %v2518 = vadd.f32 %v2390, %v2476
        %v2519 = vadd.f32 %v2391, %v2479
        %v2520 = vadd.f32 %v2392, %v2482
        %v2521 = vadd.f32 %v2393, %v2485
        %v2522 = vadd.f32 %v2394, %v2488
        %v2523 = vadd.f32 %v2395, %v2491
        %v2524 = vpack.c.bf16 %v2301, %v2301
        %v2525 = vpack.c.bf16 %v2303, %v2303
        %v2526 = vpack.c.bf16 %v2305, %v2305
        %v2527 = vpack.c.bf16 %v2307, %v2307
        %v2528 = vpack.c.bf16 %v2309, %v2309
        %v2529 = vpack.c.bf16 %v2311, %v2311
        %v2530 = vpack.c.bf16 %v2313, %v2313
        %v2531 = vpack.c.bf16 %v2315, %v2315
        %v2532 = vpack.c.bf16 %v2317, %v2317
        %v2533 = vpack.c.bf16 %v2319, %v2319
        %v2534 = vpack.c.bf16 %v2321, %v2321
        %v2535 = vpack.c.bf16 %v2323, %v2323
        %v2536 = vpack.c.bf16 %v2325, %v2325
        %v2537 = vpack.c.bf16 %v2327, %v2327
        %v2538 = vpack.c.bf16 %v2329, %v2329
        %v2539 = vpack.c.bf16 %v2331, %v2331
        %v2540 = vpack.c.bf16 %v2333, %v2333
        %v2541 = vpack.c.bf16 %v2335, %v2335
        %v2542 = vpack.c.bf16 %v2337, %v2337
        %v2543 = vpack.c.bf16 %v2339, %v2339
        %v2544 = vpack.c.bf16 %v2341, %v2341
        %v2545 = vpack.c.bf16 %v2343, %v2343
        %v2546 = vpack.c.bf16 %v2345, %v2345
        %v2547 = vpack.c.bf16 %v2347, %v2347
        %v2548 = vpack.c.bf16 %v2349, %v2349
        %v2549 = vpack.c.bf16 %v2351, %v2351
        %v2550 = vpack.c.bf16 %v2353, %v2353
        %v2551 = vpack.c.bf16 %v2355, %v2355
        %v2552 = vpack.c.bf16 %v2357, %v2357
        %v2553 = vpack.c.bf16 %v2359, %v2359
        %v2554 = vpack.c.bf16 %v2361, %v2361
        %v2555 = vpack.c.bf16 %v2363, %v2363
        %v2560 = vunpack.c.l.b16 %v2524
        %v2561 = vunpack.c.l.b16 %v2525
        %v2562 = vunpack.c.l.b16 %v2526
        %v2563 = vunpack.c.l.b16 %v2527
        %v2564 = vpack.c.b16 %v2561, %v2560
        %v2565 = vpack.c.b16 %v2563, %v2562
        %v2570 = vunpack.c.l.b16 %v1589
        %v2571 = vunpack.c.l.b16 %v1590
        %v2572 = vunpack.c.l.b16 %v1591
        %v2573 = vunpack.c.l.b16 %v1592
        %v2574 = vpack.c.b16 %v2571, %v2570
        %v2575 = vpack.c.b16 %v2573, %v2572
        %v2579 = vsel %vm1637, %v2564, 0
        %v2582 = vsel %vm1637, %v2565, 0
        %2584 = vmatpush.bf16.msra.mxu0 0
        %2585 = vmatpush.bf16.msra.mxu0 0
        %2586 = vmatpush.bf16.msra.mxu0 0
        %2587 = vmatpush.bf16.msra.mxu0 0
        %2588 = vmatpush.bf16.msra.mxu0 0
        %2589 = vmatpush.bf16.msra.mxu0 0
        %2590 = vmatpush.bf16.msra.mxu0 %v2575
        %2591 = vmatpush.bf16.msra.mxu0 %v2574
        %2592 = vmatmul.bf16.gmra.mxu0 %v2579
        %v2593 = vpop.f32.mrf.mxu0
        %v2594 = vadd.f32 0.0, %v2593
        %v2595 = vpop.f32.mrf.mxu0
        %v2596 = vadd.f32 0.0, %v2595
        %2597 = vmatmul.bf16.gmra.mxu0 %v2582
        %v2598 = vpop.f32.mrf.mxu0
        %v2599 = vadd.f32 0.0, %v2598
        %v2600 = vpop.f32.mrf.mxu0
        %v2601 = vadd.f32 0.0, %v2600
        %2602 = vdwg.mxu0
        %v2607 = vunpack.c.l.b16 %v2528
        %v2608 = vunpack.c.l.b16 %v2529
        %v2609 = vunpack.c.l.b16 %v2530
        %v2610 = vunpack.c.l.b16 %v2531
        %v2611 = vpack.c.b16 %v2608, %v2607
        %v2612 = vpack.c.b16 %v2610, %v2609
        %v2617 = vunpack.c.l.b16 %v1593
        %v2618 = vunpack.c.l.b16 %v1594
        %v2619 = vunpack.c.l.b16 %v1595
        %v2620 = vunpack.c.l.b16 %v1596
        %v2621 = vpack.c.b16 %v2618, %v2617
        %v2622 = vpack.c.b16 %v2620, %v2619
        %v2626 = vsel %vm1637, %v2611, 0
        %v2629 = vsel %vm1637, %v2612, 0
        %2631 = vmatpush.bf16.msra.mxu0 0
        %2632 = vmatpush.bf16.msra.mxu0 0
        %2633 = vmatpush.bf16.msra.mxu0 0
        %2634 = vmatpush.bf16.msra.mxu0 0
        %2635 = vmatpush.bf16.msra.mxu0 0
        %2636 = vmatpush.bf16.msra.mxu0 0
        %2637 = vmatpush.bf16.msra.mxu0 %v2622
        %2638 = vmatpush.bf16.msra.mxu0 %v2621
        %2639 = vmatmul.bf16.gmra.mxu0 %v2626
        %v2640 = vpop.f32.mrf.mxu0
        %v2641 = vadd.f32 0.0, %v2640
        %v2642 = vpop.f32.mrf.mxu0
        %v2643 = vadd.f32 0.0, %v2642
        %2644 = vmatmul.bf16.gmra.mxu0 %v2629
        %v2645 = vpop.f32.mrf.mxu0
        %v2646 = vadd.f32 0.0, %v2645
        %v2647 = vpop.f32.mrf.mxu0
        %v2648 = vadd.f32 0.0, %v2647
        %2649 = vdwg.mxu0
        %v2654 = vunpack.c.l.b16 %v2532
        %v2655 = vunpack.c.l.b16 %v2533
        %v2656 = vunpack.c.l.b16 %v2534
        %v2657 = vunpack.c.l.b16 %v2535
        %v2658 = vpack.c.b16 %v2655, %v2654
        %v2659 = vpack.c.b16 %v2657, %v2656
        %v2664 = vunpack.c.l.b16 %v1597
        %v2665 = vunpack.c.l.b16 %v1598
        %v2666 = vunpack.c.l.b16 %v1599
        %v2667 = vunpack.c.l.b16 %v1600
        %v2668 = vpack.c.b16 %v2665, %v2664
        %v2669 = vpack.c.b16 %v2667, %v2666
        %v2673 = vsel %vm1637, %v2658, 0
        %v2676 = vsel %vm1637, %v2659, 0
        %2678 = vmatpush.bf16.msra.mxu0 0
        %2679 = vmatpush.bf16.msra.mxu0 0
        %2680 = vmatpush.bf16.msra.mxu0 0
        %2681 = vmatpush.bf16.msra.mxu0 0
        %2682 = vmatpush.bf16.msra.mxu0 0
        %2683 = vmatpush.bf16.msra.mxu0 0
        %2684 = vmatpush.bf16.msra.mxu0 %v2669
        %2685 = vmatpush.bf16.msra.mxu0 %v2668
        %2686 = vmatmul.bf16.gmra.mxu0 %v2673
        %v2687 = vpop.f32.mrf.mxu0
        %v2688 = vadd.f32 0.0, %v2687
        %v2689 = vpop.f32.mrf.mxu0
        %v2690 = vadd.f32 0.0, %v2689
        %2691 = vmatmul.bf16.gmra.mxu0 %v2676
        %v2692 = vpop.f32.mrf.mxu0
        %v2693 = vadd.f32 0.0, %v2692
        %v2694 = vpop.f32.mrf.mxu0
        %v2695 = vadd.f32 0.0, %v2694
        %2696 = vdwg.mxu0
        %v2701 = vunpack.c.l.b16 %v2536
        %v2702 = vunpack.c.l.b16 %v2537
        %v2703 = vunpack.c.l.b16 %v2538
        %v2704 = vunpack.c.l.b16 %v2539
        %v2705 = vpack.c.b16 %v2702, %v2701
        %v2706 = vpack.c.b16 %v2704, %v2703
        %v2711 = vunpack.c.l.b16 %v1601
        %v2712 = vunpack.c.l.b16 %v1602
        %v2713 = vunpack.c.l.b16 %v1603
        %v2714 = vunpack.c.l.b16 %v1604
        %v2715 = vpack.c.b16 %v2712, %v2711
        %v2716 = vpack.c.b16 %v2714, %v2713
        %v2720 = vsel %vm1637, %v2705, 0
        %v2723 = vsel %vm1637, %v2706, 0
        %2725 = vmatpush.bf16.msra.mxu0 0
        %2726 = vmatpush.bf16.msra.mxu0 0
        %2727 = vmatpush.bf16.msra.mxu0 0
        %2728 = vmatpush.bf16.msra.mxu0 0
        %2729 = vmatpush.bf16.msra.mxu0 0
        %2730 = vmatpush.bf16.msra.mxu0 0
        %2731 = vmatpush.bf16.msra.mxu0 %v2716
        %2732 = vmatpush.bf16.msra.mxu0 %v2715
        %2733 = vmatmul.bf16.gmra.mxu0 %v2720
        %v2734 = vpop.f32.mrf.mxu0
        %v2735 = vadd.f32 0.0, %v2734
        %v2736 = vpop.f32.mrf.mxu0
        %v2737 = vadd.f32 0.0, %v2736
        %2738 = vmatmul.bf16.gmra.mxu0 %v2723
        %v2739 = vpop.f32.mrf.mxu0
        %v2740 = vadd.f32 0.0, %v2739
        %v2741 = vpop.f32.mrf.mxu0
        %v2742 = vadd.f32 0.0, %v2741
        %2743 = vdwg.mxu0
        %v2748 = vunpack.c.l.b16 %v2540
        %v2749 = vunpack.c.l.b16 %v2541
        %v2750 = vunpack.c.l.b16 %v2542
        %v2751 = vunpack.c.l.b16 %v2543
        %v2752 = vpack.c.b16 %v2749, %v2748
        %v2753 = vpack.c.b16 %v2751, %v2750
        %v2758 = vunpack.c.l.b16 %v1605
        %v2759 = vunpack.c.l.b16 %v1606
        %v2760 = vunpack.c.l.b16 %v1607
        %v2761 = vunpack.c.l.b16 %v1608
        %v2762 = vpack.c.b16 %v2759, %v2758
        %v2763 = vpack.c.b16 %v2761, %v2760
        %v2767 = vsel %vm1637, %v2752, 0
        %v2770 = vsel %vm1637, %v2753, 0
        %2772 = vmatpush.bf16.msra.mxu0 0
        %2773 = vmatpush.bf16.msra.mxu0 0
        %2774 = vmatpush.bf16.msra.mxu0 0
        %2775 = vmatpush.bf16.msra.mxu0 0
        %2776 = vmatpush.bf16.msra.mxu0 0
        %2777 = vmatpush.bf16.msra.mxu0 0
        %2778 = vmatpush.bf16.msra.mxu0 %v2763
        %2779 = vmatpush.bf16.msra.mxu0 %v2762
        %2780 = vmatmul.bf16.gmra.mxu0 %v2767
        %v2781 = vpop.f32.mrf.mxu0
        %v2782 = vadd.f32 0.0, %v2781
        %v2783 = vpop.f32.mrf.mxu0
        %v2784 = vadd.f32 0.0, %v2783
        %2785 = vmatmul.bf16.gmra.mxu0 %v2770
        %v2786 = vpop.f32.mrf.mxu0
        %v2787 = vadd.f32 0.0, %v2786
        %v2788 = vpop.f32.mrf.mxu0
        %v2789 = vadd.f32 0.0, %v2788
        %2790 = vdwg.mxu0
        %v2795 = vunpack.c.l.b16 %v2544
        %v2796 = vunpack.c.l.b16 %v2545
        %v2797 = vunpack.c.l.b16 %v2546
        %v2798 = vunpack.c.l.b16 %v2547
        %v2799 = vpack.c.b16 %v2796, %v2795
        %v2800 = vpack.c.b16 %v2798, %v2797
        %v2805 = vunpack.c.l.b16 %v1609
        %v2806 = vunpack.c.l.b16 %v1610
        %v2807 = vunpack.c.l.b16 %v1611
        %v2808 = vunpack.c.l.b16 %v1612
        %v2809 = vpack.c.b16 %v2806, %v2805
        %v2810 = vpack.c.b16 %v2808, %v2807
        %v2814 = vsel %vm1637, %v2799, 0
        %v2817 = vsel %vm1637, %v2800, 0
        %2819 = vmatpush.bf16.msra.mxu0 0
        %2820 = vmatpush.bf16.msra.mxu0 0
        %2821 = vmatpush.bf16.msra.mxu0 0
        %2822 = vmatpush.bf16.msra.mxu0 0
        %2823 = vmatpush.bf16.msra.mxu0 0
        %2824 = vmatpush.bf16.msra.mxu0 0
        %2825 = vmatpush.bf16.msra.mxu0 %v2810
        %2826 = vmatpush.bf16.msra.mxu0 %v2809
        %2827 = vmatmul.bf16.gmra.mxu0 %v2814
        %v2828 = vpop.f32.mrf.mxu0
        %v2829 = vadd.f32 0.0, %v2828
        %v2830 = vpop.f32.mrf.mxu0
        %v2831 = vadd.f32 0.0, %v2830
        %2832 = vmatmul.bf16.gmra.mxu0 %v2817
        %v2833 = vpop.f32.mrf.mxu0
        %v2834 = vadd.f32 0.0, %v2833
        %v2835 = vpop.f32.mrf.mxu0
        %v2836 = vadd.f32 0.0, %v2835
        %2837 = vdwg.mxu0
        %v2842 = vunpack.c.l.b16 %v2548
        %v2843 = vunpack.c.l.b16 %v2549
        %v2844 = vunpack.c.l.b16 %v2550
        %v2845 = vunpack.c.l.b16 %v2551
        %v2846 = vpack.c.b16 %v2843, %v2842
        %v2847 = vpack.c.b16 %v2845, %v2844
        %v2852 = vunpack.c.l.b16 %v1613
        %v2853 = vunpack.c.l.b16 %v1614
        %v2854 = vunpack.c.l.b16 %v1615
        %v2855 = vunpack.c.l.b16 %v1616
        %v2856 = vpack.c.b16 %v2853, %v2852
        %v2857 = vpack.c.b16 %v2855, %v2854
        %v2861 = vsel %vm1637, %v2846, 0
        %v2864 = vsel %vm1637, %v2847, 0
        %2866 = vmatpush.bf16.msra.mxu0 0
        %2867 = vmatpush.bf16.msra.mxu0 0
        %2868 = vmatpush.bf16.msra.mxu0 0
        %2869 = vmatpush.bf16.msra.mxu0 0
        %2870 = vmatpush.bf16.msra.mxu0 0
        %2871 = vmatpush.bf16.msra.mxu0 0
        %2872 = vmatpush.bf16.msra.mxu0 %v2857
        %2873 = vmatpush.bf16.msra.mxu0 %v2856
        %2874 = vmatmul.bf16.gmra.mxu0 %v2861
        %v2875 = vpop.f32.mrf.mxu0
        %v2876 = vadd.f32 0.0, %v2875
        %v2877 = vpop.f32.mrf.mxu0
        %v2878 = vadd.f32 0.0, %v2877
        %2879 = vmatmul.bf16.gmra.mxu0 %v2864
        %v2880 = vpop.f32.mrf.mxu0
        %v2881 = vadd.f32 0.0, %v2880
        %v2882 = vpop.f32.mrf.mxu0
        %v2883 = vadd.f32 0.0, %v2882
        %2884 = vdwg.mxu0
        %v2889 = vunpack.c.l.b16 %v2552
        %v2890 = vunpack.c.l.b16 %v2553
        %v2891 = vunpack.c.l.b16 %v2554
        %v2892 = vunpack.c.l.b16 %v2555
        %v2893 = vpack.c.b16 %v2890, %v2889
        %v2894 = vpack.c.b16 %v2892, %v2891
        %v2899 = vunpack.c.l.b16 %v1617
        %v2900 = vunpack.c.l.b16 %v1618
        %v2901 = vunpack.c.l.b16 %v1619
        %v2902 = vunpack.c.l.b16 %v1620
        %v2903 = vpack.c.b16 %v2900, %v2899
        %v2904 = vpack.c.b16 %v2902, %v2901
        %v2908 = vsel %vm1637, %v2893, 0
        %v2911 = vsel %vm1637, %v2894, 0
        %2913 = vmatpush.bf16.msra.mxu0 0
        %2914 = vmatpush.bf16.msra.mxu0 0
        %2915 = vmatpush.bf16.msra.mxu0 0
        %2916 = vmatpush.bf16.msra.mxu0 0
        %2917 = vmatpush.bf16.msra.mxu0 0
        %2918 = vmatpush.bf16.msra.mxu0 0
        %2919 = vmatpush.bf16.msra.mxu0 %v2904
        %2920 = vmatpush.bf16.msra.mxu0 %v2903
        %2921 = vmatmul.bf16.gmra.mxu0 %v2908
        %v2922 = vpop.f32.mrf.mxu0
        %v2923 = vadd.f32 0.0, %v2922
        %v2924 = vpop.f32.mrf.mxu0
        %v2925 = vadd.f32 0.0, %v2924
        %2926 = vmatmul.bf16.gmra.mxu0 %v2911
        %v2927 = vpop.f32.mrf.mxu0
        %v2928 = vadd.f32 0.0, %v2927
        %v2929 = vpop.f32.mrf.mxu0
        %v2930 = vadd.f32 0.0, %v2929
        %2931 = vdwg.mxu0
        %v2932 = vadd.f32 %v2364, %v2594
        %v2933 = vadd.f32 %v2365, %v2596
        %v2934 = vadd.f32 %v2366, %v2599
        %v2935 = vadd.f32 %v2367, %v2601
        %v2936 = vadd.f32 %v2368, %v2641
        %v2937 = vadd.f32 %v2369, %v2643
        %v2938 = vadd.f32 %v2370, %v2646
        %v2939 = vadd.f32 %v2371, %v2648
        %v2940 = vadd.f32 %v2372, %v2688
        %v2941 = vadd.f32 %v2373, %v2690
        %v2942 = vadd.f32 %v2374, %v2693
        %v2943 = vadd.f32 %v2375, %v2695
        %v2944 = vadd.f32 %v2376, %v2735
        %v2945 = vadd.f32 %v2377, %v2737
        %v2946 = vadd.f32 %v2378, %v2740
        %v2947 = vadd.f32 %v2379, %v2742
        %v2948 = vadd.f32 %v2380, %v2782
        %v2949 = vadd.f32 %v2381, %v2784
        %v2950 = vadd.f32 %v2382, %v2787
        %v2951 = vadd.f32 %v2383, %v2789
        %v2952 = vadd.f32 %v2384, %v2829
        %v2953 = vadd.f32 %v2385, %v2831
        %v2954 = vadd.f32 %v2386, %v2834
        %v2955 = vadd.f32 %v2387, %v2836
        %v2956 = vadd.f32 %v2388, %v2876
        %v2957 = vadd.f32 %v2389, %v2878
        %v2958 = vadd.f32 %v2390, %v2881
        %v2959 = vadd.f32 %v2391, %v2883
        %v2960 = vadd.f32 %v2392, %v2923
        %v2961 = vadd.f32 %v2393, %v2925
        %v2962 = vadd.f32 %v2394, %v2928
        %v2963 = vadd.f32 %v2395, %v2930
        %v2964 = vrcp.pop %v2492
        %v2965 = vrcp.pop %v2493
        %v2966 = vrcp.pop %v2494
        %v2967 = vrcp.pop %v2495
        %v2968 = vrcp.pop %v2496
        %v2969 = vrcp.pop %v2497
        %v2970 = vrcp.pop %v2498
        %v2971 = vrcp.pop %v2499
        %v2972 = vrcp.pop %v2500
        %v2973 = vrcp.pop %v2501
        %v2974 = vrcp.pop %v2502
        %v2975 = vrcp.pop %v2503
        %v2976 = vrcp.pop %v2504
        %v2977 = vrcp.pop %v2505
        %v2978 = vrcp.pop %v2506
        %v2979 = vrcp.pop %v2507
        %v2980 = vrcp.pop %v2508
        %v2981 = vrcp.pop %v2509
        %v2982 = vrcp.pop %v2510
        %v2983 = vrcp.pop %v2511
        %v2984 = vrcp.pop %v2512
        %v2985 = vrcp.pop %v2513
        %v2986 = vrcp.pop %v2514
        %v2987 = vrcp.pop %v2515
        %v2988 = vrcp.pop %v2516
        %v2989 = vrcp.pop %v2517
        %v2990 = vrcp.pop %v2518
        %v2991 = vrcp.pop %v2519
        %v2992 = vrcp.pop %v2520
        %v2993 = vrcp.pop %v2521
        %v2994 = vrcp.pop %v2522
        %v2995 = vrcp.pop %v2523
        %v2996 = vmul.f32 %v2932, %v2964
        %v2997 = vmul.f32 %v2933, %v2965
        %v2998 = vmul.f32 %v2934, %v2966
        %v2999 = vmul.f32 %v2935, %v2967
        %v3000 = vmul.f32 %v2936, %v2968
        %v3001 = vmul.f32 %v2937, %v2969
        %v3002 = vmul.f32 %v2938, %v2970
        %v3003 = vmul.f32 %v2939, %v2971
        %v3004 = vmul.f32 %v2940, %v2972
        %v3005 = vmul.f32 %v2941, %v2973
        %v3006 = vmul.f32 %v2942, %v2974
        %v3007 = vmul.f32 %v2943, %v2975
        %v3008 = vmul.f32 %v2944, %v2976
        %v3009 = vmul.f32 %v2945, %v2977
        %v3010 = vmul.f32 %v2946, %v2978
        %v3011 = vmul.f32 %v2947, %v2979
        %v3012 = vmul.f32 %v2948, %v2980
        %v3013 = vmul.f32 %v2949, %v2981
        %v3014 = vmul.f32 %v2950, %v2982
        %v3015 = vmul.f32 %v2951, %v2983
        %v3016 = vmul.f32 %v2952, %v2984
        %v3017 = vmul.f32 %v2953, %v2985
        %v3018 = vmul.f32 %v2954, %v2986
        %v3019 = vmul.f32 %v2955, %v2987
        %v3020 = vmul.f32 %v2956, %v2988
        %v3021 = vmul.f32 %v2957, %v2989
        %v3022 = vmul.f32 %v2958, %v2990
        %v3023 = vmul.f32 %v2959, %v2991
        %v3024 = vmul.f32 %v2960, %v2992
        %v3025 = vmul.f32 %v2961, %v2993
        %v3026 = vmul.f32 %v2962, %v2994
        %v3027 = vmul.f32 %v2963, %v2995
        %3036 = vrot.lane.b32.xlu0 %v3004, 32
        %v3037 = vpop.permute.xlu0 %3036
        %3038 = vrot.lane.b32.xlu0 %v3005, 32
        %v3039 = vpop.permute.xlu0 %3038
        %3040 = vrot.lane.b32.xlu0 %v3006, 32
        %v3041 = vpop.permute.xlu0 %3040
        %3042 = vrot.lane.b32.xlu0 %v3007, 32
        %v3043 = vpop.permute.xlu0 %3042
        %3044 = vrot.lane.b32.xlu0 %v3008, 32
        %v3045 = vpop.permute.xlu0 %3044
        %3046 = vrot.lane.b32.xlu0 %v3009, 32
        %v3047 = vpop.permute.xlu0 %3046
        %3048 = vrot.lane.b32.xlu0 %v3010, 32
        %v3049 = vpop.permute.xlu0 %3048
        %3050 = vrot.lane.b32.xlu0 %v3011, 32
        %v3051 = vpop.permute.xlu0 %3050
        %3068 = vrot.lane.b32.xlu0 %v3012, 64
        %v3069 = vpop.permute.xlu0 %3068
        %3070 = vrot.lane.b32.xlu0 %v3013, 64
        %v3071 = vpop.permute.xlu0 %3070
        %3072 = vrot.lane.b32.xlu0 %v3014, 64
        %v3073 = vpop.permute.xlu0 %3072
        %3074 = vrot.lane.b32.xlu0 %v3015, 64
        %v3075 = vpop.permute.xlu0 %3074
        %3076 = vrot.lane.b32.xlu0 %v3016, 64
        %v3077 = vpop.permute.xlu0 %3076
        %3078 = vrot.lane.b32.xlu0 %v3017, 64
        %v3079 = vpop.permute.xlu0 %3078
        %3080 = vrot.lane.b32.xlu0 %v3018, 64
        %v3081 = vpop.permute.xlu0 %3080
        %3082 = vrot.lane.b32.xlu0 %v3019, 64
        %v3083 = vpop.permute.xlu0 %3082
        %3100 = vrot.lane.b32.xlu0 %v3020, 96
        %v3101 = vpop.permute.xlu0 %3100
        %3102 = vrot.lane.b32.xlu0 %v3021, 96
        %v3103 = vpop.permute.xlu0 %3102
        %3104 = vrot.lane.b32.xlu0 %v3022, 96
        %v3105 = vpop.permute.xlu0 %3104
        %3106 = vrot.lane.b32.xlu0 %v3023, 96
        %v3107 = vpop.permute.xlu0 %3106
        %3108 = vrot.lane.b32.xlu0 %v3024, 96
        %v3109 = vpop.permute.xlu0 %3108
        %3110 = vrot.lane.b32.xlu0 %v3025, 96
        %v3111 = vpop.permute.xlu0 %3110
        %3112 = vrot.lane.b32.xlu0 %v3026, 96
        %v3113 = vpop.permute.xlu0 %3112
        %3114 = vrot.lane.b32.xlu0 %v3027, 96
        %v3115 = vpop.permute.xlu0 %3114
        %v3124 = vsel %vm1637, %v2996, %v3037
        %v3125 = vsel %vm1637, %v2997, %v3039
        %v3126 = vsel %vm1637, %v2998, %v3041
        %v3127 = vsel %vm1637, %v2999, %v3043
        %v3128 = vsel %vm1637, %v3000, %v3045
        %v3129 = vsel %vm1637, %v3001, %v3047
        %v3130 = vsel %vm1637, %v3002, %v3049
        %v3131 = vsel %vm1637, %v3003, %v3051
        %vm3132 = vcmask 523264
        %v3133 = vsel %vm3132, %v3124, %v3069
        %v3134 = vsel %vm3132, %v3125, %v3071
        %v3135 = vsel %vm3132, %v3126, %v3073
        %v3136 = vsel %vm3132, %v3127, %v3075
        %v3137 = vsel %vm3132, %v3128, %v3077
        %v3138 = vsel %vm3132, %v3129, %v3079
        %v3139 = vsel %vm3132, %v3130, %v3081
        %v3140 = vsel %vm3132, %v3131, %v3083
        %vm3141 = vcmask 785408
        %v3142 = vsel %vm3141, %v3133, %v3101
        %v3143 = vsel %vm3141, %v3134, %v3103
        %v3144 = vsel %vm3141, %v3135, %v3105
        %v3145 = vsel %vm3141, %v3136, %v3107
        %v3146 = vsel %vm3141, %v3137, %v3109
        %v3147 = vsel %vm3141, %v3138, %v3111
        %v3148 = vsel %vm3141, %v3139, %v3113
        %v3149 = vsel %vm3141, %v3140, %v3115
        %v3150 = vpack.c.bf16 %v3143, %v3142
        %v3151 = vpack.c.bf16 %v3145, %v3144
        %v3152 = vpack.c.bf16 %v3147, %v3146
        %v3153 = vpack.c.bf16 %v3149, %v3148
        %v3154 = vld [vmem:[%s653] sm:$0xf]
        %v3155 = vld [vmem:[%s653 + $0x4] sm:$0xf]
        %v3156 = vld [vmem:[%s653 + $0x8] sm:$0xf]
        %v3157 = vld [vmem:[%s653 + $0xc] sm:$0xf]
        %v3158 = vld [vmem:[%s653 + $0x10] sm:$0xf]
        %v3159 = vld [vmem:[%s653 + $0x14] sm:$0xf]
        %v3160 = vld [vmem:[%s653 + $0x18] sm:$0xf]
        %v3161 = vld [vmem:[%s653 + $0x1c] sm:$0xf]
        %v3162 = vld [vmem:[%s653 + $0x20] sm:$0xf]
        %v3163 = vld [vmem:[%s653 + $0x24] sm:$0xf]
        %v3164 = vld [vmem:[%s653 + $0x28] sm:$0xf]
        %v3165 = vld [vmem:[%s653 + $0x2c] sm:$0xf]
        %v3166 = vld [vmem:[%s653 + $0x30] sm:$0xf]
        %v3167 = vld [vmem:[%s653 + $0x34] sm:$0xf]
        %v3168 = vld [vmem:[%s653 + $0x38] sm:$0xf]
        %v3169 = vld [vmem:[%s653 + $0x3c] sm:$0xf]
        %v3170 = vld [vmem:[%s776] sm:$0x1]
        %v3172 = vperm.slane %v3170, 0
        %v3190 = vunpack.c.l.b16 %v3154
        %v3191 = vunpack.c.l.b16 %v3155
        %v3192 = vunpack.c.l.b16 %v3156
        %v3193 = vunpack.c.l.b16 %v3157
        %v3194 = vunpack.c.l.b16 %v3158
        %v3195 = vunpack.c.l.b16 %v3159
        %v3196 = vunpack.c.l.b16 %v3160
        %v3197 = vunpack.c.l.b16 %v3161
        %v3198 = vunpack.c.l.b16 %v3162
        %v3199 = vunpack.c.l.b16 %v3163
        %v3200 = vunpack.c.l.b16 %v3164
        %v3201 = vunpack.c.l.b16 %v3165
        %v3202 = vunpack.c.l.b16 %v3166
        %v3203 = vunpack.c.l.b16 %v3167
        %v3204 = vunpack.c.l.b16 %v3168
        %v3205 = vunpack.c.l.b16 %v3169
        %v3206 = vpack.c.b16 %v3191, %v3190
        %v3207 = vpack.c.b16 %v3193, %v3192
        %v3208 = vpack.c.b16 %v3195, %v3194
        %v3209 = vpack.c.b16 %v3197, %v3196
        %v3210 = vpack.c.b16 %v3199, %v3198
        %v3211 = vpack.c.b16 %v3201, %v3200
        %v3212 = vpack.c.b16 %v3203, %v3202
        %v3213 = vpack.c.b16 %v3205, %v3204
        %3222 = vmatpush.bf16.msra.mxu0 %v3213
        %3223 = vmatpush.bf16.msra.mxu0 %v3212
        %3224 = vmatpush.bf16.msra.mxu0 %v3211
        %3225 = vmatpush.bf16.msra.mxu0 %v3210
        %3226 = vmatpush.bf16.msra.mxu0 %v3209
        %3227 = vmatpush.bf16.msra.mxu0 %v3208
        %3228 = vmatpush.bf16.msra.mxu0 %v3207
        %3229 = vmatpush.bf16.msra.mxu0 %v3206
        %3230 = vmatmul.bf16.gmra.mxu0 %v3150
        %v3231 = vpop.f32.mrf.mxu0
        %v3232 = vadd.f32 %v3172, %v3231
        %v3233 = vpop.f32.mrf.mxu0
        %v3234 = vadd.f32 %v3172, %v3233
        %3235 = vmatmul.bf16.gmra.mxu0 %v3151
        %v3236 = vpop.f32.mrf.mxu0
        %v3237 = vadd.f32 %v3172, %v3236
        %v3238 = vpop.f32.mrf.mxu0
        %v3239 = vadd.f32 %v3172, %v3238
        %3240 = vmatmul.bf16.gmra.mxu0 %v3152
        %v3241 = vpop.f32.mrf.mxu0
        %v3242 = vadd.f32 %v3172, %v3241
        %v3243 = vpop.f32.mrf.mxu0
        %v3244 = vadd.f32 %v3172, %v3243
        %3245 = vmatmul.bf16.gmra.mxu0 %v3153
        %v3246 = vpop.f32.mrf.mxu0
        %v3247 = vadd.f32 %v3172, %v3246
        %v3248 = vpop.f32.mrf.mxu0
        %v3249 = vadd.f32 %v3172, %v3248
        %3250 = vdwg.mxu0
        %v3251 = vadd.f32 %v811, %v3232
        %v3252 = vadd.f32 %v812, %v3234
        %v3253 = vadd.f32 %v813, %v3237
        %v3254 = vadd.f32 %v814, %v3239
        %v3255 = vadd.f32 %v815, %v3242
        %v3256 = vadd.f32 %v816, %v3244
        %v3257 = vadd.f32 %v817, %v3247
        %v3258 = vadd.f32 %v818, %v3249
        %v3259 = vld [vmem:[%s782] sm:$0x1]
        %v3260 = vld [vmem:[%s671] sm:$0x1]
        %3261 = vadd.xlane.f32.xlu0 %v3251
        %v3262 = vpop.xlane.xlu0 %3261
        %3263 = vadd.xlane.f32.xlu0 %v3252
        %v3264 = vpop.xlane.xlu0 %3263
        %3265 = vadd.xlane.f32.xlu0 %v3253
        %v3266 = vpop.xlane.xlu0 %3265
        %3267 = vadd.xlane.f32.xlu0 %v3254
        %v3268 = vpop.xlane.xlu0 %3267
        %3269 = vadd.xlane.f32.xlu0 %v3255
        %v3270 = vpop.xlane.xlu0 %3269
        %3271 = vadd.xlane.f32.xlu0 %v3256
        %v3272 = vpop.xlane.xlu0 %3271
        %3273 = vadd.xlane.f32.xlu0 %v3257
        %v3274 = vpop.xlane.xlu0 %3273
        %3275 = vadd.xlane.f32.xlu0 %v3258
        %v3276 = vpop.xlane.xlu0 %3275
        %v3277 = vmul.f32 %v3262, %v843
        %v3278 = vmul.f32 %v3264, %v843
        %v3279 = vmul.f32 %v3266, %v843
        %v3280 = vmul.f32 %v3268, %v843
        %v3281 = vmul.f32 %v3270, %v843
        %v3282 = vmul.f32 %v3272, %v843
        %v3283 = vmul.f32 %v3274, %v843
        %v3284 = vmul.f32 %v3276, %v843
        %v3285 = vsub.f32 %v3251, %v3277
        %v3286 = vsub.f32 %v3252, %v3278
        %v3287 = vsub.f32 %v3253, %v3279
        %v3288 = vsub.f32 %v3254, %v3280
        %v3289 = vsub.f32 %v3255, %v3281
        %v3290 = vsub.f32 %v3256, %v3282
        %v3291 = vsub.f32 %v3257, %v3283
        %v3292 = vsub.f32 %v3258, %v3284
        %v3293 = vmul.f32 %v3285, %v3285
        %v3294 = vmul.f32 %v3286, %v3286
        %v3295 = vmul.f32 %v3287, %v3287
        %v3296 = vmul.f32 %v3288, %v3288
        %v3297 = vmul.f32 %v3289, %v3289
        %v3298 = vmul.f32 %v3290, %v3290
        %v3299 = vmul.f32 %v3291, %v3291
        %v3300 = vmul.f32 %v3292, %v3292
        %3301 = vadd.xlane.f32.xlu0 %v3293
        %v3302 = vpop.xlane.xlu0 %3301
        %3303 = vadd.xlane.f32.xlu0 %v3294
        %v3304 = vpop.xlane.xlu0 %3303
        %3305 = vadd.xlane.f32.xlu0 %v3295
        %v3306 = vpop.xlane.xlu0 %3305
        %3307 = vadd.xlane.f32.xlu0 %v3296
        %v3308 = vpop.xlane.xlu0 %3307
        %3309 = vadd.xlane.f32.xlu0 %v3297
        %v3310 = vpop.xlane.xlu0 %3309
        %3311 = vadd.xlane.f32.xlu0 %v3298
        %v3312 = vpop.xlane.xlu0 %3311
        %3313 = vadd.xlane.f32.xlu0 %v3299
        %v3314 = vpop.xlane.xlu0 %3313
        %3315 = vadd.xlane.f32.xlu0 %v3300
        %v3316 = vpop.xlane.xlu0 %3315
        %v3317 = vmul.f32 %v3302, %v843
        %v3318 = vmul.f32 %v3304, %v843
        %v3319 = vmul.f32 %v3306, %v843
        %v3320 = vmul.f32 %v3308, %v843
        %v3321 = vmul.f32 %v3310, %v843
        %v3322 = vmul.f32 %v3312, %v843
        %v3323 = vmul.f32 %v3314, %v843
        %v3324 = vmul.f32 %v3316, %v843
        %v3325 = vadd.f32 %v3317, 1e-05
        %v3326 = vadd.f32 %v3318, 1e-05
        %v3327 = vadd.f32 %v3319, 1e-05
        %v3328 = vadd.f32 %v3320, 1e-05
        %v3329 = vadd.f32 %v3321, 1e-05
        %v3330 = vadd.f32 %v3322, 1e-05
        %v3331 = vadd.f32 %v3323, 1e-05
        %v3332 = vadd.f32 %v3324, 1e-05
        %v3333 = vrsqrt.pop %v3325
        %v3334 = vmul.f32 %v3333, %v3325
        %v3335 = vmul.f32 %v3334, %v3333
        %v3336 = vmul.f32 0.5, %v3335
        %v3337 = vsub.f32 1.5, %v3336
        %v3338 = vmul.f32 %v3333, %v3337
        %vm3339 = vweird.f32 %v3325
        %vm3340 = vweird.f32 %v3333
        %vm3341 = vmor %vm3339, %vm3340
        %v3342 = vsel %vm3341, %v3333, %v3338
        %v3343 = vrsqrt.pop %v3326
        %v3344 = vmul.f32 %v3343, %v3326
        %v3345 = vmul.f32 %v3344, %v3343
        %v3346 = vmul.f32 0.5, %v3345
        %v3347 = vsub.f32 1.5, %v3346
        %v3348 = vmul.f32 %v3343, %v3347
        %vm3349 = vweird.f32 %v3326
        %vm3350 = vweird.f32 %v3343
        %vm3351 = vmor %vm3349, %vm3350
        %v3352 = vsel %vm3351, %v3343, %v3348
        %v3353 = vrsqrt.pop %v3327
        %v3354 = vmul.f32 %v3353, %v3327
        %v3355 = vmul.f32 %v3354, %v3353
        %v3356 = vmul.f32 0.5, %v3355
        %v3357 = vsub.f32 1.5, %v3356
        %v3358 = vmul.f32 %v3353, %v3357
        %vm3359 = vweird.f32 %v3327
        %vm3360 = vweird.f32 %v3353
        %vm3361 = vmor %vm3359, %vm3360
        %v3362 = vsel %vm3361, %v3353, %v3358
        %v3363 = vrsqrt.pop %v3328
        %v3364 = vmul.f32 %v3363, %v3328
        %v3365 = vmul.f32 %v3364, %v3363
        %v3366 = vmul.f32 0.5, %v3365
        %v3367 = vsub.f32 1.5, %v3366
        %v3368 = vmul.f32 %v3363, %v3367
        %vm3369 = vweird.f32 %v3328
        %vm3370 = vweird.f32 %v3363
        %vm3371 = vmor %vm3369, %vm3370
        %v3372 = vsel %vm3371, %v3363, %v3368
        %v3373 = vrsqrt.pop %v3329
        %v3374 = vmul.f32 %v3373, %v3329
        %v3375 = vmul.f32 %v3374, %v3373
        %v3376 = vmul.f32 0.5, %v3375
        %v3377 = vsub.f32 1.5, %v3376
        %v3378 = vmul.f32 %v3373, %v3377
        %vm3379 = vweird.f32 %v3329
        %vm3380 = vweird.f32 %v3373
        %vm3381 = vmor %vm3379, %vm3380
        %v3382 = vsel %vm3381, %v3373, %v3378
        %v3383 = vrsqrt.pop %v3330
        %v3384 = vmul.f32 %v3383, %v3330
        %v3385 = vmul.f32 %v3384, %v3383
        %v3386 = vmul.f32 0.5, %v3385
        %v3387 = vsub.f32 1.5, %v3386
        %v3388 = vmul.f32 %v3383, %v3387
        %vm3389 = vweird.f32 %v3330
        %vm3390 = vweird.f32 %v3383
        %vm3391 = vmor %vm3389, %vm3390
        %v3392 = vsel %vm3391, %v3383, %v3388
        %v3393 = vrsqrt.pop %v3331
        %v3394 = vmul.f32 %v3393, %v3331
        %v3395 = vmul.f32 %v3394, %v3393
        %v3396 = vmul.f32 0.5, %v3395
        %v3397 = vsub.f32 1.5, %v3396
        %v3398 = vmul.f32 %v3393, %v3397
        %vm3399 = vweird.f32 %v3331
        %vm3400 = vweird.f32 %v3393
        %vm3401 = vmor %vm3399, %vm3400
        %v3402 = vsel %vm3401, %v3393, %v3398
        %v3403 = vrsqrt.pop %v3332
        %v3404 = vmul.f32 %v3403, %v3332
        %v3405 = vmul.f32 %v3404, %v3403
        %v3406 = vmul.f32 0.5, %v3405
        %v3407 = vsub.f32 1.5, %v3406
        %v3408 = vmul.f32 %v3403, %v3407
        %vm3409 = vweird.f32 %v3332
        %vm3410 = vweird.f32 %v3403
        %vm3411 = vmor %vm3409, %vm3410
        %v3412 = vsel %vm3411, %v3403, %v3408
        %v3413 = vmul.f32 %v3285, %v3342
        %v3414 = vmul.f32 %v3286, %v3352
        %v3415 = vmul.f32 %v3287, %v3362
        %v3416 = vmul.f32 %v3288, %v3372
        %v3417 = vmul.f32 %v3289, %v3382
        %v3418 = vmul.f32 %v3290, %v3392
        %v3419 = vmul.f32 %v3291, %v3402
        %v3420 = vmul.f32 %v3292, %v3412
        %v3422 = vperm.slane %v3259, 0
        %v3424 = vmul.f32 %v3413, %v3422
        %v3425 = vmul.f32 %v3414, %v3422
        %v3426 = vmul.f32 %v3415, %v3422
        %v3427 = vmul.f32 %v3416, %v3422
        %v3428 = vmul.f32 %v3417, %v3422
        %v3429 = vmul.f32 %v3418, %v3422
        %v3430 = vmul.f32 %v3419, %v3422
        %v3431 = vmul.f32 %v3420, %v3422
        %v3433 = vperm.slane %v3260, 0
        %v3435 = vadd.f32 %v3424, %v3433
        %v3436 = vadd.f32 %v3425, %v3433
        %v3437 = vadd.f32 %v3426, %v3433
        %v3438 = vadd.f32 %v3427, %v3433
        %v3439 = vadd.f32 %v3428, %v3433
        %v3440 = vadd.f32 %v3429, %v3433
        %v3441 = vadd.f32 %v3430, %v3433
        %v3442 = vadd.f32 %v3431, %v3433
        %v3443 = vpack.c.bf16 %v3436, %v3435
        %v3444 = vpack.c.bf16 %v3438, %v3437
        %v3445 = vpack.c.bf16 %v3440, %v3439
        %v3446 = vpack.c.bf16 %v3442, %v3441
        %v3447 = vld [vmem:[%s681] sm:$0xf]
        %v3448 = vld [vmem:[%s681 + $0x4] sm:$0xf]
        %v3449 = vld [vmem:[%s681 + $0x8] sm:$0xf]
        %v3450 = vld [vmem:[%s681 + $0xc] sm:$0xf]
        %v3451 = vld [vmem:[%s681 + $0x10] sm:$0xf]
        %v3452 = vld [vmem:[%s681 + $0x14] sm:$0xf]
        %v3453 = vld [vmem:[%s681 + $0x18] sm:$0xf]
        %v3454 = vld [vmem:[%s681 + $0x1c] sm:$0xf]
        %v3455 = vld [vmem:[%s681 + $0x20] sm:$0xf]
        %v3456 = vld [vmem:[%s681 + $0x24] sm:$0xf]
        %v3457 = vld [vmem:[%s681 + $0x28] sm:$0xf]
        %v3458 = vld [vmem:[%s681 + $0x2c] sm:$0xf]
        %v3459 = vld [vmem:[%s681 + $0x30] sm:$0xf]
        %v3460 = vld [vmem:[%s681 + $0x34] sm:$0xf]
        %v3461 = vld [vmem:[%s681 + $0x38] sm:$0xf]
        %v3462 = vld [vmem:[%s681 + $0x3c] sm:$0xf]
        %v3463 = vld [vmem:[%s785] sm:$0x1]
        %v3465 = vperm.slane %v3463, 0
        %v3483 = vunpack.c.l.b16 %v3447
        %v3484 = vunpack.c.l.b16 %v3448
        %v3485 = vunpack.c.l.b16 %v3449
        %v3486 = vunpack.c.l.b16 %v3450
        %v3487 = vunpack.c.l.b16 %v3451
        %v3488 = vunpack.c.l.b16 %v3452
        %v3489 = vunpack.c.l.b16 %v3453
        %v3490 = vunpack.c.l.b16 %v3454
        %v3491 = vunpack.c.l.b16 %v3455
        %v3492 = vunpack.c.l.b16 %v3456
        %v3493 = vunpack.c.l.b16 %v3457
        %v3494 = vunpack.c.l.b16 %v3458
        %v3495 = vunpack.c.l.b16 %v3459
        %v3496 = vunpack.c.l.b16 %v3460
        %v3497 = vunpack.c.l.b16 %v3461
        %v3498 = vunpack.c.l.b16 %v3462
        %v3499 = vpack.c.b16 %v3484, %v3483
        %v3500 = vpack.c.b16 %v3486, %v3485
        %v3501 = vpack.c.b16 %v3488, %v3487
        %v3502 = vpack.c.b16 %v3490, %v3489
        %v3503 = vpack.c.b16 %v3492, %v3491
        %v3504 = vpack.c.b16 %v3494, %v3493
        %v3505 = vpack.c.b16 %v3496, %v3495
        %v3506 = vpack.c.b16 %v3498, %v3497
        %3515 = vmatpush.bf16.msra.mxu0 %v3506
        %3516 = vmatpush.bf16.msra.mxu0 %v3505
        %3517 = vmatpush.bf16.msra.mxu0 %v3504
        %3518 = vmatpush.bf16.msra.mxu0 %v3503
        %3519 = vmatpush.bf16.msra.mxu0 %v3502
        %3520 = vmatpush.bf16.msra.mxu0 %v3501
        %3521 = vmatpush.bf16.msra.mxu0 %v3500
        %3522 = vmatpush.bf16.msra.mxu0 %v3499
        %3523 = vmatmul.bf16.gmra.mxu0 %v3443
        %v3524 = vpop.f32.mrf.mxu0
        %v3525 = vadd.f32 %v3465, %v3524
        %v3526 = vpop.f32.mrf.mxu0
        %v3527 = vadd.f32 %v3465, %v3526
        %3528 = vmatmul.bf16.gmra.mxu0 %v3444
        %v3529 = vpop.f32.mrf.mxu0
        %v3530 = vadd.f32 %v3465, %v3529
        %v3531 = vpop.f32.mrf.mxu0
        %v3532 = vadd.f32 %v3465, %v3531
        %3533 = vmatmul.bf16.gmra.mxu0 %v3445
        %v3534 = vpop.f32.mrf.mxu0
        %v3535 = vadd.f32 %v3465, %v3534
        %v3536 = vpop.f32.mrf.mxu0
        %v3537 = vadd.f32 %v3465, %v3536
        %3538 = vmatmul.bf16.gmra.mxu0 %v3446
        %v3539 = vpop.f32.mrf.mxu0
        %v3540 = vadd.f32 %v3465, %v3539
        %v3541 = vpop.f32.mrf.mxu0
        %v3542 = vadd.f32 %v3465, %v3541
        %3543 = vdwg.mxu0
        %v3544 = vmax.f32 %v3525, 0.0
        %v3545 = vmax.f32 %v3527, 0.0
        %v3546 = vmax.f32 %v3530, 0.0
        %v3547 = vmax.f32 %v3532, 0.0
        %v3548 = vmax.f32 %v3535, 0.0
        %v3549 = vmax.f32 %v3537, 0.0
        %v3550 = vmax.f32 %v3540, 0.0
        %v3551 = vmax.f32 %v3542, 0.0
        %v3552 = vpack.c.bf16 %v3545, %v3544
        %v3553 = vpack.c.bf16 %v3547, %v3546
        %v3554 = vpack.c.bf16 %v3549, %v3548
        %v3555 = vpack.c.bf16 %v3551, %v3550
        %v3556 = vld [vmem:[%s691] sm:$0xf]
        %v3557 = vld [vmem:[%s691 + $0x4] sm:$0xf]
        %v3558 = vld [vmem:[%s691 + $0x8] sm:$0xf]
        %v3559 = vld [vmem:[%s691 + $0xc] sm:$0xf]
        %v3560 = vld [vmem:[%s691 + $0x10] sm:$0xf]
        %v3561 = vld [vmem:[%s691 + $0x14] sm:$0xf]
        %v3562 = vld [vmem:[%s691 + $0x18] sm:$0xf]
        %v3563 = vld [vmem:[%s691 + $0x1c] sm:$0xf]
        %v3564 = vld [vmem:[%s691 + $0x20] sm:$0xf]
        %v3565 = vld [vmem:[%s691 + $0x24] sm:$0xf]
        %v3566 = vld [vmem:[%s691 + $0x28] sm:$0xf]
        %v3567 = vld [vmem:[%s691 + $0x2c] sm:$0xf]
        %v3568 = vld [vmem:[%s691 + $0x30] sm:$0xf]
        %v3569 = vld [vmem:[%s691 + $0x34] sm:$0xf]
        %v3570 = vld [vmem:[%s691 + $0x38] sm:$0xf]
        %v3571 = vld [vmem:[%s691 + $0x3c] sm:$0xf]
        %v3572 = vld [vmem:[%s788] sm:$0x1]
        %v3574 = vperm.slane %v3572, 0
        %v3592 = vunpack.c.l.b16 %v3556
        %v3593 = vunpack.c.l.b16 %v3557
        %v3594 = vunpack.c.l.b16 %v3558
        %v3595 = vunpack.c.l.b16 %v3559
        %v3596 = vunpack.c.l.b16 %v3560
        %v3597 = vunpack.c.l.b16 %v3561
        %v3598 = vunpack.c.l.b16 %v3562
        %v3599 = vunpack.c.l.b16 %v3563
        %v3600 = vunpack.c.l.b16 %v3564
        %v3601 = vunpack.c.l.b16 %v3565
        %v3602 = vunpack.c.l.b16 %v3566
        %v3603 = vunpack.c.l.b16 %v3567
        %v3604 = vunpack.c.l.b16 %v3568
        %v3605 = vunpack.c.l.b16 %v3569
        %v3606 = vunpack.c.l.b16 %v3570
        %v3607 = vunpack.c.l.b16 %v3571
        %v3608 = vpack.c.b16 %v3593, %v3592
        %v3609 = vpack.c.b16 %v3595, %v3594
        %v3610 = vpack.c.b16 %v3597, %v3596
        %v3611 = vpack.c.b16 %v3599, %v3598
        %v3612 = vpack.c.b16 %v3601, %v3600
        %v3613 = vpack.c.b16 %v3603, %v3602
        %v3614 = vpack.c.b16 %v3605, %v3604
        %v3615 = vpack.c.b16 %v3607, %v3606
        %3624 = vmatpush.bf16.msra.mxu0 %v3615
        %3625 = vmatpush.bf16.msra.mxu0 %v3614
        %3626 = vmatpush.bf16.msra.mxu0 %v3613
        %3627 = vmatpush.bf16.msra.mxu0 %v3612
        %3628 = vmatpush.bf16.msra.mxu0 %v3611
        %3629 = vmatpush.bf16.msra.mxu0 %v3610
        %3630 = vmatpush.bf16.msra.mxu0 %v3609
        %3631 = vmatpush.bf16.msra.mxu0 %v3608
        %3632 = vmatmul.bf16.gmra.mxu0 %v3552
        %v3633 = vpop.f32.mrf.mxu0
        %v3634 = vadd.f32 %v3574, %v3633
        %v3635 = vpop.f32.mrf.mxu0
        %v3636 = vadd.f32 %v3574, %v3635
        %3637 = vmatmul.bf16.gmra.mxu0 %v3553
        %v3638 = vpop.f32.mrf.mxu0
        %v3639 = vadd.f32 %v3574, %v3638
        %v3640 = vpop.f32.mrf.mxu0
        %v3641 = vadd.f32 %v3574, %v3640
        %3642 = vmatmul.bf16.gmra.mxu0 %v3554
        %v3643 = vpop.f32.mrf.mxu0
        %v3644 = vadd.f32 %v3574, %v3643
        %v3645 = vpop.f32.mrf.mxu0
        %v3646 = vadd.f32 %v3574, %v3645
        %3647 = vmatmul.bf16.gmra.mxu0 %v3555
        %v3648 = vpop.f32.mrf.mxu0
        %v3649 = vadd.f32 %v3574, %v3648
        %v3650 = vpop.f32.mrf.mxu0
        %v3651 = vadd.f32 %v3574, %v3650
        %3652 = vdwg.mxu0
        %v3653 = vadd.f32 %v3251, %v3634
        %v3654 = vadd.f32 %v3252, %v3636
        %v3655 = vadd.f32 %v3253, %v3639
        %v3656 = vadd.f32 %v3254, %v3641
        %v3657 = vadd.f32 %v3255, %v3644
        %v3658 = vadd.f32 %v3256, %v3646
        %v3659 = vadd.f32 %v3257, %v3649
        %v3660 = vadd.f32 %v3258, %v3651
        %3661 = vst [vmem:[#allocation18] sm:$0xff] %v3653
        %3662 = vst [vmem:[#allocation18 + $0x8] sm:$0xff] %v3654
        %3663 = vst [vmem:[#allocation18 + $0x10] sm:$0xff] %v3655
        %3664 = vst [vmem:[#allocation18 + $0x18] sm:$0xff] %v3656
        %3665 = vst [vmem:[#allocation18 + $0x20] sm:$0xff] %v3657
        %3666 = vst [vmem:[#allocation18 + $0x28] sm:$0xff] %v3658
        %3667 = vst [vmem:[#allocation18 + $0x30] sm:$0xff] %v3659
        %3668 = vst [vmem:[#allocation18 + $0x38] sm:$0xff] %v3660
        // Predicated region
        $region109: #{tpu_custom_call.1} parent=71 // pred_check
          %p3669 = pneg %p406
        $region110: #{tpu_custom_call.1} parent=71 // pred_check_branch
          %3671 = sbr.rel (%p3669) target = $region112
        $region111: #{tpu_custom_call.1} parent=71 // pred_region
          %s3672 = smul.u32 2, %s42
          %3674 = vsyncadd [#allocation6], 0
          %s3675 = smul.addr %s3672, 4
          %s3676 = smul.addr %s3675, 8
          %s3677 = scalar_lea.hbm %s13, %s3676
          %s3678 = sshll.u32 [#allocation18], 4
          %s3679 = int_to_ptr.vmem [resolvable:$true] %s3678
          %s3680 = sshll.u32 %s3677, 4
          %s3681 = int_to_ptr.hbm [resolvable:$true] %s3680
          %3686 = dma.vmem_to_hbm [thread:$0]  %s3679, 1024, %s3681, [#allocation6], 128, 128, 8
        $region112: #{tpu_custom_call.1} parent=71 // pred_fallthru
          _
        // Predicated region
        $region113: #{tpu_custom_call.1} parent=71 // pred_check
          %p3687 = pneg %p406
        $region114: #{tpu_custom_call.1} parent=71 // pred_check_branch
          %3689 = sbr.rel (%p3687) target = $region116
        $region115: #{tpu_custom_call.1} parent=71 // pred_region
          %3691 = dma.done [#allocation6], 1024
        $region116: #{tpu_custom_call.1} parent=71 // pred_fallthru
          _
      $region72: #{tpu_custom_call.1} parent=5 // pred_fallthru
        _
      %p3692 = scmp.le.s32.totalorder 2, %s33
      // Predicated region
      $region117: #{tpu_custom_call.1} parent=5 // pred_check
        %p3693 = pneg %p3692
      $region118: #{tpu_custom_call.1} parent=5 // pred_check_branch
        %3695 = sbr.rel (%p3693) target = $region120
      $region119: #{tpu_custom_call.1} parent=5 // pred_region
        %s3696 = ssub.s32 %s33, 2
      $region120: #{tpu_custom_call.1} parent=5 // pred_fallthru
        _
    $region6: #{tpu_custom_call.1} parent=1 // loop_footer
      %s37 = sadd.s32 1, %s33
    $region7: #{tpu_custom_call.1} parent=1 // loop_footer_branch
      %32 = sbr.rel target = $region3
    $region8: #{tpu_custom_call.1} parent=1 // loop_exit
      _
    %3697 = vsyncpa [#allocation5], 1
    %s3698 = scalar_lea.sflag [#allocation5], 1
    %3699 = vsyncpa %s3698, 1
    %3700 = vsyncpa [#allocation8], 1
    %s3701 = scalar_lea.sflag [#allocation8], 1
    %3702 = vsyncpa %s3701, 1
    %3703 = vsyncpa [#allocation11], 1
    %s3704 = scalar_lea.sflag [#allocation11], 1
    %3705 = vsyncpa %s3704, 1
    %3706 = vsyncpa [#allocation14], 1
    %s3707 = scalar_lea.sflag [#allocation14], 1
    %3708 = vsyncpa %s3707, 1
    %3709 = vsyncpa [#allocation17], 1
    %s3710 = scalar_lea.sflag [#allocation17], 1
    %3711 = vsyncpa %s3710, 1
    %3712 = vsyncpa [#allocation6], 1
    %s3713 = scalar_lea.sflag [#allocation6], 1
    %3714 = vsyncpa %s3713, 1

</llo_original>
